<compile_context>
chip_gen: v7x
topology: tpu7x:2x2x1
jax: 0.10.0
libtpu: 0.0.40
codegen_flags: <defaults>
</compile_context>

<pallas_src>
import functools

import jax
import jax.numpy as jnp
from jax import lax
from jax.experimental import pallas as pl
from jax.experimental.pallas import tpu as pltpu


def _res_kernel(w1_ref, b1_ref, w2_ref, x_ref, o_ref, *, C, K, W):
    # w1_ref: (C*C*K*K,) f32 in SMEM  (conv1 weights, OIHW flattened)
    # b1_ref: (C,)       f32 in SMEM  (conv1 bias)
    # w2_ref: (C,)       f32 in SMEM  (depthwise 1x1 conv weights, no bias)
    # x_ref : (C, Bt, H*W) VMEM block (channel-major, spatial flattened on lanes)
    # o_ref : (C, Bt, H*W) VMEM block (valid result at flat index r*W+c for the
    #                                  un-cropped positions; wrapper crops)
    x = x_ref[...].astype(jnp.float32)          # (C, Bt, HW)
    HW = x.shape[-1]
    pd = (K - 1) // 2
    center_shift = pd * W + pd                  # residual crop == centre tap shift

    # Per-output-channel accumulators (Bt, HW), f32.
    accs = [jnp.zeros(x.shape[1:], jnp.float32) for _ in range(C)]
    residual = x if center_shift == 0 else None

    # Taps outermost: one whole-block roll per tap, folded immediately into the
    # C accumulators.  Wrap-around only contaminates lanes r>=Ho or c>=Wo,
    # which the wrapper crops.
    for di in range(K):
        for dj in range(K):
            s = di * W + dj
            rolled = x if s == 0 else pltpu.roll(x, HW - s, 2)
            if s == center_shift:
                residual = rolled               # reused for the residual add
            for co in range(C):
                acc = accs[co]
                for ci in range(C):
                    w = w1_ref[((co * C + ci) * K + di) * K + dj]
                    acc = acc + w * rolled[ci]  # leading-axis index, no relayout
                accs[co] = acc

    # Bias -> Tanh (EUP) -> per-channel scale -> residual add -> direct store.
    for co in range(C):
        y = jnp.tanh(accs[co] + b1_ref[co]) * w2_ref[co]
        o_ref[co] = (residual[co] + y).astype(o_ref.dtype)


def _choose_batch_tile(B, C, HW, max_images=256, vmem_budget_bytes=12 << 20):
    """Images per grid step.

    Keeps resident VMEM (double-buffered in/out blocks + in-kernel f32
    temporaries, ~12 slabs of C*HW*4 bytes per image) under a conservative
    budget that fits v5e's 16 MiB scoped default and v7x's 64 MiB physical,
    prefers full sublanes (multiples of 8), and for B > 8 guarantees at least
    two grid steps so the 'parallel' axis shards across v7x's TensorCores and
    the DMA pipeline overlaps.
    """
    per_image = 12 * C * HW * 4
    cap = max(8, vmem_budget_bytes // max(per_image, 1))
    cap = min(cap, max_images)
    if B <= 8:
        return B                                # tiny batch: single step, no padding
    half = -(-B // 2)                           # ceil(B/2) -> >= 2 grid steps
    bt = min(cap, half)
    return max(8, (bt // 8) * 8)


def res_forward(x, w1, b1, w2, *, size, padding=0):
    """Pallas forward for Res with groups=1, padding=0, active=Tanh."""
    B, C, H, W = x.shape
    K = size
    assert K % 2 == 1, "Res kernel assumes an odd conv size (symmetric crop)."
    assert padding == 0, "Res kernel assumes the module default padding=0."
    assert w1.shape == (C, C, K, K), "groups=1 Conv2d(ch, ch, size) expected."
    pd = (K - 1) // 2
    Ho, Wo = H - 2 * pd, W - 2 * pd
    HW = H * W

    # Channel-major, lane-flattened layout (layout plumbing done in XLA).
    x_flat = jnp.transpose(x, (1, 0, 2, 3)).reshape(C, B, HW)

    Bt = _choose_batch_tile(B, C, HW)
    num_steps = -(-B // Bt)                     # ceil
    B_pad = num_steps * Bt
    if B_pad != B:                              # pad batch so Bt always divides
        x_flat = jnp.pad(x_flat, ((0, 0), (0, B_pad - B), (0, 0)))

    kernel = functools.partial(_res_kernel, C=C, K=K, W=W)
    out_flat = pl.pallas_call(
        kernel,
        out_shape=jax.ShapeDtypeStruct((C, B_pad, HW), x.dtype),
        grid=(num_steps,),
        in_specs=[
            pl.BlockSpec(memory_space=pltpu.MemorySpace.SMEM),   # w1 (flattened)
            pl.BlockSpec(memory_space=pltpu.MemorySpace.SMEM),   # b1
            pl.BlockSpec(memory_space=pltpu.MemorySpace.SMEM),   # w2
            pl.BlockSpec((C, Bt, HW), lambda b: (0, b, 0)),      # x
        ],
        out_specs=pl.BlockSpec((C, Bt, HW), lambda b: (0, b, 0)),
        compiler_params=pltpu.CompilerParams(
            dimension_semantics=("parallel",),
            vmem_limit_bytes=32 << 20),
    )(w1.astype(jnp.float32).reshape(-1), b1.astype(jnp.float32),
      w2.astype(jnp.float32), x_flat)

    # Drop batch padding, un-flatten and crop the border garbage (XLA plumbing).
    out = out_flat[:, :B].reshape(C, B, H, W).transpose(1, 0, 2, 3)
    return out[:, :, :Ho, :Wo]


def res_reference(x, w1, b1, w2, *, size):
    """Pure-JAX reference matching the PyTorch forward."""
    y = lax.conv_general_dilated(
        x, w1, window_strides=(1, 1), padding="VALID",
        dimension_numbers=("NCHW", "OIHW", "NCHW"))
    y = y + b1[None, :, None, None]
    y = jnp.tanh(y)
    y = y * w2[None, :, None, None]             # groups=ch 1x1 conv, no bias
    pd = (size - 1) // 2
    H, W = x.shape[2], x.shape[3]
    return x[:, :, pd:H - pd, pd:W - pd] + y


if __name__ == "__main__":
    # Small shapes consistent with the module: NCHW input, ch=4, size=3.
    B, C, H, W = 2, 4, 16, 16
    size = 3

    key = jax.random.PRNGKey(0)
    kx, kw1, kb1, kw2 = jax.random.split(key, 4)

    x = jax.random.normal(kx, (B, C, H, W), dtype=jnp.float32)
    # Conv2d(ch, ch, size) weights/bias (OIHW) and depthwise 1x1 weights as (C,).
    w1 = 0.1 * jax.random.normal(kw1, (C, C, size, size), dtype=jnp.float32)
    b1 = 0.1 * jax.random.normal(kb1, (C,), dtype=jnp.float32)
    w2 = jax.random.normal(kw2, (C,), dtype=jnp.float32)

    out = jax.block_until_ready(res_forward(x, w1, b1, w2, size=size))
    ref = jax.block_until_ready(res_reference(x, w1, b1, w2, size=size))

    assert out.shape == (B, C, H - size + 1, W - size + 1), out.shape
    assert jnp.allclose(out, ref, atol=1e-5, rtol=1e-5), float(
        jnp.max(jnp.abs(out - ref)))
    print("KERNEL_OK")
</pallas_src>

<mosaic_0001>
module attributes {stable_mosaic.version = 11 : i64} {
  func.func @_res_kernel(%arg0: i32, %arg1: memref<144xf32, #tpu.memory_space<smem>>, %arg2: memref<4xf32, #tpu.memory_space<smem>>, %arg3: memref<4xf32, #tpu.memory_space<smem>>, %arg4: memref<4x2x256xf32, #tpu.memory_space<vmem>>, %arg5: memref<4x2x256xf32, #tpu.memory_space<vmem>>) attributes {dimension_semantics = [#tpu.dimension_semantics<parallel>], iteration_bounds = array<i64: 1>, scalar_prefetch = 0 : i64, scratch_operands = 0 : i64, tpu.core_type = #tpu.core_type<tc>, window_params = [{transform_indices = @transform_0, window_bounds = array<i64: 144>}, {transform_indices = @transform_1, window_bounds = array<i64: 4>}, {transform_indices = @transform_2, window_bounds = array<i64: 4>}, {transform_indices = @transform_3, window_bounds = array<i64: 4, 2, 256>}, {transform_indices = @transform_4, window_bounds = array<i64: 4, 2, 256>}]} {
    %c0 = arith.constant 0 : index
    %c0_0 = arith.constant 0 : index
    %c0_1 = arith.constant 0 : index
    %0 = vector.load %arg4[%c0, %c0_0, %c0_1] : memref<4x2x256xf32, #tpu.memory_space<vmem>>, vector<4x2x256xf32>
    %cst = arith.constant 0.000000e+00 : f32
    %1 = vector.broadcast %cst : f32 to vector<2x256xf32>
    %cst_2 = arith.constant 0.000000e+00 : f32
    %2 = vector.broadcast %cst_2 : f32 to vector<2x256xf32>
    %cst_3 = arith.constant 0.000000e+00 : f32
    %3 = vector.broadcast %cst_3 : f32 to vector<2x256xf32>
    %cst_4 = arith.constant 0.000000e+00 : f32
    %4 = vector.broadcast %cst_4 : f32 to vector<2x256xf32>
    %c0_5 = arith.constant 0 : index
    %5 = memref.load %arg1[%c0_5] : memref<144xf32, #tpu.memory_space<smem>>
    %6 = vector.extract_strided_slice %0 {offsets = [0, 0, 0], sizes = [1, 2, 256], strides = [1, 1, 1]} : vector<4x2x256xf32> to vector<1x2x256xf32>
    %7 = vector.shape_cast %6 : vector<1x2x256xf32> to vector<2x256xf32>
    %8 = vector.broadcast %5 : f32 to vector<2x256xf32>
    %9 = arith.mulf %8, %7 : vector<2x256xf32>
    %10 = arith.addf %1, %9 : vector<2x256xf32>
    %c9 = arith.constant 9 : index
    %11 = memref.load %arg1[%c9] : memref<144xf32, #tpu.memory_space<smem>>
    %12 = vector.extract_strided_slice %0 {offsets = [1, 0, 0], sizes = [1, 2, 256], strides = [1, 1, 1]} : vector<4x2x256xf32> to vector<1x2x256xf32>
    %13 = vector.shape_cast %12 : vector<1x2x256xf32> to vector<2x256xf32>
    %14 = vector.broadcast %11 : f32 to vector<2x256xf32>
    %15 = arith.mulf %14, %13 : vector<2x256xf32>
    %16 = arith.addf %10, %15 : vector<2x256xf32>
    %c18 = arith.constant 18 : index
    %17 = memref.load %arg1[%c18] : memref<144xf32, #tpu.memory_space<smem>>
    %18 = vector.extract_strided_slice %0 {offsets = [2, 0, 0], sizes = [1, 2, 256], strides = [1, 1, 1]} : vector<4x2x256xf32> to vector<1x2x256xf32>
    %19 = vector.shape_cast %18 : vector<1x2x256xf32> to vector<2x256xf32>
    %20 = vector.broadcast %17 : f32 to vector<2x256xf32>
    %21 = arith.mulf %20, %19 : vector<2x256xf32>
    %22 = arith.addf %16, %21 : vector<2x256xf32>
    %c27 = arith.constant 27 : index
    %23 = memref.load %arg1[%c27] : memref<144xf32, #tpu.memory_space<smem>>
    %24 = vector.extract_strided_slice %0 {offsets = [3, 0, 0], sizes = [1, 2, 256], strides = [1, 1, 1]} : vector<4x2x256xf32> to vector<1x2x256xf32>
    %25 = vector.shape_cast %24 : vector<1x2x256xf32> to vector<2x256xf32>
    %26 = vector.broadcast %23 : f32 to vector<2x256xf32>
    %27 = arith.mulf %26, %25 : vector<2x256xf32>
    %28 = arith.addf %22, %27 : vector<2x256xf32>
    %c36 = arith.constant 36 : index
    %29 = memref.load %arg1[%c36] : memref<144xf32, #tpu.memory_space<smem>>
    %30 = vector.extract_strided_slice %0 {offsets = [0, 0, 0], sizes = [1, 2, 256], strides = [1, 1, 1]} : vector<4x2x256xf32> to vector<1x2x256xf32>
    %31 = vector.shape_cast %30 : vector<1x2x256xf32> to vector<2x256xf32>
    %32 = vector.broadcast %29 : f32 to vector<2x256xf32>
    %33 = arith.mulf %32, %31 : vector<2x256xf32>
    %34 = arith.addf %2, %33 : vector<2x256xf32>
    %c45 = arith.constant 45 : index
    %35 = memref.load %arg1[%c45] : memref<144xf32, #tpu.memory_space<smem>>
    %36 = vector.extract_strided_slice %0 {offsets = [1, 0, 0], sizes = [1, 2, 256], strides = [1, 1, 1]} : vector<4x2x256xf32> to vector<1x2x256xf32>
    %37 = vector.shape_cast %36 : vector<1x2x256xf32> to vector<2x256xf32>
    %38 = vector.broadcast %35 : f32 to vector<2x256xf32>
    %39 = arith.mulf %38, %37 : vector<2x256xf32>
    %40 = arith.addf %34, %39 : vector<2x256xf32>
    %c54 = arith.constant 54 : index
    %41 = memref.load %arg1[%c54] : memref<144xf32, #tpu.memory_space<smem>>
    %42 = vector.extract_strided_slice %0 {offsets = [2, 0, 0], sizes = [1, 2, 256], strides = [1, 1, 1]} : vector<4x2x256xf32> to vector<1x2x256xf32>
    %43 = vector.shape_cast %42 : vector<1x2x256xf32> to vector<2x256xf32>
    %44 = vector.broadcast %41 : f32 to vector<2x256xf32>
    %45 = arith.mulf %44, %43 : vector<2x256xf32>
    %46 = arith.addf %40, %45 : vector<2x256xf32>
    %c63 = arith.constant 63 : index
    %47 = memref.load %arg1[%c63] : memref<144xf32, #tpu.memory_space<smem>>
    %48 = vector.extract_strided_slice %0 {offsets = [3, 0, 0], sizes = [1, 2, 256], strides = [1, 1, 1]} : vector<4x2x256xf32> to vector<1x2x256xf32>
    %49 = vector.shape_cast %48 : vector<1x2x256xf32> to vector<2x256xf32>
    %50 = vector.broadcast %47 : f32 to vector<2x256xf32>
    %51 = arith.mulf %50, %49 : vector<2x256xf32>
    %52 = arith.addf %46, %51 : vector<2x256xf32>
    %c72 = arith.constant 72 : index
    %53 = memref.load %arg1[%c72] : memref<144xf32, #tpu.memory_space<smem>>
    %54 = vector.extract_strided_slice %0 {offsets = [0, 0, 0], sizes = [1, 2, 256], strides = [1, 1, 1]} : vector<4x2x256xf32> to vector<1x2x256xf32>
    %55 = vector.shape_cast %54 : vector<1x2x256xf32> to vector<2x256xf32>
    %56 = vector.broadcast %53 : f32 to vector<2x256xf32>
    %57 = arith.mulf %56, %55 : vector<2x256xf32>
    %58 = arith.addf %3, %57 : vector<2x256xf32>
    %c81 = arith.constant 81 : index
    %59 = memref.load %arg1[%c81] : memref<144xf32, #tpu.memory_space<smem>>
    %60 = vector.extract_strided_slice %0 {offsets = [1, 0, 0], sizes = [1, 2, 256], strides = [1, 1, 1]} : vector<4x2x256xf32> to vector<1x2x256xf32>
    %61 = vector.shape_cast %60 : vector<1x2x256xf32> to vector<2x256xf32>
    %62 = vector.broadcast %59 : f32 to vector<2x256xf32>
    %63 = arith.mulf %62, %61 : vector<2x256xf32>
    %64 = arith.addf %58, %63 : vector<2x256xf32>
    %c90 = arith.constant 90 : index
    %65 = memref.load %arg1[%c90] : memref<144xf32, #tpu.memory_space<smem>>
    %66 = vector.extract_strided_slice %0 {offsets = [2, 0, 0], sizes = [1, 2, 256], strides = [1, 1, 1]} : vector<4x2x256xf32> to vector<1x2x256xf32>
    %67 = vector.shape_cast %66 : vector<1x2x256xf32> to vector<2x256xf32>
    %68 = vector.broadcast %65 : f32 to vector<2x256xf32>
    %69 = arith.mulf %68, %67 : vector<2x256xf32>
    %70 = arith.addf %64, %69 : vector<2x256xf32>
    %c99 = arith.constant 99 : index
    %71 = memref.load %arg1[%c99] : memref<144xf32, #tpu.memory_space<smem>>
    %72 = vector.extract_strided_slice %0 {offsets = [3, 0, 0], sizes = [1, 2, 256], strides = [1, 1, 1]} : vector<4x2x256xf32> to vector<1x2x256xf32>
    %73 = vector.shape_cast %72 : vector<1x2x256xf32> to vector<2x256xf32>
    %74 = vector.broadcast %71 : f32 to vector<2x256xf32>
    %75 = arith.mulf %74, %73 : vector<2x256xf32>
    %76 = arith.addf %70, %75 : vector<2x256xf32>
    %c108 = arith.constant 108 : index
    %77 = memref.load %arg1[%c108] : memref<144xf32, #tpu.memory_space<smem>>
    %78 = vector.extract_strided_slice %0 {offsets = [0, 0, 0], sizes = [1, 2, 256], strides = [1, 1, 1]} : vector<4x2x256xf32> to vector<1x2x256xf32>
    %79 = vector.shape_cast %78 : vector<1x2x256xf32> to vector<2x256xf32>
    %80 = vector.broadcast %77 : f32 to vector<2x256xf32>
    %81 = arith.mulf %80, %79 : vector<2x256xf32>
    %82 = arith.addf %4, %81 : vector<2x256xf32>
    %c117 = arith.constant 117 : index
    %83 = memref.load %arg1[%c117] : memref<144xf32, #tpu.memory_space<smem>>
    %84 = vector.extract_strided_slice %0 {offsets = [1, 0, 0], sizes = [1, 2, 256], strides = [1, 1, 1]} : vector<4x2x256xf32> to vector<1x2x256xf32>
    %85 = vector.shape_cast %84 : vector<1x2x256xf32> to vector<2x256xf32>
    %86 = vector.broadcast %83 : f32 to vector<2x256xf32>
    %87 = arith.mulf %86, %85 : vector<2x256xf32>
    %88 = arith.addf %82, %87 : vector<2x256xf32>
    %c126 = arith.constant 126 : index
    %89 = memref.load %arg1[%c126] : memref<144xf32, #tpu.memory_space<smem>>
    %90 = vector.extract_strided_slice %0 {offsets = [2, 0, 0], sizes = [1, 2, 256], strides = [1, 1, 1]} : vector<4x2x256xf32> to vector<1x2x256xf32>
    %91 = vector.shape_cast %90 : vector<1x2x256xf32> to vector<2x256xf32>
    %92 = vector.broadcast %89 : f32 to vector<2x256xf32>
    %93 = arith.mulf %92, %91 : vector<2x256xf32>
    %94 = arith.addf %88, %93 : vector<2x256xf32>
    %c135 = arith.constant 135 : index
    %95 = memref.load %arg1[%c135] : memref<144xf32, #tpu.memory_space<smem>>
    %96 = vector.extract_strided_slice %0 {offsets = [3, 0, 0], sizes = [1, 2, 256], strides = [1, 1, 1]} : vector<4x2x256xf32> to vector<1x2x256xf32>
    %97 = vector.shape_cast %96 : vector<1x2x256xf32> to vector<2x256xf32>
    %98 = vector.broadcast %95 : f32 to vector<2x256xf32>
    %99 = arith.mulf %98, %97 : vector<2x256xf32>
    %100 = arith.addf %94, %99 : vector<2x256xf32>
    %c255_i32 = arith.constant 255 : i32
    %101 = tpu.dynamic_rotate %0 by %c255_i32 dim 2 : vector<4x2x256xf32>, i32 -> vector<4x2x256xf32>
    %c1 = arith.constant 1 : index
    %102 = memref.load %arg1[%c1] : memref<144xf32, #tpu.memory_space<smem>>
    %103 = vector.extract_strided_slice %101 {offsets = [0, 0, 0], sizes = [1, 2, 256], strides = [1, 1, 1]} : vector<4x2x256xf32> to vector<1x2x256xf32>
    %104 = vector.shape_cast %103 : vector<1x2x256xf32> to vector<2x256xf32>
    %105 = vector.broadcast %102 : f32 to vector<2x256xf32>
    %106 = arith.mulf %105, %104 : vector<2x256xf32>
    %107 = arith.addf %28, %106 : vector<2x256xf32>
    %c10 = arith.constant 10 : index
    %108 = memref.load %arg1[%c10] : memref<144xf32, #tpu.memory_space<smem>>
    %109 = vector.extract_strided_slice %101 {offsets = [1, 0, 0], sizes = [1, 2, 256], strides = [1, 1, 1]} : vector<4x2x256xf32> to vector<1x2x256xf32>
    %110 = vector.shape_cast %109 : vector<1x2x256xf32> to vector<2x256xf32>
    %111 = vector.broadcast %108 : f32 to vector<2x256xf32>
    %112 = arith.mulf %111, %110 : vector<2x256xf32>
    %113 = arith.addf %107, %112 : vector<2x256xf32>
    %c19 = arith.constant 19 : index
    %114 = memref.load %arg1[%c19] : memref<144xf32, #tpu.memory_space<smem>>
    %115 = vector.extract_strided_slice %101 {offsets = [2, 0, 0], sizes = [1, 2, 256], strides = [1, 1, 1]} : vector<4x2x256xf32> to vector<1x2x256xf32>
    %116 = vector.shape_cast %115 : vector<1x2x256xf32> to vector<2x256xf32>
    %117 = vector.broadcast %114 : f32 to vector<2x256xf32>
    %118 = arith.mulf %117, %116 : vector<2x256xf32>
    %119 = arith.addf %113, %118 : vector<2x256xf32>
    %c28 = arith.constant 28 : index
    %120 = memref.load %arg1[%c28] : memref<144xf32, #tpu.memory_space<smem>>
    %121 = vector.extract_strided_slice %101 {offsets = [3, 0, 0], sizes = [1, 2, 256], strides = [1, 1, 1]} : vector<4x2x256xf32> to vector<1x2x256xf32>
    %122 = vector.shape_cast %121 : vector<1x2x256xf32> to vector<2x256xf32>
    %123 = vector.broadcast %120 : f32 to vector<2x256xf32>
    %124 = arith.mulf %123, %122 : vector<2x256xf32>
    %125 = arith.addf %119, %124 : vector<2x256xf32>
    %c37 = arith.constant 37 : index
    %126 = memref.load %arg1[%c37] : memref<144xf32, #tpu.memory_space<smem>>
    %127 = vector.extract_strided_slice %101 {offsets = [0, 0, 0], sizes = [1, 2, 256], strides = [1, 1, 1]} : vector<4x2x256xf32> to vector<1x2x256xf32>
    %128 = vector.shape_cast %127 : vector<1x2x256xf32> to vector<2x256xf32>
    %129 = vector.broadcast %126 : f32 to vector<2x256xf32>
    %130 = arith.mulf %129, %128 : vector<2x256xf32>
    %131 = arith.addf %52, %130 : vector<2x256xf32>
    %c46 = arith.constant 46 : index
    %132 = memref.load %arg1[%c46] : memref<144xf32, #tpu.memory_space<smem>>
    %133 = vector.extract_strided_slice %101 {offsets = [1, 0, 0], sizes = [1, 2, 256], strides = [1, 1, 1]} : vector<4x2x256xf32> to vector<1x2x256xf32>
    %134 = vector.shape_cast %133 : vector<1x2x256xf32> to vector<2x256xf32>
    %135 = vector.broadcast %132 : f32 to vector<2x256xf32>
    %136 = arith.mulf %135, %134 : vector<2x256xf32>
    %137 = arith.addf %131, %136 : vector<2x256xf32>
    %c55 = arith.constant 55 : index
    %138 = memref.load %arg1[%c55] : memref<144xf32, #tpu.memory_space<smem>>
    %139 = vector.extract_strided_slice %101 {offsets = [2, 0, 0], sizes = [1, 2, 256], strides = [1, 1, 1]} : vector<4x2x256xf32> to vector<1x2x256xf32>
    %140 = vector.shape_cast %139 : vector<1x2x256xf32> to vector<2x256xf32>
    %141 = vector.broadcast %138 : f32 to vector<2x256xf32>
    %142 = arith.mulf %141, %140 : vector<2x256xf32>
    %143 = arith.addf %137, %142 : vector<2x256xf32>
    %c64 = arith.constant 64 : index
    %144 = memref.load %arg1[%c64] : memref<144xf32, #tpu.memory_space<smem>>
    %145 = vector.extract_strided_slice %101 {offsets = [3, 0, 0], sizes = [1, 2, 256], strides = [1, 1, 1]} : vector<4x2x256xf32> to vector<1x2x256xf32>
    %146 = vector.shape_cast %145 : vector<1x2x256xf32> to vector<2x256xf32>
    %147 = vector.broadcast %144 : f32 to vector<2x256xf32>
    %148 = arith.mulf %147, %146 : vector<2x256xf32>
    %149 = arith.addf %143, %148 : vector<2x256xf32>
    %c73 = arith.constant 73 : index
    %150 = memref.load %arg1[%c73] : memref<144xf32, #tpu.memory_space<smem>>
    %151 = vector.extract_strided_slice %101 {offsets = [0, 0, 0], sizes = [1, 2, 256], strides = [1, 1, 1]} : vector<4x2x256xf32> to vector<1x2x256xf32>
    %152 = vector.shape_cast %151 : vector<1x2x256xf32> to vector<2x256xf32>
    %153 = vector.broadcast %150 : f32 to vector<2x256xf32>
    %154 = arith.mulf %153, %152 : vector<2x256xf32>
    %155 = arith.addf %76, %154 : vector<2x256xf32>
    %c82 = arith.constant 82 : index
    %156 = memref.load %arg1[%c82] : memref<144xf32, #tpu.memory_space<smem>>
    %157 = vector.extract_strided_slice %101 {offsets = [1, 0, 0], sizes = [1, 2, 256], strides = [1, 1, 1]} : vector<4x2x256xf32> to vector<1x2x256xf32>
    %158 = vector.shape_cast %157 : vector<1x2x256xf32> to vector<2x256xf32>
    %159 = vector.broadcast %156 : f32 to vector<2x256xf32>
    %160 = arith.mulf %159, %158 : vector<2x256xf32>
    %161 = arith.addf %155, %160 : vector<2x256xf32>
    %c91 = arith.constant 91 : index
    %162 = memref.load %arg1[%c91] : memref<144xf32, #tpu.memory_space<smem>>
    %163 = vector.extract_strided_slice %101 {offsets = [2, 0, 0], sizes = [1, 2, 256], strides = [1, 1, 1]} : vector<4x2x256xf32> to vector<1x2x256xf32>
    %164 = vector.shape_cast %163 : vector<1x2x256xf32> to vector<2x256xf32>
    %165 = vector.broadcast %162 : f32 to vector<2x256xf32>
    %166 = arith.mulf %165, %164 : vector<2x256xf32>
    %167 = arith.addf %161, %166 : vector<2x256xf32>
    %c100 = arith.constant 100 : index
    %168 = memref.load %arg1[%c100] : memref<144xf32, #tpu.memory_space<smem>>
    %169 = vector.extract_strided_slice %101 {offsets = [3, 0, 0], sizes = [1, 2, 256], strides = [1, 1, 1]} : vector<4x2x256xf32> to vector<1x2x256xf32>
    %170 = vector.shape_cast %169 : vector<1x2x256xf32> to vector<2x256xf32>
    %171 = vector.broadcast %168 : f32 to vector<2x256xf32>
    %172 = arith.mulf %171, %170 : vector<2x256xf32>
    %173 = arith.addf %167, %172 : vector<2x256xf32>
    %c109 = arith.constant 109 : index
    %174 = memref.load %arg1[%c109] : memref<144xf32, #tpu.memory_space<smem>>
    %175 = vector.extract_strided_slice %101 {offsets = [0, 0, 0], sizes = [1, 2, 256], strides = [1, 1, 1]} : vector<4x2x256xf32> to vector<1x2x256xf32>
    %176 = vector.shape_cast %175 : vector<1x2x256xf32> to vector<2x256xf32>
    %177 = vector.broadcast %174 : f32 to vector<2x256xf32>
    %178 = arith.mulf %177, %176 : vector<2x256xf32>
    %179 = arith.addf %100, %178 : vector<2x256xf32>
    %c118 = arith.constant 118 : index
    %180 = memref.load %arg1[%c118] : memref<144xf32, #tpu.memory_space<smem>>
    %181 = vector.extract_strided_slice %101 {offsets = [1, 0, 0], sizes = [1, 2, 256], strides = [1, 1, 1]} : vector<4x2x256xf32> to vector<1x2x256xf32>
    %182 = vector.shape_cast %181 : vector<1x2x256xf32> to vector<2x256xf32>
    %183 = vector.broadcast %180 : f32 to vector<2x256xf32>
    %184 = arith.mulf %183, %182 : vector<2x256xf32>
    %185 = arith.addf %179, %184 : vector<2x256xf32>
    %c127 = arith.constant 127 : index
    %186 = memref.load %arg1[%c127] : memref<144xf32, #tpu.memory_space<smem>>
    %187 = vector.extract_strided_slice %101 {offsets = [2, 0, 0], sizes = [1, 2, 256], strides = [1, 1, 1]} : vector<4x2x256xf32> to vector<1x2x256xf32>
    %188 = vector.shape_cast %187 : vector<1x2x256xf32> to vector<2x256xf32>
    %189 = vector.broadcast %186 : f32 to vector<2x256xf32>
    %190 = arith.mulf %189, %188 : vector<2x256xf32>
    %191 = arith.addf %185, %190 : vector<2x256xf32>
    %c136 = arith.constant 136 : index
    %192 = memref.load %arg1[%c136] : memref<144xf32, #tpu.memory_space<smem>>
    %193 = vector.extract_strided_slice %101 {offsets = [3, 0, 0], sizes = [1, 2, 256], strides = [1, 1, 1]} : vector<4x2x256xf32> to vector<1x2x256xf32>
    %194 = vector.shape_cast %193 : vector<1x2x256xf32> to vector<2x256xf32>
    %195 = vector.broadcast %192 : f32 to vector<2x256xf32>
    %196 = arith.mulf %195, %194 : vector<2x256xf32>
    %197 = arith.addf %191, %196 : vector<2x256xf32>
    %c254_i32 = arith.constant 254 : i32
    %198 = tpu.dynamic_rotate %0 by %c254_i32 dim 2 : vector<4x2x256xf32>, i32 -> vector<4x2x256xf32>
    %c2 = arith.constant 2 : index
    %199 = memref.load %arg1[%c2] : memref<144xf32, #tpu.memory_space<smem>>
    %200 = vector.extract_strided_slice %198 {offsets = [0, 0, 0], sizes = [1, 2, 256], strides = [1, 1, 1]} : vector<4x2x256xf32> to vector<1x2x256xf32>
    %201 = vector.shape_cast %200 : vector<1x2x256xf32> to vector<2x256xf32>
    %202 = vector.broadcast %199 : f32 to vector<2x256xf32>
    %203 = arith.mulf %202, %201 : vector<2x256xf32>
    %204 = arith.addf %125, %203 : vector<2x256xf32>
    %c11 = arith.constant 11 : index
    %205 = memref.load %arg1[%c11] : memref<144xf32, #tpu.memory_space<smem>>
    %206 = vector.extract_strided_slice %198 {offsets = [1, 0, 0], sizes = [1, 2, 256], strides = [1, 1, 1]} : vector<4x2x256xf32> to vector<1x2x256xf32>
    %207 = vector.shape_cast %206 : vector<1x2x256xf32> to vector<2x256xf32>
    %208 = vector.broadcast %205 : f32 to vector<2x256xf32>
    %209 = arith.mulf %208, %207 : vector<2x256xf32>
    %210 = arith.addf %204, %209 : vector<2x256xf32>
    %c20 = arith.constant 20 : index
    %211 = memref.load %arg1[%c20] : memref<144xf32, #tpu.memory_space<smem>>
    %212 = vector.extract_strided_slice %198 {offsets = [2, 0, 0], sizes = [1, 2, 256], strides = [1, 1, 1]} : vector<4x2x256xf32> to vector<1x2x256xf32>
    %213 = vector.shape_cast %212 : vector<1x2x256xf32> to vector<2x256xf32>
    %214 = vector.broadcast %211 : f32 to vector<2x256xf32>
    %215 = arith.mulf %214, %213 : vector<2x256xf32>
    %216 = arith.addf %210, %215 : vector<2x256xf32>
    %c29 = arith.constant 29 : index
    %217 = memref.load %arg1[%c29] : memref<144xf32, #tpu.memory_space<smem>>
    %218 = vector.extract_strided_slice %198 {offsets = [3, 0, 0], sizes = [1, 2, 256], strides = [1, 1, 1]} : vector<4x2x256xf32> to vector<1x2x256xf32>
    %219 = vector.shape_cast %218 : vector<1x2x256xf32> to vector<2x256xf32>
    %220 = vector.broadcast %217 : f32 to vector<2x256xf32>
    %221 = arith.mulf %220, %219 : vector<2x256xf32>
    %222 = arith.addf %216, %221 : vector<2x256xf32>
    %c38 = arith.constant 38 : index
    %223 = memref.load %arg1[%c38] : memref<144xf32, #tpu.memory_space<smem>>
    %224 = vector.extract_strided_slice %198 {offsets = [0, 0, 0], sizes = [1, 2, 256], strides = [1, 1, 1]} : vector<4x2x256xf32> to vector<1x2x256xf32>
    %225 = vector.shape_cast %224 : vector<1x2x256xf32> to vector<2x256xf32>
    %226 = vector.broadcast %223 : f32 to vector<2x256xf32>
    %227 = arith.mulf %226, %225 : vector<2x256xf32>
    %228 = arith.addf %149, %227 : vector<2x256xf32>
    %c47 = arith.constant 47 : index
    %229 = memref.load %arg1[%c47] : memref<144xf32, #tpu.memory_space<smem>>
    %230 = vector.extract_strided_slice %198 {offsets = [1, 0, 0], sizes = [1, 2, 256], strides = [1, 1, 1]} : vector<4x2x256xf32> to vector<1x2x256xf32>
    %231 = vector.shape_cast %230 : vector<1x2x256xf32> to vector<2x256xf32>
    %232 = vector.broadcast %229 : f32 to vector<2x256xf32>
    %233 = arith.mulf %232, %231 : vector<2x256xf32>
    %234 = arith.addf %228, %233 : vector<2x256xf32>
    %c56 = arith.constant 56 : index
    %235 = memref.load %arg1[%c56] : memref<144xf32, #tpu.memory_space<smem>>
    %236 = vector.extract_strided_slice %198 {offsets = [2, 0, 0], sizes = [1, 2, 256], strides = [1, 1, 1]} : vector<4x2x256xf32> to vector<1x2x256xf32>
    %237 = vector.shape_cast %236 : vector<1x2x256xf32> to vector<2x256xf32>
    %238 = vector.broadcast %235 : f32 to vector<2x256xf32>
    %239 = arith.mulf %238, %237 : vector<2x256xf32>
    %240 = arith.addf %234, %239 : vector<2x256xf32>
    %c65 = arith.constant 65 : index
    %241 = memref.load %arg1[%c65] : memref<144xf32, #tpu.memory_space<smem>>
    %242 = vector.extract_strided_slice %198 {offsets = [3, 0, 0], sizes = [1, 2, 256], strides = [1, 1, 1]} : vector<4x2x256xf32> to vector<1x2x256xf32>
    %243 = vector.shape_cast %242 : vector<1x2x256xf32> to vector<2x256xf32>
    %244 = vector.broadcast %241 : f32 to vector<2x256xf32>
    %245 = arith.mulf %244, %243 : vector<2x256xf32>
    %246 = arith.addf %240, %245 : vector<2x256xf32>
    %c74 = arith.constant 74 : index
    %247 = memref.load %arg1[%c74] : memref<144xf32, #tpu.memory_space<smem>>
    %248 = vector.extract_strided_slice %198 {offsets = [0, 0, 0], sizes = [1, 2, 256], strides = [1, 1, 1]} : vector<4x2x256xf32> to vector<1x2x256xf32>
    %249 = vector.shape_cast %248 : vector<1x2x256xf32> to vector<2x256xf32>
    %250 = vector.broadcast %247 : f32 to vector<2x256xf32>
    %251 = arith.mulf %250, %249 : vector<2x256xf32>
    %252 = arith.addf %173, %251 : vector<2x256xf32>
    %c83 = arith.constant 83 : index
    %253 = memref.load %arg1[%c83] : memref<144xf32, #tpu.memory_space<smem>>
    %254 = vector.extract_strided_slice %198 {offsets = [1, 0, 0], sizes = [1, 2, 256], strides = [1, 1, 1]} : vector<4x2x256xf32> to vector<1x2x256xf32>
    %255 = vector.shape_cast %254 : vector<1x2x256xf32> to vector<2x256xf32>
    %256 = vector.broadcast %253 : f32 to vector<2x256xf32>
    %257 = arith.mulf %256, %255 : vector<2x256xf32>
    %258 = arith.addf %252, %257 : vector<2x256xf32>
    %c92 = arith.constant 92 : index
    %259 = memref.load %arg1[%c92] : memref<144xf32, #tpu.memory_space<smem>>
    %260 = vector.extract_strided_slice %198 {offsets = [2, 0, 0], sizes = [1, 2, 256], strides = [1, 1, 1]} : vector<4x2x256xf32> to vector<1x2x256xf32>
    %261 = vector.shape_cast %260 : vector<1x2x256xf32> to vector<2x256xf32>
    %262 = vector.broadcast %259 : f32 to vector<2x256xf32>
    %263 = arith.mulf %262, %261 : vector<2x256xf32>
    %264 = arith.addf %258, %263 : vector<2x256xf32>
    %c101 = arith.constant 101 : index
    %265 = memref.load %arg1[%c101] : memref<144xf32, #tpu.memory_space<smem>>
    %266 = vector.extract_strided_slice %198 {offsets = [3, 0, 0], sizes = [1, 2, 256], strides = [1, 1, 1]} : vector<4x2x256xf32> to vector<1x2x256xf32>
    %267 = vector.shape_cast %266 : vector<1x2x256xf32> to vector<2x256xf32>
    %268 = vector.broadcast %265 : f32 to vector<2x256xf32>
    %269 = arith.mulf %268, %267 : vector<2x256xf32>
    %270 = arith.addf %264, %269 : vector<2x256xf32>
    %c110 = arith.constant 110 : index
    %271 = memref.load %arg1[%c110] : memref<144xf32, #tpu.memory_space<smem>>
    %272 = vector.extract_strided_slice %198 {offsets = [0, 0, 0], sizes = [1, 2, 256], strides = [1, 1, 1]} : vector<4x2x256xf32> to vector<1x2x256xf32>
    %273 = vector.shape_cast %272 : vector<1x2x256xf32> to vector<2x256xf32>
    %274 = vector.broadcast %271 : f32 to vector<2x256xf32>
    %275 = arith.mulf %274, %273 : vector<2x256xf32>
    %276 = arith.addf %197, %275 : vector<2x256xf32>
    %c119 = arith.constant 119 : index
    %277 = memref.load %arg1[%c119] : memref<144xf32, #tpu.memory_space<smem>>
    %278 = vector.extract_strided_slice %198 {offsets = [1, 0, 0], sizes = [1, 2, 256], strides = [1, 1, 1]} : vector<4x2x256xf32> to vector<1x2x256xf32>
    %279 = vector.shape_cast %278 : vector<1x2x256xf32> to vector<2x256xf32>
    %280 = vector.broadcast %277 : f32 to vector<2x256xf32>
    %281 = arith.mulf %280, %279 : vector<2x256xf32>
    %282 = arith.addf %276, %281 : vector<2x256xf32>
    %c128 = arith.constant 128 : index
    %283 = memref.load %arg1[%c128] : memref<144xf32, #tpu.memory_space<smem>>
    %284 = vector.extract_strided_slice %198 {offsets = [2, 0, 0], sizes = [1, 2, 256], strides = [1, 1, 1]} : vector<4x2x256xf32> to vector<1x2x256xf32>
    %285 = vector.shape_cast %284 : vector<1x2x256xf32> to vector<2x256xf32>
    %286 = vector.broadcast %283 : f32 to vector<2x256xf32>
    %287 = arith.mulf %286, %285 : vector<2x256xf32>
    %288 = arith.addf %282, %287 : vector<2x256xf32>
    %c137 = arith.constant 137 : index
    %289 = memref.load %arg1[%c137] : memref<144xf32, #tpu.memory_space<smem>>
    %290 = vector.extract_strided_slice %198 {offsets = [3, 0, 0], sizes = [1, 2, 256], strides = [1, 1, 1]} : vector<4x2x256xf32> to vector<1x2x256xf32>
    %291 = vector.shape_cast %290 : vector<1x2x256xf32> to vector<2x256xf32>
    %292 = vector.broadcast %289 : f32 to vector<2x256xf32>
    %293 = arith.mulf %292, %291 : vector<2x256xf32>
    %294 = arith.addf %288, %293 : vector<2x256xf32>
    %c240_i32 = arith.constant 240 : i32
    %295 = tpu.dynamic_rotate %0 by %c240_i32 dim 2 : vector<4x2x256xf32>, i32 -> vector<4x2x256xf32>
    %c3 = arith.constant 3 : index
    %296 = memref.load %arg1[%c3] : memref<144xf32, #tpu.memory_space<smem>>
    %297 = vector.extract_strided_slice %295 {offsets = [0, 0, 0], sizes = [1, 2, 256], strides = [1, 1, 1]} : vector<4x2x256xf32> to vector<1x2x256xf32>
    %298 = vector.shape_cast %297 : vector<1x2x256xf32> to vector<2x256xf32>
    %299 = vector.broadcast %296 : f32 to vector<2x256xf32>
    %300 = arith.mulf %299, %298 : vector<2x256xf32>
    %301 = arith.addf %222, %300 : vector<2x256xf32>
    %c12 = arith.constant 12 : index
    %302 = memref.load %arg1[%c12] : memref<144xf32, #tpu.memory_space<smem>>
    %303 = vector.extract_strided_slice %295 {offsets = [1, 0, 0], sizes = [1, 2, 256], strides = [1, 1, 1]} : vector<4x2x256xf32> to vector<1x2x256xf32>
    %304 = vector.shape_cast %303 : vector<1x2x256xf32> to vector<2x256xf32>
    %305 = vector.broadcast %302 : f32 to vector<2x256xf32>
    %306 = arith.mulf %305, %304 : vector<2x256xf32>
    %307 = arith.addf %301, %306 : vector<2x256xf32>
    %c21 = arith.constant 21 : index
    %308 = memref.load %arg1[%c21] : memref<144xf32, #tpu.memory_space<smem>>
    %309 = vector.extract_strided_slice %295 {offsets = [2, 0, 0], sizes = [1, 2, 256], strides = [1, 1, 1]} : vector<4x2x256xf32> to vector<1x2x256xf32>
    %310 = vector.shape_cast %309 : vector<1x2x256xf32> to vector<2x256xf32>
    %311 = vector.broadcast %308 : f32 to vector<2x256xf32>
    %312 = arith.mulf %311, %310 : vector<2x256xf32>
    %313 = arith.addf %307, %312 : vector<2x256xf32>
    %c30 = arith.constant 30 : index
    %314 = memref.load %arg1[%c30] : memref<144xf32, #tpu.memory_space<smem>>
    %315 = vector.extract_strided_slice %295 {offsets = [3, 0, 0], sizes = [1, 2, 256], strides = [1, 1, 1]} : vector<4x2x256xf32> to vector<1x2x256xf32>
    %316 = vector.shape_cast %315 : vector<1x2x256xf32> to vector<2x256xf32>
    %317 = vector.broadcast %314 : f32 to vector<2x256xf32>
    %318 = arith.mulf %317, %316 : vector<2x256xf32>
    %319 = arith.addf %313, %318 : vector<2x256xf32>
    %c39 = arith.constant 39 : index
    %320 = memref.load %arg1[%c39] : memref<144xf32, #tpu.memory_space<smem>>
    %321 = vector.extract_strided_slice %295 {offsets = [0, 0, 0], sizes = [1, 2, 256], strides = [1, 1, 1]} : vector<4x2x256xf32> to vector<1x2x256xf32>
    %322 = vector.shape_cast %321 : vector<1x2x256xf32> to vector<2x256xf32>
    %323 = vector.broadcast %320 : f32 to vector<2x256xf32>
    %324 = arith.mulf %323, %322 : vector<2x256xf32>
    %325 = arith.addf %246, %324 : vector<2x256xf32>
    %c48 = arith.constant 48 : index
    %326 = memref.load %arg1[%c48] : memref<144xf32, #tpu.memory_space<smem>>
    %327 = vector.extract_strided_slice %295 {offsets = [1, 0, 0], sizes = [1, 2, 256], strides = [1, 1, 1]} : vector<4x2x256xf32> to vector<1x2x256xf32>
    %328 = vector.shape_cast %327 : vector<1x2x256xf32> to vector<2x256xf32>
    %329 = vector.broadcast %326 : f32 to vector<2x256xf32>
    %330 = arith.mulf %329, %328 : vector<2x256xf32>
    %331 = arith.addf %325, %330 : vector<2x256xf32>
    %c57 = arith.constant 57 : index
    %332 = memref.load %arg1[%c57] : memref<144xf32, #tpu.memory_space<smem>>
    %333 = vector.extract_strided_slice %295 {offsets = [2, 0, 0], sizes = [1, 2, 256], strides = [1, 1, 1]} : vector<4x2x256xf32> to vector<1x2x256xf32>
    %334 = vector.shape_cast %333 : vector<1x2x256xf32> to vector<2x256xf32>
    %335 = vector.broadcast %332 : f32 to vector<2x256xf32>
    %336 = arith.mulf %335, %334 : vector<2x256xf32>
    %337 = arith.addf %331, %336 : vector<2x256xf32>
    %c66 = arith.constant 66 : index
    %338 = memref.load %arg1[%c66] : memref<144xf32, #tpu.memory_space<smem>>
    %339 = vector.extract_strided_slice %295 {offsets = [3, 0, 0], sizes = [1, 2, 256], strides = [1, 1, 1]} : vector<4x2x256xf32> to vector<1x2x256xf32>
    %340 = vector.shape_cast %339 : vector<1x2x256xf32> to vector<2x256xf32>
    %341 = vector.broadcast %338 : f32 to vector<2x256xf32>
    %342 = arith.mulf %341, %340 : vector<2x256xf32>
    %343 = arith.addf %337, %342 : vector<2x256xf32>
    %c75 = arith.constant 75 : index
    %344 = memref.load %arg1[%c75] : memref<144xf32, #tpu.memory_space<smem>>
    %345 = vector.extract_strided_slice %295 {offsets = [0, 0, 0], sizes = [1, 2, 256], strides = [1, 1, 1]} : vector<4x2x256xf32> to vector<1x2x256xf32>
    %346 = vector.shape_cast %345 : vector<1x2x256xf32> to vector<2x256xf32>
    %347 = vector.broadcast %344 : f32 to vector<2x256xf32>
    %348 = arith.mulf %347, %346 : vector<2x256xf32>
    %349 = arith.addf %270, %348 : vector<2x256xf32>
    %c84 = arith.constant 84 : index
    %350 = memref.load %arg1[%c84] : memref<144xf32, #tpu.memory_space<smem>>
    %351 = vector.extract_strided_slice %295 {offsets = [1, 0, 0], sizes = [1, 2, 256], strides = [1, 1, 1]} : vector<4x2x256xf32> to vector<1x2x256xf32>
    %352 = vector.shape_cast %351 : vector<1x2x256xf32> to vector<2x256xf32>
    %353 = vector.broadcast %350 : f32 to vector<2x256xf32>
    %354 = arith.mulf %353, %352 : vector<2x256xf32>
    %355 = arith.addf %349, %354 : vector<2x256xf32>
    %c93 = arith.constant 93 : index
    %356 = memref.load %arg1[%c93] : memref<144xf32, #tpu.memory_space<smem>>
    %357 = vector.extract_strided_slice %295 {offsets = [2, 0, 0], sizes = [1, 2, 256], strides = [1, 1, 1]} : vector<4x2x256xf32> to vector<1x2x256xf32>
    %358 = vector.shape_cast %357 : vector<1x2x256xf32> to vector<2x256xf32>
    %359 = vector.broadcast %356 : f32 to vector<2x256xf32>
    %360 = arith.mulf %359, %358 : vector<2x256xf32>
    %361 = arith.addf %355, %360 : vector<2x256xf32>
    %c102 = arith.constant 102 : index
    %362 = memref.load %arg1[%c102] : memref<144xf32, #tpu.memory_space<smem>>
    %363 = vector.extract_strided_slice %295 {offsets = [3, 0, 0], sizes = [1, 2, 256], strides = [1, 1, 1]} : vector<4x2x256xf32> to vector<1x2x256xf32>
    %364 = vector.shape_cast %363 : vector<1x2x256xf32> to vector<2x256xf32>
    %365 = vector.broadcast %362 : f32 to vector<2x256xf32>
    %366 = arith.mulf %365, %364 : vector<2x256xf32>
    %367 = arith.addf %361, %366 : vector<2x256xf32>
    %c111 = arith.constant 111 : index
    %368 = memref.load %arg1[%c111] : memref<144xf32, #tpu.memory_space<smem>>
    %369 = vector.extract_strided_slice %295 {offsets = [0, 0, 0], sizes = [1, 2, 256], strides = [1, 1, 1]} : vector<4x2x256xf32> to vector<1x2x256xf32>
    %370 = vector.shape_cast %369 : vector<1x2x256xf32> to vector<2x256xf32>
    %371 = vector.broadcast %368 : f32 to vector<2x256xf32>
    %372 = arith.mulf %371, %370 : vector<2x256xf32>
    %373 = arith.addf %294, %372 : vector<2x256xf32>
    %c120 = arith.constant 120 : index
    %374 = memref.load %arg1[%c120] : memref<144xf32, #tpu.memory_space<smem>>
    %375 = vector.extract_strided_slice %295 {offsets = [1, 0, 0], sizes = [1, 2, 256], strides = [1, 1, 1]} : vector<4x2x256xf32> to vector<1x2x256xf32>
    %376 = vector.shape_cast %375 : vector<1x2x256xf32> to vector<2x256xf32>
    %377 = vector.broadcast %374 : f32 to vector<2x256xf32>
    %378 = arith.mulf %377, %376 : vector<2x256xf32>
    %379 = arith.addf %373, %378 : vector<2x256xf32>
    %c129 = arith.constant 129 : index
    %380 = memref.load %arg1[%c129] : memref<144xf32, #tpu.memory_space<smem>>
    %381 = vector.extract_strided_slice %295 {offsets = [2, 0, 0], sizes = [1, 2, 256], strides = [1, 1, 1]} : vector<4x2x256xf32> to vector<1x2x256xf32>
    %382 = vector.shape_cast %381 : vector<1x2x256xf32> to vector<2x256xf32>
    %383 = vector.broadcast %380 : f32 to vector<2x256xf32>
    %384 = arith.mulf %383, %382 : vector<2x256xf32>
    %385 = arith.addf %379, %384 : vector<2x256xf32>
    %c138 = arith.constant 138 : index
    %386 = memref.load %arg1[%c138] : memref<144xf32, #tpu.memory_space<smem>>
    %387 = vector.extract_strided_slice %295 {offsets = [3, 0, 0], sizes = [1, 2, 256], strides = [1, 1, 1]} : vector<4x2x256xf32> to vector<1x2x256xf32>
    %388 = vector.shape_cast %387 : vector<1x2x256xf32> to vector<2x256xf32>
    %389 = vector.broadcast %386 : f32 to vector<2x256xf32>
    %390 = arith.mulf %389, %388 : vector<2x256xf32>
    %391 = arith.addf %385, %390 : vector<2x256xf32>
    %c239_i32 = arith.constant 239 : i32
    %392 = tpu.dynamic_rotate %0 by %c239_i32 dim 2 : vector<4x2x256xf32>, i32 -> vector<4x2x256xf32>
    %c4 = arith.constant 4 : index
    %393 = memref.load %arg1[%c4] : memref<144xf32, #tpu.memory_space<smem>>
    %394 = vector.extract_strided_slice %392 {offsets = [0, 0, 0], sizes = [1, 2, 256], strides = [1, 1, 1]} : vector<4x2x256xf32> to vector<1x2x256xf32>
    %395 = vector.shape_cast %394 : vector<1x2x256xf32> to vector<2x256xf32>
    %396 = vector.broadcast %393 : f32 to vector<2x256xf32>
    %397 = arith.mulf %396, %395 : vector<2x256xf32>
    %398 = arith.addf %319, %397 : vector<2x256xf32>
    %c13 = arith.constant 13 : index
    %399 = memref.load %arg1[%c13] : memref<144xf32, #tpu.memory_space<smem>>
    %400 = vector.extract_strided_slice %392 {offsets = [1, 0, 0], sizes = [1, 2, 256], strides = [1, 1, 1]} : vector<4x2x256xf32> to vector<1x2x256xf32>
    %401 = vector.shape_cast %400 : vector<1x2x256xf32> to vector<2x256xf32>
    %402 = vector.broadcast %399 : f32 to vector<2x256xf32>
    %403 = arith.mulf %402, %401 : vector<2x256xf32>
    %404 = arith.addf %398, %403 : vector<2x256xf32>
    %c22 = arith.constant 22 : index
    %405 = memref.load %arg1[%c22] : memref<144xf32, #tpu.memory_space<smem>>
    %406 = vector.extract_strided_slice %392 {offsets = [2, 0, 0], sizes = [1, 2, 256], strides = [1, 1, 1]} : vector<4x2x256xf32> to vector<1x2x256xf32>
    %407 = vector.shape_cast %406 : vector<1x2x256xf32> to vector<2x256xf32>
    %408 = vector.broadcast %405 : f32 to vector<2x256xf32>
    %409 = arith.mulf %408, %407 : vector<2x256xf32>
    %410 = arith.addf %404, %409 : vector<2x256xf32>
    %c31 = arith.constant 31 : index
    %411 = memref.load %arg1[%c31] : memref<144xf32, #tpu.memory_space<smem>>
    %412 = vector.extract_strided_slice %392 {offsets = [3, 0, 0], sizes = [1, 2, 256], strides = [1, 1, 1]} : vector<4x2x256xf32> to vector<1x2x256xf32>
    %413 = vector.shape_cast %412 : vector<1x2x256xf32> to vector<2x256xf32>
    %414 = vector.broadcast %411 : f32 to vector<2x256xf32>
    %415 = arith.mulf %414, %413 : vector<2x256xf32>
    %416 = arith.addf %410, %415 : vector<2x256xf32>
    %c40 = arith.constant 40 : index
    %417 = memref.load %arg1[%c40] : memref<144xf32, #tpu.memory_space<smem>>
    %418 = vector.extract_strided_slice %392 {offsets = [0, 0, 0], sizes = [1, 2, 256], strides = [1, 1, 1]} : vector<4x2x256xf32> to vector<1x2x256xf32>
    %419 = vector.shape_cast %418 : vector<1x2x256xf32> to vector<2x256xf32>
    %420 = vector.broadcast %417 : f32 to vector<2x256xf32>
    %421 = arith.mulf %420, %419 : vector<2x256xf32>
    %422 = arith.addf %343, %421 : vector<2x256xf32>
    %c49 = arith.constant 49 : index
    %423 = memref.load %arg1[%c49] : memref<144xf32, #tpu.memory_space<smem>>
    %424 = vector.extract_strided_slice %392 {offsets = [1, 0, 0], sizes = [1, 2, 256], strides = [1, 1, 1]} : vector<4x2x256xf32> to vector<1x2x256xf32>
    %425 = vector.shape_cast %424 : vector<1x2x256xf32> to vector<2x256xf32>
    %426 = vector.broadcast %423 : f32 to vector<2x256xf32>
    %427 = arith.mulf %426, %425 : vector<2x256xf32>
    %428 = arith.addf %422, %427 : vector<2x256xf32>
    %c58 = arith.constant 58 : index
    %429 = memref.load %arg1[%c58] : memref<144xf32, #tpu.memory_space<smem>>
    %430 = vector.extract_strided_slice %392 {offsets = [2, 0, 0], sizes = [1, 2, 256], strides = [1, 1, 1]} : vector<4x2x256xf32> to vector<1x2x256xf32>
    %431 = vector.shape_cast %430 : vector<1x2x256xf32> to vector<2x256xf32>
    %432 = vector.broadcast %429 : f32 to vector<2x256xf32>
    %433 = arith.mulf %432, %431 : vector<2x256xf32>
    %434 = arith.addf %428, %433 : vector<2x256xf32>
    %c67 = arith.constant 67 : index
    %435 = memref.load %arg1[%c67] : memref<144xf32, #tpu.memory_space<smem>>
    %436 = vector.extract_strided_slice %392 {offsets = [3, 0, 0], sizes = [1, 2, 256], strides = [1, 1, 1]} : vector<4x2x256xf32> to vector<1x2x256xf32>
    %437 = vector.shape_cast %436 : vector<1x2x256xf32> to vector<2x256xf32>
    %438 = vector.broadcast %435 : f32 to vector<2x256xf32>
    %439 = arith.mulf %438, %437 : vector<2x256xf32>
    %440 = arith.addf %434, %439 : vector<2x256xf32>
    %c76 = arith.constant 76 : index
    %441 = memref.load %arg1[%c76] : memref<144xf32, #tpu.memory_space<smem>>
    %442 = vector.extract_strided_slice %392 {offsets = [0, 0, 0], sizes = [1, 2, 256], strides = [1, 1, 1]} : vector<4x2x256xf32> to vector<1x2x256xf32>
    %443 = vector.shape_cast %442 : vector<1x2x256xf32> to vector<2x256xf32>
    %444 = vector.broadcast %441 : f32 to vector<2x256xf32>
    %445 = arith.mulf %444, %443 : vector<2x256xf32>
    %446 = arith.addf %367, %445 : vector<2x256xf32>
    %c85 = arith.constant 85 : index
    %447 = memref.load %arg1[%c85] : memref<144xf32, #tpu.memory_space<smem>>
    %448 = vector.extract_strided_slice %392 {offsets = [1, 0, 0], sizes = [1, 2, 256], strides = [1, 1, 1]} : vector<4x2x256xf32> to vector<1x2x256xf32>
    %449 = vector.shape_cast %448 : vector<1x2x256xf32> to vector<2x256xf32>
    %450 = vector.broadcast %447 : f32 to vector<2x256xf32>
    %451 = arith.mulf %450, %449 : vector<2x256xf32>
    %452 = arith.addf %446, %451 : vector<2x256xf32>
    %c94 = arith.constant 94 : index
    %453 = memref.load %arg1[%c94] : memref<144xf32, #tpu.memory_space<smem>>
    %454 = vector.extract_strided_slice %392 {offsets = [2, 0, 0], sizes = [1, 2, 256], strides = [1, 1, 1]} : vector<4x2x256xf32> to vector<1x2x256xf32>
    %455 = vector.shape_cast %454 : vector<1x2x256xf32> to vector<2x256xf32>
    %456 = vector.broadcast %453 : f32 to vector<2x256xf32>
    %457 = arith.mulf %456, %455 : vector<2x256xf32>
    %458 = arith.addf %452, %457 : vector<2x256xf32>
    %c103 = arith.constant 103 : index
    %459 = memref.load %arg1[%c103] : memref<144xf32, #tpu.memory_space<smem>>
    %460 = vector.extract_strided_slice %392 {offsets = [3, 0, 0], sizes = [1, 2, 256], strides = [1, 1, 1]} : vector<4x2x256xf32> to vector<1x2x256xf32>
    %461 = vector.shape_cast %460 : vector<1x2x256xf32> to vector<2x256xf32>
    %462 = vector.broadcast %459 : f32 to vector<2x256xf32>
    %463 = arith.mulf %462, %461 : vector<2x256xf32>
    %464 = arith.addf %458, %463 : vector<2x256xf32>
    %c112 = arith.constant 112 : index
    %465 = memref.load %arg1[%c112] : memref<144xf32, #tpu.memory_space<smem>>
    %466 = vector.extract_strided_slice %392 {offsets = [0, 0, 0], sizes = [1, 2, 256], strides = [1, 1, 1]} : vector<4x2x256xf32> to vector<1x2x256xf32>
    %467 = vector.shape_cast %466 : vector<1x2x256xf32> to vector<2x256xf32>
    %468 = vector.broadcast %465 : f32 to vector<2x256xf32>
    %469 = arith.mulf %468, %467 : vector<2x256xf32>
    %470 = arith.addf %391, %469 : vector<2x256xf32>
    %c121 = arith.constant 121 : index
    %471 = memref.load %arg1[%c121] : memref<144xf32, #tpu.memory_space<smem>>
    %472 = vector.extract_strided_slice %392 {offsets = [1, 0, 0], sizes = [1, 2, 256], strides = [1, 1, 1]} : vector<4x2x256xf32> to vector<1x2x256xf32>
    %473 = vector.shape_cast %472 : vector<1x2x256xf32> to vector<2x256xf32>
    %474 = vector.broadcast %471 : f32 to vector<2x256xf32>
    %475 = arith.mulf %474, %473 : vector<2x256xf32>
    %476 = arith.addf %470, %475 : vector<2x256xf32>
    %c130 = arith.constant 130 : index
    %477 = memref.load %arg1[%c130] : memref<144xf32, #tpu.memory_space<smem>>
    %478 = vector.extract_strided_slice %392 {offsets = [2, 0, 0], sizes = [1, 2, 256], strides = [1, 1, 1]} : vector<4x2x256xf32> to vector<1x2x256xf32>
    %479 = vector.shape_cast %478 : vector<1x2x256xf32> to vector<2x256xf32>
    %480 = vector.broadcast %477 : f32 to vector<2x256xf32>
    %481 = arith.mulf %480, %479 : vector<2x256xf32>
    %482 = arith.addf %476, %481 : vector<2x256xf32>
    %c139 = arith.constant 139 : index
    %483 = memref.load %arg1[%c139] : memref<144xf32, #tpu.memory_space<smem>>
    %484 = vector.extract_strided_slice %392 {offsets = [3, 0, 0], sizes = [1, 2, 256], strides = [1, 1, 1]} : vector<4x2x256xf32> to vector<1x2x256xf32>
    %485 = vector.shape_cast %484 : vector<1x2x256xf32> to vector<2x256xf32>
    %486 = vector.broadcast %483 : f32 to vector<2x256xf32>
    %487 = arith.mulf %486, %485 : vector<2x256xf32>
    %488 = arith.addf %482, %487 : vector<2x256xf32>
    %c238_i32 = arith.constant 238 : i32
    %489 = tpu.dynamic_rotate %0 by %c238_i32 dim 2 : vector<4x2x256xf32>, i32 -> vector<4x2x256xf32>
    %c5 = arith.constant 5 : index
    %490 = memref.load %arg1[%c5] : memref<144xf32, #tpu.memory_space<smem>>
    %491 = vector.extract_strided_slice %489 {offsets = [0, 0, 0], sizes = [1, 2, 256], strides = [1, 1, 1]} : vector<4x2x256xf32> to vector<1x2x256xf32>
    %492 = vector.shape_cast %491 : vector<1x2x256xf32> to vector<2x256xf32>
    %493 = vector.broadcast %490 : f32 to vector<2x256xf32>
    %494 = arith.mulf %493, %492 : vector<2x256xf32>
    %495 = arith.addf %416, %494 : vector<2x256xf32>
    %c14 = arith.constant 14 : index
    %496 = memref.load %arg1[%c14] : memref<144xf32, #tpu.memory_space<smem>>
    %497 = vector.extract_strided_slice %489 {offsets = [1, 0, 0], sizes = [1, 2, 256], strides = [1, 1, 1]} : vector<4x2x256xf32> to vector<1x2x256xf32>
    %498 = vector.shape_cast %497 : vector<1x2x256xf32> to vector<2x256xf32>
    %499 = vector.broadcast %496 : f32 to vector<2x256xf32>
    %500 = arith.mulf %499, %498 : vector<2x256xf32>
    %501 = arith.addf %495, %500 : vector<2x256xf32>
    %c23 = arith.constant 23 : index
    %502 = memref.load %arg1[%c23] : memref<144xf32, #tpu.memory_space<smem>>
    %503 = vector.extract_strided_slice %489 {offsets = [2, 0, 0], sizes = [1, 2, 256], strides = [1, 1, 1]} : vector<4x2x256xf32> to vector<1x2x256xf32>
    %504 = vector.shape_cast %503 : vector<1x2x256xf32> to vector<2x256xf32>
    %505 = vector.broadcast %502 : f32 to vector<2x256xf32>
    %506 = arith.mulf %505, %504 : vector<2x256xf32>
    %507 = arith.addf %501, %506 : vector<2x256xf32>
    %c32 = arith.constant 32 : index
    %508 = memref.load %arg1[%c32] : memref<144xf32, #tpu.memory_space<smem>>
    %509 = vector.extract_strided_slice %489 {offsets = [3, 0, 0], sizes = [1, 2, 256], strides = [1, 1, 1]} : vector<4x2x256xf32> to vector<1x2x256xf32>
    %510 = vector.shape_cast %509 : vector<1x2x256xf32> to vector<2x256xf32>
    %511 = vector.broadcast %508 : f32 to vector<2x256xf32>
    %512 = arith.mulf %511, %510 : vector<2x256xf32>
    %513 = arith.addf %507, %512 : vector<2x256xf32>
    %c41 = arith.constant 41 : index
    %514 = memref.load %arg1[%c41] : memref<144xf32, #tpu.memory_space<smem>>
    %515 = vector.extract_strided_slice %489 {offsets = [0, 0, 0], sizes = [1, 2, 256], strides = [1, 1, 1]} : vector<4x2x256xf32> to vector<1x2x256xf32>
    %516 = vector.shape_cast %515 : vector<1x2x256xf32> to vector<2x256xf32>
    %517 = vector.broadcast %514 : f32 to vector<2x256xf32>
    %518 = arith.mulf %517, %516 : vector<2x256xf32>
    %519 = arith.addf %440, %518 : vector<2x256xf32>
    %c50 = arith.constant 50 : index
    %520 = memref.load %arg1[%c50] : memref<144xf32, #tpu.memory_space<smem>>
    %521 = vector.extract_strided_slice %489 {offsets = [1, 0, 0], sizes = [1, 2, 256], strides = [1, 1, 1]} : vector<4x2x256xf32> to vector<1x2x256xf32>
    %522 = vector.shape_cast %521 : vector<1x2x256xf32> to vector<2x256xf32>
    %523 = vector.broadcast %520 : f32 to vector<2x256xf32>
    %524 = arith.mulf %523, %522 : vector<2x256xf32>
    %525 = arith.addf %519, %524 : vector<2x256xf32>
    %c59 = arith.constant 59 : index
    %526 = memref.load %arg1[%c59] : memref<144xf32, #tpu.memory_space<smem>>
    %527 = vector.extract_strided_slice %489 {offsets = [2, 0, 0], sizes = [1, 2, 256], strides = [1, 1, 1]} : vector<4x2x256xf32> to vector<1x2x256xf32>
    %528 = vector.shape_cast %527 : vector<1x2x256xf32> to vector<2x256xf32>
    %529 = vector.broadcast %526 : f32 to vector<2x256xf32>
    %530 = arith.mulf %529, %528 : vector<2x256xf32>
    %531 = arith.addf %525, %530 : vector<2x256xf32>
    %c68 = arith.constant 68 : index
    %532 = memref.load %arg1[%c68] : memref<144xf32, #tpu.memory_space<smem>>
    %533 = vector.extract_strided_slice %489 {offsets = [3, 0, 0], sizes = [1, 2, 256], strides = [1, 1, 1]} : vector<4x2x256xf32> to vector<1x2x256xf32>
    %534 = vector.shape_cast %533 : vector<1x2x256xf32> to vector<2x256xf32>
    %535 = vector.broadcast %532 : f32 to vector<2x256xf32>
    %536 = arith.mulf %535, %534 : vector<2x256xf32>
    %537 = arith.addf %531, %536 : vector<2x256xf32>
    %c77 = arith.constant 77 : index
    %538 = memref.load %arg1[%c77] : memref<144xf32, #tpu.memory_space<smem>>
    %539 = vector.extract_strided_slice %489 {offsets = [0, 0, 0], sizes = [1, 2, 256], strides = [1, 1, 1]} : vector<4x2x256xf32> to vector<1x2x256xf32>
    %540 = vector.shape_cast %539 : vector<1x2x256xf32> to vector<2x256xf32>
    %541 = vector.broadcast %538 : f32 to vector<2x256xf32>
    %542 = arith.mulf %541, %540 : vector<2x256xf32>
    %543 = arith.addf %464, %542 : vector<2x256xf32>
    %c86 = arith.constant 86 : index
    %544 = memref.load %arg1[%c86] : memref<144xf32, #tpu.memory_space<smem>>
    %545 = vector.extract_strided_slice %489 {offsets = [1, 0, 0], sizes = [1, 2, 256], strides = [1, 1, 1]} : vector<4x2x256xf32> to vector<1x2x256xf32>
    %546 = vector.shape_cast %545 : vector<1x2x256xf32> to vector<2x256xf32>
    %547 = vector.broadcast %544 : f32 to vector<2x256xf32>
    %548 = arith.mulf %547, %546 : vector<2x256xf32>
    %549 = arith.addf %543, %548 : vector<2x256xf32>
    %c95 = arith.constant 95 : index
    %550 = memref.load %arg1[%c95] : memref<144xf32, #tpu.memory_space<smem>>
    %551 = vector.extract_strided_slice %489 {offsets = [2, 0, 0], sizes = [1, 2, 256], strides = [1, 1, 1]} : vector<4x2x256xf32> to vector<1x2x256xf32>
    %552 = vector.shape_cast %551 : vector<1x2x256xf32> to vector<2x256xf32>
    %553 = vector.broadcast %550 : f32 to vector<2x256xf32>
    %554 = arith.mulf %553, %552 : vector<2x256xf32>
    %555 = arith.addf %549, %554 : vector<2x256xf32>
    %c104 = arith.constant 104 : index
    %556 = memref.load %arg1[%c104] : memref<144xf32, #tpu.memory_space<smem>>
    %557 = vector.extract_strided_slice %489 {offsets = [3, 0, 0], sizes = [1, 2, 256], strides = [1, 1, 1]} : vector<4x2x256xf32> to vector<1x2x256xf32>
    %558 = vector.shape_cast %557 : vector<1x2x256xf32> to vector<2x256xf32>
    %559 = vector.broadcast %556 : f32 to vector<2x256xf32>
    %560 = arith.mulf %559, %558 : vector<2x256xf32>
    %561 = arith.addf %555, %560 : vector<2x256xf32>
    %c113 = arith.constant 113 : index
    %562 = memref.load %arg1[%c113] : memref<144xf32, #tpu.memory_space<smem>>
    %563 = vector.extract_strided_slice %489 {offsets = [0, 0, 0], sizes = [1, 2, 256], strides = [1, 1, 1]} : vector<4x2x256xf32> to vector<1x2x256xf32>
    %564 = vector.shape_cast %563 : vector<1x2x256xf32> to vector<2x256xf32>
    %565 = vector.broadcast %562 : f32 to vector<2x256xf32>
    %566 = arith.mulf %565, %564 : vector<2x256xf32>
    %567 = arith.addf %488, %566 : vector<2x256xf32>
    %c122 = arith.constant 122 : index
    %568 = memref.load %arg1[%c122] : memref<144xf32, #tpu.memory_space<smem>>
    %569 = vector.extract_strided_slice %489 {offsets = [1, 0, 0], sizes = [1, 2, 256], strides = [1, 1, 1]} : vector<4x2x256xf32> to vector<1x2x256xf32>
    %570 = vector.shape_cast %569 : vector<1x2x256xf32> to vector<2x256xf32>
    %571 = vector.broadcast %568 : f32 to vector<2x256xf32>
    %572 = arith.mulf %571, %570 : vector<2x256xf32>
    %573 = arith.addf %567, %572 : vector<2x256xf32>
    %c131 = arith.constant 131 : index
    %574 = memref.load %arg1[%c131] : memref<144xf32, #tpu.memory_space<smem>>
    %575 = vector.extract_strided_slice %489 {offsets = [2, 0, 0], sizes = [1, 2, 256], strides = [1, 1, 1]} : vector<4x2x256xf32> to vector<1x2x256xf32>
    %576 = vector.shape_cast %575 : vector<1x2x256xf32> to vector<2x256xf32>
    %577 = vector.broadcast %574 : f32 to vector<2x256xf32>
    %578 = arith.mulf %577, %576 : vector<2x256xf32>
    %579 = arith.addf %573, %578 : vector<2x256xf32>
    %c140 = arith.constant 140 : index
    %580 = memref.load %arg1[%c140] : memref<144xf32, #tpu.memory_space<smem>>
    %581 = vector.extract_strided_slice %489 {offsets = [3, 0, 0], sizes = [1, 2, 256], strides = [1, 1, 1]} : vector<4x2x256xf32> to vector<1x2x256xf32>
    %582 = vector.shape_cast %581 : vector<1x2x256xf32> to vector<2x256xf32>
    %583 = vector.broadcast %580 : f32 to vector<2x256xf32>
    %584 = arith.mulf %583, %582 : vector<2x256xf32>
    %585 = arith.addf %579, %584 : vector<2x256xf32>
    %c224_i32 = arith.constant 224 : i32
    %586 = tpu.dynamic_rotate %0 by %c224_i32 dim 2 : vector<4x2x256xf32>, i32 -> vector<4x2x256xf32>
    %c6 = arith.constant 6 : index
    %587 = memref.load %arg1[%c6] : memref<144xf32, #tpu.memory_space<smem>>
    %588 = vector.extract_strided_slice %586 {offsets = [0, 0, 0], sizes = [1, 2, 256], strides = [1, 1, 1]} : vector<4x2x256xf32> to vector<1x2x256xf32>
    %589 = vector.shape_cast %588 : vector<1x2x256xf32> to vector<2x256xf32>
    %590 = vector.broadcast %587 : f32 to vector<2x256xf32>
    %591 = arith.mulf %590, %589 : vector<2x256xf32>
    %592 = arith.addf %513, %591 : vector<2x256xf32>
    %c15 = arith.constant 15 : index
    %593 = memref.load %arg1[%c15] : memref<144xf32, #tpu.memory_space<smem>>
    %594 = vector.extract_strided_slice %586 {offsets = [1, 0, 0], sizes = [1, 2, 256], strides = [1, 1, 1]} : vector<4x2x256xf32> to vector<1x2x256xf32>
    %595 = vector.shape_cast %594 : vector<1x2x256xf32> to vector<2x256xf32>
    %596 = vector.broadcast %593 : f32 to vector<2x256xf32>
    %597 = arith.mulf %596, %595 : vector<2x256xf32>
    %598 = arith.addf %592, %597 : vector<2x256xf32>
    %c24 = arith.constant 24 : index
    %599 = memref.load %arg1[%c24] : memref<144xf32, #tpu.memory_space<smem>>
    %600 = vector.extract_strided_slice %586 {offsets = [2, 0, 0], sizes = [1, 2, 256], strides = [1, 1, 1]} : vector<4x2x256xf32> to vector<1x2x256xf32>
    %601 = vector.shape_cast %600 : vector<1x2x256xf32> to vector<2x256xf32>
    %602 = vector.broadcast %599 : f32 to vector<2x256xf32>
    %603 = arith.mulf %602, %601 : vector<2x256xf32>
    %604 = arith.addf %598, %603 : vector<2x256xf32>
    %c33 = arith.constant 33 : index
    %605 = memref.load %arg1[%c33] : memref<144xf32, #tpu.memory_space<smem>>
    %606 = vector.extract_strided_slice %586 {offsets = [3, 0, 0], sizes = [1, 2, 256], strides = [1, 1, 1]} : vector<4x2x256xf32> to vector<1x2x256xf32>
    %607 = vector.shape_cast %606 : vector<1x2x256xf32> to vector<2x256xf32>
    %608 = vector.broadcast %605 : f32 to vector<2x256xf32>
    %609 = arith.mulf %608, %607 : vector<2x256xf32>
    %610 = arith.addf %604, %609 : vector<2x256xf32>
    %c42 = arith.constant 42 : index
    %611 = memref.load %arg1[%c42] : memref<144xf32, #tpu.memory_space<smem>>
    %612 = vector.extract_strided_slice %586 {offsets = [0, 0, 0], sizes = [1, 2, 256], strides = [1, 1, 1]} : vector<4x2x256xf32> to vector<1x2x256xf32>
    %613 = vector.shape_cast %612 : vector<1x2x256xf32> to vector<2x256xf32>
    %614 = vector.broadcast %611 : f32 to vector<2x256xf32>
    %615 = arith.mulf %614, %613 : vector<2x256xf32>
    %616 = arith.addf %537, %615 : vector<2x256xf32>
    %c51 = arith.constant 51 : index
    %617 = memref.load %arg1[%c51] : memref<144xf32, #tpu.memory_space<smem>>
    %618 = vector.extract_strided_slice %586 {offsets = [1, 0, 0], sizes = [1, 2, 256], strides = [1, 1, 1]} : vector<4x2x256xf32> to vector<1x2x256xf32>
    %619 = vector.shape_cast %618 : vector<1x2x256xf32> to vector<2x256xf32>
    %620 = vector.broadcast %617 : f32 to vector<2x256xf32>
    %621 = arith.mulf %620, %619 : vector<2x256xf32>
    %622 = arith.addf %616, %621 : vector<2x256xf32>
    %c60 = arith.constant 60 : index
    %623 = memref.load %arg1[%c60] : memref<144xf32, #tpu.memory_space<smem>>
    %624 = vector.extract_strided_slice %586 {offsets = [2, 0, 0], sizes = [1, 2, 256], strides = [1, 1, 1]} : vector<4x2x256xf32> to vector<1x2x256xf32>
    %625 = vector.shape_cast %624 : vector<1x2x256xf32> to vector<2x256xf32>
    %626 = vector.broadcast %623 : f32 to vector<2x256xf32>
    %627 = arith.mulf %626, %625 : vector<2x256xf32>
    %628 = arith.addf %622, %627 : vector<2x256xf32>
    %c69 = arith.constant 69 : index
    %629 = memref.load %arg1[%c69] : memref<144xf32, #tpu.memory_space<smem>>
    %630 = vector.extract_strided_slice %586 {offsets = [3, 0, 0], sizes = [1, 2, 256], strides = [1, 1, 1]} : vector<4x2x256xf32> to vector<1x2x256xf32>
    %631 = vector.shape_cast %630 : vector<1x2x256xf32> to vector<2x256xf32>
    %632 = vector.broadcast %629 : f32 to vector<2x256xf32>
    %633 = arith.mulf %632, %631 : vector<2x256xf32>
    %634 = arith.addf %628, %633 : vector<2x256xf32>
    %c78 = arith.constant 78 : index
    %635 = memref.load %arg1[%c78] : memref<144xf32, #tpu.memory_space<smem>>
    %636 = vector.extract_strided_slice %586 {offsets = [0, 0, 0], sizes = [1, 2, 256], strides = [1, 1, 1]} : vector<4x2x256xf32> to vector<1x2x256xf32>
    %637 = vector.shape_cast %636 : vector<1x2x256xf32> to vector<2x256xf32>
    %638 = vector.broadcast %635 : f32 to vector<2x256xf32>
    %639 = arith.mulf %638, %637 : vector<2x256xf32>
    %640 = arith.addf %561, %639 : vector<2x256xf32>
    %c87 = arith.constant 87 : index
    %641 = memref.load %arg1[%c87] : memref<144xf32, #tpu.memory_space<smem>>
    %642 = vector.extract_strided_slice %586 {offsets = [1, 0, 0], sizes = [1, 2, 256], strides = [1, 1, 1]} : vector<4x2x256xf32> to vector<1x2x256xf32>
    %643 = vector.shape_cast %642 : vector<1x2x256xf32> to vector<2x256xf32>
    %644 = vector.broadcast %641 : f32 to vector<2x256xf32>
    %645 = arith.mulf %644, %643 : vector<2x256xf32>
    %646 = arith.addf %640, %645 : vector<2x256xf32>
    %c96 = arith.constant 96 : index
    %647 = memref.load %arg1[%c96] : memref<144xf32, #tpu.memory_space<smem>>
    %648 = vector.extract_strided_slice %586 {offsets = [2, 0, 0], sizes = [1, 2, 256], strides = [1, 1, 1]} : vector<4x2x256xf32> to vector<1x2x256xf32>
    %649 = vector.shape_cast %648 : vector<1x2x256xf32> to vector<2x256xf32>
    %650 = vector.broadcast %647 : f32 to vector<2x256xf32>
    %651 = arith.mulf %650, %649 : vector<2x256xf32>
    %652 = arith.addf %646, %651 : vector<2x256xf32>
    %c105 = arith.constant 105 : index
    %653 = memref.load %arg1[%c105] : memref<144xf32, #tpu.memory_space<smem>>
    %654 = vector.extract_strided_slice %586 {offsets = [3, 0, 0], sizes = [1, 2, 256], strides = [1, 1, 1]} : vector<4x2x256xf32> to vector<1x2x256xf32>
    %655 = vector.shape_cast %654 : vector<1x2x256xf32> to vector<2x256xf32>
    %656 = vector.broadcast %653 : f32 to vector<2x256xf32>
    %657 = arith.mulf %656, %655 : vector<2x256xf32>
    %658 = arith.addf %652, %657 : vector<2x256xf32>
    %c114 = arith.constant 114 : index
    %659 = memref.load %arg1[%c114] : memref<144xf32, #tpu.memory_space<smem>>
    %660 = vector.extract_strided_slice %586 {offsets = [0, 0, 0], sizes = [1, 2, 256], strides = [1, 1, 1]} : vector<4x2x256xf32> to vector<1x2x256xf32>
    %661 = vector.shape_cast %660 : vector<1x2x256xf32> to vector<2x256xf32>
    %662 = vector.broadcast %659 : f32 to vector<2x256xf32>
    %663 = arith.mulf %662, %661 : vector<2x256xf32>
    %664 = arith.addf %585, %663 : vector<2x256xf32>
    %c123 = arith.constant 123 : index
    %665 = memref.load %arg1[%c123] : memref<144xf32, #tpu.memory_space<smem>>
    %666 = vector.extract_strided_slice %586 {offsets = [1, 0, 0], sizes = [1, 2, 256], strides = [1, 1, 1]} : vector<4x2x256xf32> to vector<1x2x256xf32>
    %667 = vector.shape_cast %666 : vector<1x2x256xf32> to vector<2x256xf32>
    %668 = vector.broadcast %665 : f32 to vector<2x256xf32>
    %669 = arith.mulf %668, %667 : vector<2x256xf32>
    %670 = arith.addf %664, %669 : vector<2x256xf32>
    %c132 = arith.constant 132 : index
    %671 = memref.load %arg1[%c132] : memref<144xf32, #tpu.memory_space<smem>>
    %672 = vector.extract_strided_slice %586 {offsets = [2, 0, 0], sizes = [1, 2, 256], strides = [1, 1, 1]} : vector<4x2x256xf32> to vector<1x2x256xf32>
    %673 = vector.shape_cast %672 : vector<1x2x256xf32> to vector<2x256xf32>
    %674 = vector.broadcast %671 : f32 to vector<2x256xf32>
    %675 = arith.mulf %674, %673 : vector<2x256xf32>
    %676 = arith.addf %670, %675 : vector<2x256xf32>
    %c141 = arith.constant 141 : index
    %677 = memref.load %arg1[%c141] : memref<144xf32, #tpu.memory_space<smem>>
    %678 = vector.extract_strided_slice %586 {offsets = [3, 0, 0], sizes = [1, 2, 256], strides = [1, 1, 1]} : vector<4x2x256xf32> to vector<1x2x256xf32>
    %679 = vector.shape_cast %678 : vector<1x2x256xf32> to vector<2x256xf32>
    %680 = vector.broadcast %677 : f32 to vector<2x256xf32>
    %681 = arith.mulf %680, %679 : vector<2x256xf32>
    %682 = arith.addf %676, %681 : vector<2x256xf32>
    %c223_i32 = arith.constant 223 : i32
    %683 = tpu.dynamic_rotate %0 by %c223_i32 dim 2 : vector<4x2x256xf32>, i32 -> vector<4x2x256xf32>
    %c7 = arith.constant 7 : index
    %684 = memref.load %arg1[%c7] : memref<144xf32, #tpu.memory_space<smem>>
    %685 = vector.extract_strided_slice %683 {offsets = [0, 0, 0], sizes = [1, 2, 256], strides = [1, 1, 1]} : vector<4x2x256xf32> to vector<1x2x256xf32>
    %686 = vector.shape_cast %685 : vector<1x2x256xf32> to vector<2x256xf32>
    %687 = vector.broadcast %684 : f32 to vector<2x256xf32>
    %688 = arith.mulf %687, %686 : vector<2x256xf32>
    %689 = arith.addf %610, %688 : vector<2x256xf32>
    %c16 = arith.constant 16 : index
    %690 = memref.load %arg1[%c16] : memref<144xf32, #tpu.memory_space<smem>>
    %691 = vector.extract_strided_slice %683 {offsets = [1, 0, 0], sizes = [1, 2, 256], strides = [1, 1, 1]} : vector<4x2x256xf32> to vector<1x2x256xf32>
    %692 = vector.shape_cast %691 : vector<1x2x256xf32> to vector<2x256xf32>
    %693 = vector.broadcast %690 : f32 to vector<2x256xf32>
    %694 = arith.mulf %693, %692 : vector<2x256xf32>
    %695 = arith.addf %689, %694 : vector<2x256xf32>
    %c25 = arith.constant 25 : index
    %696 = memref.load %arg1[%c25] : memref<144xf32, #tpu.memory_space<smem>>
    %697 = vector.extract_strided_slice %683 {offsets = [2, 0, 0], sizes = [1, 2, 256], strides = [1, 1, 1]} : vector<4x2x256xf32> to vector<1x2x256xf32>
    %698 = vector.shape_cast %697 : vector<1x2x256xf32> to vector<2x256xf32>
    %699 = vector.broadcast %696 : f32 to vector<2x256xf32>
    %700 = arith.mulf %699, %698 : vector<2x256xf32>
    %701 = arith.addf %695, %700 : vector<2x256xf32>
    %c34 = arith.constant 34 : index
    %702 = memref.load %arg1[%c34] : memref<144xf32, #tpu.memory_space<smem>>
    %703 = vector.extract_strided_slice %683 {offsets = [3, 0, 0], sizes = [1, 2, 256], strides = [1, 1, 1]} : vector<4x2x256xf32> to vector<1x2x256xf32>
    %704 = vector.shape_cast %703 : vector<1x2x256xf32> to vector<2x256xf32>
    %705 = vector.broadcast %702 : f32 to vector<2x256xf32>
    %706 = arith.mulf %705, %704 : vector<2x256xf32>
    %707 = arith.addf %701, %706 : vector<2x256xf32>
    %c43 = arith.constant 43 : index
    %708 = memref.load %arg1[%c43] : memref<144xf32, #tpu.memory_space<smem>>
    %709 = vector.extract_strided_slice %683 {offsets = [0, 0, 0], sizes = [1, 2, 256], strides = [1, 1, 1]} : vector<4x2x256xf32> to vector<1x2x256xf32>
    %710 = vector.shape_cast %709 : vector<1x2x256xf32> to vector<2x256xf32>
    %711 = vector.broadcast %708 : f32 to vector<2x256xf32>
    %712 = arith.mulf %711, %710 : vector<2x256xf32>
    %713 = arith.addf %634, %712 : vector<2x256xf32>
    %c52 = arith.constant 52 : index
    %714 = memref.load %arg1[%c52] : memref<144xf32, #tpu.memory_space<smem>>
    %715 = vector.extract_strided_slice %683 {offsets = [1, 0, 0], sizes = [1, 2, 256], strides = [1, 1, 1]} : vector<4x2x256xf32> to vector<1x2x256xf32>
    %716 = vector.shape_cast %715 : vector<1x2x256xf32> to vector<2x256xf32>
    %717 = vector.broadcast %714 : f32 to vector<2x256xf32>
    %718 = arith.mulf %717, %716 : vector<2x256xf32>
    %719 = arith.addf %713, %718 : vector<2x256xf32>
    %c61 = arith.constant 61 : index
    %720 = memref.load %arg1[%c61] : memref<144xf32, #tpu.memory_space<smem>>
    %721 = vector.extract_strided_slice %683 {offsets = [2, 0, 0], sizes = [1, 2, 256], strides = [1, 1, 1]} : vector<4x2x256xf32> to vector<1x2x256xf32>
    %722 = vector.shape_cast %721 : vector<1x2x256xf32> to vector<2x256xf32>
    %723 = vector.broadcast %720 : f32 to vector<2x256xf32>
    %724 = arith.mulf %723, %722 : vector<2x256xf32>
    %725 = arith.addf %719, %724 : vector<2x256xf32>
    %c70 = arith.constant 70 : index
    %726 = memref.load %arg1[%c70] : memref<144xf32, #tpu.memory_space<smem>>
    %727 = vector.extract_strided_slice %683 {offsets = [3, 0, 0], sizes = [1, 2, 256], strides = [1, 1, 1]} : vector<4x2x256xf32> to vector<1x2x256xf32>
    %728 = vector.shape_cast %727 : vector<1x2x256xf32> to vector<2x256xf32>
    %729 = vector.broadcast %726 : f32 to vector<2x256xf32>
    %730 = arith.mulf %729, %728 : vector<2x256xf32>
    %731 = arith.addf %725, %730 : vector<2x256xf32>
    %c79 = arith.constant 79 : index
    %732 = memref.load %arg1[%c79] : memref<144xf32, #tpu.memory_space<smem>>
    %733 = vector.extract_strided_slice %683 {offsets = [0, 0, 0], sizes = [1, 2, 256], strides = [1, 1, 1]} : vector<4x2x256xf32> to vector<1x2x256xf32>
    %734 = vector.shape_cast %733 : vector<1x2x256xf32> to vector<2x256xf32>
    %735 = vector.broadcast %732 : f32 to vector<2x256xf32>
    %736 = arith.mulf %735, %734 : vector<2x256xf32>
    %737 = arith.addf %658, %736 : vector<2x256xf32>
    %c88 = arith.constant 88 : index
    %738 = memref.load %arg1[%c88] : memref<144xf32, #tpu.memory_space<smem>>
    %739 = vector.extract_strided_slice %683 {offsets = [1, 0, 0], sizes = [1, 2, 256], strides = [1, 1, 1]} : vector<4x2x256xf32> to vector<1x2x256xf32>
    %740 = vector.shape_cast %739 : vector<1x2x256xf32> to vector<2x256xf32>
    %741 = vector.broadcast %738 : f32 to vector<2x256xf32>
    %742 = arith.mulf %741, %740 : vector<2x256xf32>
    %743 = arith.addf %737, %742 : vector<2x256xf32>
    %c97 = arith.constant 97 : index
    %744 = memref.load %arg1[%c97] : memref<144xf32, #tpu.memory_space<smem>>
    %745 = vector.extract_strided_slice %683 {offsets = [2, 0, 0], sizes = [1, 2, 256], strides = [1, 1, 1]} : vector<4x2x256xf32> to vector<1x2x256xf32>
    %746 = vector.shape_cast %745 : vector<1x2x256xf32> to vector<2x256xf32>
    %747 = vector.broadcast %744 : f32 to vector<2x256xf32>
    %748 = arith.mulf %747, %746 : vector<2x256xf32>
    %749 = arith.addf %743, %748 : vector<2x256xf32>
    %c106 = arith.constant 106 : index
    %750 = memref.load %arg1[%c106] : memref<144xf32, #tpu.memory_space<smem>>
    %751 = vector.extract_strided_slice %683 {offsets = [3, 0, 0], sizes = [1, 2, 256], strides = [1, 1, 1]} : vector<4x2x256xf32> to vector<1x2x256xf32>
    %752 = vector.shape_cast %751 : vector<1x2x256xf32> to vector<2x256xf32>
    %753 = vector.broadcast %750 : f32 to vector<2x256xf32>
    %754 = arith.mulf %753, %752 : vector<2x256xf32>
    %755 = arith.addf %749, %754 : vector<2x256xf32>
    %c115 = arith.constant 115 : index
    %756 = memref.load %arg1[%c115] : memref<144xf32, #tpu.memory_space<smem>>
    %757 = vector.extract_strided_slice %683 {offsets = [0, 0, 0], sizes = [1, 2, 256], strides = [1, 1, 1]} : vector<4x2x256xf32> to vector<1x2x256xf32>
    %758 = vector.shape_cast %757 : vector<1x2x256xf32> to vector<2x256xf32>
    %759 = vector.broadcast %756 : f32 to vector<2x256xf32>
    %760 = arith.mulf %759, %758 : vector<2x256xf32>
    %761 = arith.addf %682, %760 : vector<2x256xf32>
    %c124 = arith.constant 124 : index
    %762 = memref.load %arg1[%c124] : memref<144xf32, #tpu.memory_space<smem>>
    %763 = vector.extract_strided_slice %683 {offsets = [1, 0, 0], sizes = [1, 2, 256], strides = [1, 1, 1]} : vector<4x2x256xf32> to vector<1x2x256xf32>
    %764 = vector.shape_cast %763 : vector<1x2x256xf32> to vector<2x256xf32>
    %765 = vector.broadcast %762 : f32 to vector<2x256xf32>
    %766 = arith.mulf %765, %764 : vector<2x256xf32>
    %767 = arith.addf %761, %766 : vector<2x256xf32>
    %c133 = arith.constant 133 : index
    %768 = memref.load %arg1[%c133] : memref<144xf32, #tpu.memory_space<smem>>
    %769 = vector.extract_strided_slice %683 {offsets = [2, 0, 0], sizes = [1, 2, 256], strides = [1, 1, 1]} : vector<4x2x256xf32> to vector<1x2x256xf32>
    %770 = vector.shape_cast %769 : vector<1x2x256xf32> to vector<2x256xf32>
    %771 = vector.broadcast %768 : f32 to vector<2x256xf32>
    %772 = arith.mulf %771, %770 : vector<2x256xf32>
    %773 = arith.addf %767, %772 : vector<2x256xf32>
    %c142 = arith.constant 142 : index
    %774 = memref.load %arg1[%c142] : memref<144xf32, #tpu.memory_space<smem>>
    %775 = vector.extract_strided_slice %683 {offsets = [3, 0, 0], sizes = [1, 2, 256], strides = [1, 1, 1]} : vector<4x2x256xf32> to vector<1x2x256xf32>
    %776 = vector.shape_cast %775 : vector<1x2x256xf32> to vector<2x256xf32>
    %777 = vector.broadcast %774 : f32 to vector<2x256xf32>
    %778 = arith.mulf %777, %776 : vector<2x256xf32>
    %779 = arith.addf %773, %778 : vector<2x256xf32>
    %c222_i32 = arith.constant 222 : i32
    %780 = tpu.dynamic_rotate %0 by %c222_i32 dim 2 : vector<4x2x256xf32>, i32 -> vector<4x2x256xf32>
    %c8 = arith.constant 8 : index
    %781 = memref.load %arg1[%c8] : memref<144xf32, #tpu.memory_space<smem>>
    %782 = vector.extract_strided_slice %780 {offsets = [0, 0, 0], sizes = [1, 2, 256], strides = [1, 1, 1]} : vector<4x2x256xf32> to vector<1x2x256xf32>
    %783 = vector.shape_cast %782 : vector<1x2x256xf32> to vector<2x256xf32>
    %784 = vector.broadcast %781 : f32 to vector<2x256xf32>
    %785 = arith.mulf %784, %783 : vector<2x256xf32>
    %786 = arith.addf %707, %785 : vector<2x256xf32>
    %c17 = arith.constant 17 : index
    %787 = memref.load %arg1[%c17] : memref<144xf32, #tpu.memory_space<smem>>
    %788 = vector.extract_strided_slice %780 {offsets = [1, 0, 0], sizes = [1, 2, 256], strides = [1, 1, 1]} : vector<4x2x256xf32> to vector<1x2x256xf32>
    %789 = vector.shape_cast %788 : vector<1x2x256xf32> to vector<2x256xf32>
    %790 = vector.broadcast %787 : f32 to vector<2x256xf32>
    %791 = arith.mulf %790, %789 : vector<2x256xf32>
    %792 = arith.addf %786, %791 : vector<2x256xf32>
    %c26 = arith.constant 26 : index
    %793 = memref.load %arg1[%c26] : memref<144xf32, #tpu.memory_space<smem>>
    %794 = vector.extract_strided_slice %780 {offsets = [2, 0, 0], sizes = [1, 2, 256], strides = [1, 1, 1]} : vector<4x2x256xf32> to vector<1x2x256xf32>
    %795 = vector.shape_cast %794 : vector<1x2x256xf32> to vector<2x256xf32>
    %796 = vector.broadcast %793 : f32 to vector<2x256xf32>
    %797 = arith.mulf %796, %795 : vector<2x256xf32>
    %798 = arith.addf %792, %797 : vector<2x256xf32>
    %c35 = arith.constant 35 : index
    %799 = memref.load %arg1[%c35] : memref<144xf32, #tpu.memory_space<smem>>
    %800 = vector.extract_strided_slice %780 {offsets = [3, 0, 0], sizes = [1, 2, 256], strides = [1, 1, 1]} : vector<4x2x256xf32> to vector<1x2x256xf32>
    %801 = vector.shape_cast %800 : vector<1x2x256xf32> to vector<2x256xf32>
    %802 = vector.broadcast %799 : f32 to vector<2x256xf32>
    %803 = arith.mulf %802, %801 : vector<2x256xf32>
    %804 = arith.addf %798, %803 : vector<2x256xf32>
    %c44 = arith.constant 44 : index
    %805 = memref.load %arg1[%c44] : memref<144xf32, #tpu.memory_space<smem>>
    %806 = vector.extract_strided_slice %780 {offsets = [0, 0, 0], sizes = [1, 2, 256], strides = [1, 1, 1]} : vector<4x2x256xf32> to vector<1x2x256xf32>
    %807 = vector.shape_cast %806 : vector<1x2x256xf32> to vector<2x256xf32>
    %808 = vector.broadcast %805 : f32 to vector<2x256xf32>
    %809 = arith.mulf %808, %807 : vector<2x256xf32>
    %810 = arith.addf %731, %809 : vector<2x256xf32>
    %c53 = arith.constant 53 : index
    %811 = memref.load %arg1[%c53] : memref<144xf32, #tpu.memory_space<smem>>
    %812 = vector.extract_strided_slice %780 {offsets = [1, 0, 0], sizes = [1, 2, 256], strides = [1, 1, 1]} : vector<4x2x256xf32> to vector<1x2x256xf32>
    %813 = vector.shape_cast %812 : vector<1x2x256xf32> to vector<2x256xf32>
    %814 = vector.broadcast %811 : f32 to vector<2x256xf32>
    %815 = arith.mulf %814, %813 : vector<2x256xf32>
    %816 = arith.addf %810, %815 : vector<2x256xf32>
    %c62 = arith.constant 62 : index
    %817 = memref.load %arg1[%c62] : memref<144xf32, #tpu.memory_space<smem>>
    %818 = vector.extract_strided_slice %780 {offsets = [2, 0, 0], sizes = [1, 2, 256], strides = [1, 1, 1]} : vector<4x2x256xf32> to vector<1x2x256xf32>
    %819 = vector.shape_cast %818 : vector<1x2x256xf32> to vector<2x256xf32>
    %820 = vector.broadcast %817 : f32 to vector<2x256xf32>
    %821 = arith.mulf %820, %819 : vector<2x256xf32>
    %822 = arith.addf %816, %821 : vector<2x256xf32>
    %c71 = arith.constant 71 : index
    %823 = memref.load %arg1[%c71] : memref<144xf32, #tpu.memory_space<smem>>
    %824 = vector.extract_strided_slice %780 {offsets = [3, 0, 0], sizes = [1, 2, 256], strides = [1, 1, 1]} : vector<4x2x256xf32> to vector<1x2x256xf32>
    %825 = vector.shape_cast %824 : vector<1x2x256xf32> to vector<2x256xf32>
    %826 = vector.broadcast %823 : f32 to vector<2x256xf32>
    %827 = arith.mulf %826, %825 : vector<2x256xf32>
    %828 = arith.addf %822, %827 : vector<2x256xf32>
    %c80 = arith.constant 80 : index
    %829 = memref.load %arg1[%c80] : memref<144xf32, #tpu.memory_space<smem>>
    %830 = vector.extract_strided_slice %780 {offsets = [0, 0, 0], sizes = [1, 2, 256], strides = [1, 1, 1]} : vector<4x2x256xf32> to vector<1x2x256xf32>
    %831 = vector.shape_cast %830 : vector<1x2x256xf32> to vector<2x256xf32>
    %832 = vector.broadcast %829 : f32 to vector<2x256xf32>
    %833 = arith.mulf %832, %831 : vector<2x256xf32>
    %834 = arith.addf %755, %833 : vector<2x256xf32>
    %c89 = arith.constant 89 : index
    %835 = memref.load %arg1[%c89] : memref<144xf32, #tpu.memory_space<smem>>
    %836 = vector.extract_strided_slice %780 {offsets = [1, 0, 0], sizes = [1, 2, 256], strides = [1, 1, 1]} : vector<4x2x256xf32> to vector<1x2x256xf32>
    %837 = vector.shape_cast %836 : vector<1x2x256xf32> to vector<2x256xf32>
    %838 = vector.broadcast %835 : f32 to vector<2x256xf32>
    %839 = arith.mulf %838, %837 : vector<2x256xf32>
    %840 = arith.addf %834, %839 : vector<2x256xf32>
    %c98 = arith.constant 98 : index
    %841 = memref.load %arg1[%c98] : memref<144xf32, #tpu.memory_space<smem>>
    %842 = vector.extract_strided_slice %780 {offsets = [2, 0, 0], sizes = [1, 2, 256], strides = [1, 1, 1]} : vector<4x2x256xf32> to vector<1x2x256xf32>
    %843 = vector.shape_cast %842 : vector<1x2x256xf32> to vector<2x256xf32>
    %844 = vector.broadcast %841 : f32 to vector<2x256xf32>
    %845 = arith.mulf %844, %843 : vector<2x256xf32>
    %846 = arith.addf %840, %845 : vector<2x256xf32>
    %c107 = arith.constant 107 : index
    %847 = memref.load %arg1[%c107] : memref<144xf32, #tpu.memory_space<smem>>
    %848 = vector.extract_strided_slice %780 {offsets = [3, 0, 0], sizes = [1, 2, 256], strides = [1, 1, 1]} : vector<4x2x256xf32> to vector<1x2x256xf32>
    %849 = vector.shape_cast %848 : vector<1x2x256xf32> to vector<2x256xf32>
    %850 = vector.broadcast %847 : f32 to vector<2x256xf32>
    %851 = arith.mulf %850, %849 : vector<2x256xf32>
    %852 = arith.addf %846, %851 : vector<2x256xf32>
    %c116 = arith.constant 116 : index
    %853 = memref.load %arg1[%c116] : memref<144xf32, #tpu.memory_space<smem>>
    %854 = vector.extract_strided_slice %780 {offsets = [0, 0, 0], sizes = [1, 2, 256], strides = [1, 1, 1]} : vector<4x2x256xf32> to vector<1x2x256xf32>
    %855 = vector.shape_cast %854 : vector<1x2x256xf32> to vector<2x256xf32>
    %856 = vector.broadcast %853 : f32 to vector<2x256xf32>
    %857 = arith.mulf %856, %855 : vector<2x256xf32>
    %858 = arith.addf %779, %857 : vector<2x256xf32>
    %c125 = arith.constant 125 : index
    %859 = memref.load %arg1[%c125] : memref<144xf32, #tpu.memory_space<smem>>
    %860 = vector.extract_strided_slice %780 {offsets = [1, 0, 0], sizes = [1, 2, 256], strides = [1, 1, 1]} : vector<4x2x256xf32> to vector<1x2x256xf32>
    %861 = vector.shape_cast %860 : vector<1x2x256xf32> to vector<2x256xf32>
    %862 = vector.broadcast %859 : f32 to vector<2x256xf32>
    %863 = arith.mulf %862, %861 : vector<2x256xf32>
    %864 = arith.addf %858, %863 : vector<2x256xf32>
    %c134 = arith.constant 134 : index
    %865 = memref.load %arg1[%c134] : memref<144xf32, #tpu.memory_space<smem>>
    %866 = vector.extract_strided_slice %780 {offsets = [2, 0, 0], sizes = [1, 2, 256], strides = [1, 1, 1]} : vector<4x2x256xf32> to vector<1x2x256xf32>
    %867 = vector.shape_cast %866 : vector<1x2x256xf32> to vector<2x256xf32>
    %868 = vector.broadcast %865 : f32 to vector<2x256xf32>
    %869 = arith.mulf %868, %867 : vector<2x256xf32>
    %870 = arith.addf %864, %869 : vector<2x256xf32>
    %c143 = arith.constant 143 : index
    %871 = memref.load %arg1[%c143] : memref<144xf32, #tpu.memory_space<smem>>
    %872 = vector.extract_strided_slice %780 {offsets = [3, 0, 0], sizes = [1, 2, 256], strides = [1, 1, 1]} : vector<4x2x256xf32> to vector<1x2x256xf32>
    %873 = vector.shape_cast %872 : vector<1x2x256xf32> to vector<2x256xf32>
    %874 = vector.broadcast %871 : f32 to vector<2x256xf32>
    %875 = arith.mulf %874, %873 : vector<2x256xf32>
    %876 = arith.addf %870, %875 : vector<2x256xf32>
    %c0_6 = arith.constant 0 : index
    %877 = memref.load %arg2[%c0_6] : memref<4xf32, #tpu.memory_space<smem>>
    %878 = vector.broadcast %877 : f32 to vector<2x256xf32>
    %879 = arith.addf %804, %878 : vector<2x256xf32>
    %880 = math.tanh %879 : vector<2x256xf32>
    %c0_7 = arith.constant 0 : index
    %881 = memref.load %arg3[%c0_7] : memref<4xf32, #tpu.memory_space<smem>>
    %882 = vector.broadcast %881 : f32 to vector<2x256xf32>
    %883 = arith.mulf %880, %882 : vector<2x256xf32>
    %884 = vector.extract_strided_slice %392 {offsets = [0, 0, 0], sizes = [1, 2, 256], strides = [1, 1, 1]} : vector<4x2x256xf32> to vector<1x2x256xf32>
    %885 = vector.shape_cast %884 : vector<1x2x256xf32> to vector<2x256xf32>
    %886 = arith.addf %885, %883 : vector<2x256xf32>
    %c0_8 = arith.constant 0 : index
    %c0_9 = arith.constant 0 : index
    %c0_10 = arith.constant 0 : index
    %887 = vector.load %arg5[%c0_8, %c0_9, %c0_10] : memref<4x2x256xf32, #tpu.memory_space<vmem>>, vector<1x2x256xf32>
    %888 = vector.shape_cast %887 : vector<1x2x256xf32> to vector<2x256xf32>
    %889 = vector.shape_cast %886 : vector<2x256xf32> to vector<1x2x256xf32>
    tpu.vector_store %arg5[%c0_8, %c0_9, %c0_10], %889 {strides = array<i32>} : memref<4x2x256xf32, #tpu.memory_space<vmem>>, vector<1x2x256xf32>,
    %c1_11 = arith.constant 1 : index
    %890 = memref.load %arg2[%c1_11] : memref<4xf32, #tpu.memory_space<smem>>
    %891 = vector.broadcast %890 : f32 to vector<2x256xf32>
    %892 = arith.addf %828, %891 : vector<2x256xf32>
    %893 = math.tanh %892 : vector<2x256xf32>
    %c1_12 = arith.constant 1 : index
    %894 = memref.load %arg3[%c1_12] : memref<4xf32, #tpu.memory_space<smem>>
    %895 = vector.broadcast %894 : f32 to vector<2x256xf32>
    %896 = arith.mulf %893, %895 : vector<2x256xf32>
    %897 = vector.extract_strided_slice %392 {offsets = [1, 0, 0], sizes = [1, 2, 256], strides = [1, 1, 1]} : vector<4x2x256xf32> to vector<1x2x256xf32>
    %898 = vector.shape_cast %897 : vector<1x2x256xf32> to vector<2x256xf32>
    %899 = arith.addf %898, %896 : vector<2x256xf32>
    %c1_13 = arith.constant 1 : index
    %c0_14 = arith.constant 0 : index
    %c0_15 = arith.constant 0 : index
    %900 = vector.load %arg5[%c1_13, %c0_14, %c0_15] : memref<4x2x256xf32, #tpu.memory_space<vmem>>, vector<1x2x256xf32>
    %901 = vector.shape_cast %900 : vector<1x2x256xf32> to vector<2x256xf32>
    %902 = vector.shape_cast %899 : vector<2x256xf32> to vector<1x2x256xf32>
    tpu.vector_store %arg5[%c1_13, %c0_14, %c0_15], %902 {strides = array<i32>} : memref<4x2x256xf32, #tpu.memory_space<vmem>>, vector<1x2x256xf32>,
    %c2_16 = arith.constant 2 : index
    %903 = memref.load %arg2[%c2_16] : memref<4xf32, #tpu.memory_space<smem>>
    %904 = vector.broadcast %903 : f32 to vector<2x256xf32>
    %905 = arith.addf %852, %904 : vector<2x256xf32>
    %906 = math.tanh %905 : vector<2x256xf32>
    %c2_17 = arith.constant 2 : index
    %907 = memref.load %arg3[%c2_17] : memref<4xf32, #tpu.memory_space<smem>>
    %908 = vector.broadcast %907 : f32 to vector<2x256xf32>
    %909 = arith.mulf %906, %908 : vector<2x256xf32>
    %910 = vector.extract_strided_slice %392 {offsets = [2, 0, 0], sizes = [1, 2, 256], strides = [1, 1, 1]} : vector<4x2x256xf32> to vector<1x2x256xf32>
    %911 = vector.shape_cast %910 : vector<1x2x256xf32> to vector<2x256xf32>
    %912 = arith.addf %911, %909 : vector<2x256xf32>
    %c2_18 = arith.constant 2 : index
    %c0_19 = arith.constant 0 : index
    %c0_20 = arith.constant 0 : index
    %913 = vector.load %arg5[%c2_18, %c0_19, %c0_20] : memref<4x2x256xf32, #tpu.memory_space<vmem>>, vector<1x2x256xf32>
    %914 = vector.shape_cast %913 : vector<1x2x256xf32> to vector<2x256xf32>
    %915 = vector.shape_cast %912 : vector<2x256xf32> to vector<1x2x256xf32>
    tpu.vector_store %arg5[%c2_18, %c0_19, %c0_20], %915 {strides = array<i32>} : memref<4x2x256xf32, #tpu.memory_space<vmem>>, vector<1x2x256xf32>,
    %c3_21 = arith.constant 3 : index
    %916 = memref.load %arg2[%c3_21] : memref<4xf32, #tpu.memory_space<smem>>
    %917 = vector.broadcast %916 : f32 to vector<2x256xf32>
    %918 = arith.addf %876, %917 : vector<2x256xf32>
    %919 = math.tanh %918 : vector<2x256xf32>
    %c3_22 = arith.constant 3 : index
    %920 = memref.load %arg3[%c3_22] : memref<4xf32, #tpu.memory_space<smem>>
    %921 = vector.broadcast %920 : f32 to vector<2x256xf32>
    %922 = arith.mulf %919, %921 : vector<2x256xf32>
    %923 = vector.extract_strided_slice %392 {offsets = [3, 0, 0], sizes = [1, 2, 256], strides = [1, 1, 1]} : vector<4x2x256xf32> to vector<1x2x256xf32>
    %924 = vector.shape_cast %923 : vector<1x2x256xf32> to vector<2x256xf32>
    %925 = arith.addf %924, %922 : vector<2x256xf32>
    %c3_23 = arith.constant 3 : index
    %c0_24 = arith.constant 0 : index
    %c0_25 = arith.constant 0 : index
    %926 = vector.load %arg5[%c3_23, %c0_24, %c0_25] : memref<4x2x256xf32, #tpu.memory_space<vmem>>, vector<1x2x256xf32>
    %927 = vector.shape_cast %926 : vector<1x2x256xf32> to vector<2x256xf32>
    %928 = vector.shape_cast %925 : vector<2x256xf32> to vector<1x2x256xf32>
    tpu.vector_store %arg5[%c3_23, %c0_24, %c0_25], %928 {strides = array<i32>} : memref<4x2x256xf32, #tpu.memory_space<vmem>>, vector<1x2x256xf32>,
    return
  }
  func.func @transform_0(%arg0: i32) -> i32 {
    %c0_i32 = arith.constant 0 : i32
    %c0_i32_0 = arith.constant 0 : i32
    return %c0_i32 : i32
  }
  func.func @transform_1(%arg0: i32) -> i32 {
    %c0_i32 = arith.constant 0 : i32
    %c0_i32_0 = arith.constant 0 : i32
    return %c0_i32 : i32
  }
  func.func @transform_2(%arg0: i32) -> i32 {
    %c0_i32 = arith.constant 0 : i32
    %c0_i32_0 = arith.constant 0 : i32
    return %c0_i32 : i32
  }
  func.func @transform_3(%arg0: i32) -> (i32, i32, i32) {
    %c0_i32 = arith.constant 0 : i32
    %c0_i32_0 = arith.constant 0 : i32
    %c0_i32_1 = arith.constant 0 : i32
    return %c0_i32, %arg0, %c0_i32_0 : i32, i32, i32
  }
  func.func @transform_4(%arg0: i32) -> (i32, i32, i32) {
    %c0_i32 = arith.constant 0 : i32
    %c0_i32_0 = arith.constant 0 : i32
    %c0_i32_1 = arith.constant 0 : i32
    return %c0_i32, %arg0, %c0_i32_0 : i32, i32, i32
  }
}

</mosaic_0001>

<llo_original>
// kernel: tpu_custom_call.1
$region0: #{tpu_custom_call.1}
  #allocation0 [shape = 'u32[]', space=smem, size = 0x4, offset = 0x4, fixed_abs, tag = 'smem constant byte address 0x4 - core index']
  #allocation1 [shape = 'u32[144,128]{1,0:T(1,128)}', space=vmem, size = 0x12000, scoped, tag = 'internal scratch']
  %s0 = inlined_call_operand.hbm [shape: f32[144], index: 0, kind: input, shape index: {}]
  %s1 = inlined_call_operand.vmem [shape: f32[4], index: 1, kind: input, shape index: {}]
  %s2 = inlined_call_operand.vmem [shape: f32[4], index: 2, kind: input, shape index: {}]
  %s3 = inlined_call_operand.hbm [shape: f32[4,2,256], index: 3, kind: input, shape index: {}]
  %s4 = inlined_call_operand.hbm [shape: f32[4,2,256], index: 4, kind: output, shape index: {}]
  %s5 = sld [smem:[#allocation0]]
  $region42: #{tpu_custom_call.1} parent=0
    _
  %s7 = ssub.s32 1, %s5
  %s8 = scalar_select 0, %s7, %s5
  $region1: #{tpu_custom_call.1} parent=0
    #allocation2 [shape = 'u8[1024]{0}', space=smem, size = 0x400, scoped, tag = 'input window, operand 0, single buffered']
    #allocation3 [shape = 's32[1]{0}', space=sflag, size = 0x4, scoped, tag = 'scoped memory for tpu_custom_call.1']
    #allocation4 [shape = 's32[1]{0}', space=sflag, size = 0x4, scoped, tag = 'scoped memory for tpu_custom_call.1']
    #allocation5 [shape = 's32[1]{0}', space=sflag, size = 0x4, scoped, tag = 'scoped memory for tpu_custom_call.1']
    #allocation6 [shape = 's32[1]{0}', space=sflag, size = 0x4, scoped, tag = 'scoped memory for tpu_custom_call.1']
    #allocation7 [shape = 'u8[512]{0}', space=smem, size = 0x200, scoped, tag = 'input window, operand 1, single buffered']
    #allocation8 [shape = 'u8[512]{0}', space=smem, size = 0x200, scoped, tag = 'input window, operand 2, single buffered']
    #allocation9 [shape = 's32[1]{0}', space=sflag, size = 0x4, scoped, tag = 'scoped memory for tpu_custom_call.1']
    #allocation10 [shape = 'u8[8192]{0}', space=vmem, size = 0x2000, scoped, tag = 'input window, operand 3, single buffered']
    #allocation11 [shape = 'u8[8192]{0}', space=vmem, size = 0x2000, scoped, tag = 'output window, operand 0, single buffered']
    %9 = vsyncpa [#allocation5], 0
    %10 = vsyncpa [#allocation6], 0
    %11 = vsyncpa [#allocation9], 0
    %12 = vsyncpa [#allocation3], 0
    %13 = vsyncpa [#allocation4], 0
    // Predicated region
    $region2: #{tpu_custom_call.1} parent=1 // pred_check
      _
    $region3: #{tpu_custom_call.1} parent=1 // pred_check_branch
      %15 = sbr.rel (0) target = $region5
    $region4: #{tpu_custom_call.1} parent=1 // pred_region
      %s17 = ssub.s32 32, 32
      %18 = vsyncadd [#allocation5], %s17
      %21 = dma.hbm_to_smem %s0, 32, [#allocation2], [#allocation5]
    $region5: #{tpu_custom_call.1} parent=1 // pred_fallthru
      _
    // Predicated region
    $region6: #{tpu_custom_call.1} parent=1 // pred_check
      _
    $region7: #{tpu_custom_call.1} parent=1 // pred_check_branch
      %23 = sbr.rel (0) target = $region9
    $region8: #{tpu_custom_call.1} parent=1 // pred_region
      %s25 = ssub.s32 16, 16
      %26 = vsyncadd [#allocation6], %s25
      %s28 = sshll.u32 %s1, 4
      %s29 = int_to_ptr.vmem [resolvable:$true] %s28
      %31 = dma.vmem_to_smem %s29, 16, [#allocation7], [#allocation6]
    $region9: #{tpu_custom_call.1} parent=1 // pred_fallthru
      _
    // Predicated region
    $region10: #{tpu_custom_call.1} parent=1 // pred_check
      _
    $region11: #{tpu_custom_call.1} parent=1 // pred_check_branch
      %33 = sbr.rel (0) target = $region13
    $region12: #{tpu_custom_call.1} parent=1 // pred_region
      %s35 = ssub.s32 16, 16
      %36 = vsyncadd [#allocation9], %s35
      %s38 = sshll.u32 %s2, 4
      %s39 = int_to_ptr.vmem [resolvable:$true] %s38
      %41 = dma.vmem_to_smem %s39, 16, [#allocation8], [#allocation9]
    $region13: #{tpu_custom_call.1} parent=1 // pred_fallthru
      _
    // Predicated region
    $region14: #{tpu_custom_call.1} parent=1 // pred_check
      _
    $region15: #{tpu_custom_call.1} parent=1 // pred_check_branch
      %43 = sbr.rel (0) target = $region17
    $region16: #{tpu_custom_call.1} parent=1 // pred_region
      %s45 = ssub.s32 256, 256
      %46 = vsyncadd [#allocation3], %s45
      %s47 = sshll.u32 [#allocation10], 4
      %s48 = int_to_ptr.vmem [resolvable:$true] %s47
      %53 = dma.hbm_to_vmem [thread:$0]  %s3, 256, %s48, [#allocation3], 64, 64, 4
    $region17: #{tpu_custom_call.1} parent=1 // pred_fallthru
      _
    // Predicated region
    $region18: #{tpu_custom_call.1} parent=1 // pred_check
      _
    $region19: #{tpu_custom_call.1} parent=1 // pred_check_branch
      %55 = sbr.rel (0) target = $region21
    $region20: #{tpu_custom_call.1} parent=1 // pred_region
      %56 = dma.done [#allocation5], 32
    $region21: #{tpu_custom_call.1} parent=1 // pred_fallthru
      _
    // Predicated region
    $region22: #{tpu_custom_call.1} parent=1 // pred_check
      _
    $region23: #{tpu_custom_call.1} parent=1 // pred_check_branch
      %58 = sbr.rel (0) target = $region25
    $region24: #{tpu_custom_call.1} parent=1 // pred_region
      %59 = dma.done [#allocation6], 16
    $region25: #{tpu_custom_call.1} parent=1 // pred_fallthru
      _
    // Predicated region
    $region26: #{tpu_custom_call.1} parent=1 // pred_check
      _
    $region27: #{tpu_custom_call.1} parent=1 // pred_check_branch
      %61 = sbr.rel (0) target = $region29
    $region28: #{tpu_custom_call.1} parent=1 // pred_region
      %62 = dma.done [#allocation9], 16
    $region29: #{tpu_custom_call.1} parent=1 // pred_fallthru
      _
    // Predicated region
    $region30: #{tpu_custom_call.1} parent=1 // pred_check
      _
    $region31: #{tpu_custom_call.1} parent=1 // pred_check_branch
      %64 = sbr.rel (0) target = $region33
    $region32: #{tpu_custom_call.1} parent=1 // pred_region
      %65 = dma.done [#allocation3], 256
    $region33: #{tpu_custom_call.1} parent=1 // pred_fallthru
      _
    %66 = sfence
    %v67 = vld [vmem:[#allocation10] sm:$0xf]
    %v68 = vld [vmem:[#allocation10 + $0x4] sm:$0xf]
    %v69 = vld [vmem:[#allocation10 + $0x8] sm:$0xf]
    %v70 = vld [vmem:[#allocation10 + $0xc] sm:$0xf]
    %s71 = sld [smem:[#allocation2]]
    %v72 = vstv %s71
    %v73 = vmul.f32 %v72, %v67
    %v74 = vadd.f32 %v73, 0.0
    %s75 = sld [smem:[#allocation2 + $0x9]]
    %v76 = vstv %s75
    %v77 = vmul.f32 %v76, %v68
    %v78 = vadd.f32 %v74, %v77
    %s79 = sld [smem:[#allocation2 + $0x12]]
    %v80 = vstv %s79
    %v81 = vmul.f32 %v80, %v69
    %v82 = vadd.f32 %v78, %v81
    %s83 = sld [smem:[#allocation2 + $0x1b]]
    %v84 = vstv %s83
    %v85 = vmul.f32 %v84, %v70
    %v86 = vadd.f32 %v82, %v85
    %s87 = sld [smem:[#allocation2 + $0x24]]
    %v88 = vstv %s87
    %v89 = vmul.f32 %v88, %v67
    %v90 = vadd.f32 %v89, 0.0
    %s91 = sld [smem:[#allocation2 + $0x2d]]
    %v92 = vstv %s91
    %v93 = vmul.f32 %v92, %v68
    %v94 = vadd.f32 %v90, %v93
    %s95 = sld [smem:[#allocation2 + $0x36]]
    %v96 = vstv %s95
    %v97 = vmul.f32 %v96, %v69
    %v98 = vadd.f32 %v94, %v97
    %s99 = sld [smem:[#allocation2 + $0x3f]]
    %v100 = vstv %s99
    %v101 = vmul.f32 %v100, %v70
    %v102 = vadd.f32 %v98, %v101
    %s103 = sld [smem:[#allocation2 + $0x48]]
    %v104 = vstv %s103
    %v105 = vmul.f32 %v104, %v67
    %v106 = vadd.f32 %v105, 0.0
    %s107 = sld [smem:[#allocation2 + $0x51]]
    %v108 = vstv %s107
    %v109 = vmul.f32 %v108, %v68
    %v110 = vadd.f32 %v106, %v109
    %s111 = sld [smem:[#allocation2 + $0x5a]]
    %v112 = vstv %s111
    %v113 = vmul.f32 %v112, %v69
    %v114 = vadd.f32 %v110, %v113
    %s115 = sld [smem:[#allocation2 + $0x63]]
    %v116 = vstv %s115
    %v117 = vmul.f32 %v116, %v70
    %v118 = vadd.f32 %v114, %v117
    %s119 = sld [smem:[#allocation2 + $0x6c]]
    %v120 = vstv %s119
    %v121 = vmul.f32 %v120, %v67
    %v122 = vadd.f32 %v121, 0.0
    %s123 = sld [smem:[#allocation2 + $0x75]]
    %v124 = vstv %s123
    %v125 = vmul.f32 %v124, %v68
    %v126 = vadd.f32 %v122, %v125
    %s127 = sld [smem:[#allocation2 + $0x7e]]
    %v128 = vstv %s127
    %v129 = vmul.f32 %v128, %v69
    %v130 = vadd.f32 %v126, %v129
    %s131 = sld [smem:[#allocation2 + $0x87]]
    %v132 = vstv %s131
    %v133 = vmul.f32 %v132, %v70
    %v134 = vadd.f32 %v130, %v133
    %v140 = vunpack.c.l.s4 1983009808
    %v141 = vunpack.c.0.s8 %v140
    %v142 = vlaneseq
    %v143 = vshrl.u32 %v142, 7
    %v144 = vsub.s32 %v141, %v143
    %v145 = vrot.slane %v67, %v144
    %v146 = vcombine.high %v145, %v145
    %v148 = vunpack.c.l.s4 1983009808
    %v149 = vunpack.c.0.s8 %v148
    %v150 = vlaneseq
    %v151 = vshrl.u32 %v150, 7
    %v152 = vsub.s32 %v149, %v151
    %v153 = vrot.slane %v68, %v152
    %v154 = vcombine.high %v153, %v153
    %v156 = vunpack.c.l.s4 1983009808
    %v157 = vunpack.c.0.s8 %v156
    %v158 = vlaneseq
    %v159 = vshrl.u32 %v158, 7
    %v160 = vsub.s32 %v157, %v159
    %v161 = vrot.slane %v69, %v160
    %v162 = vcombine.high %v161, %v161
    %v164 = vunpack.c.l.s4 1983009808
    %v165 = vunpack.c.0.s8 %v164
    %v166 = vlaneseq
    %v167 = vshrl.u32 %v166, 7
    %v168 = vsub.s32 %v165, %v167
    %v169 = vrot.slane %v70, %v168
    %v170 = vcombine.high %v169, %v169
    %179 = vrot.lane.b32.xlu0 %v145, 127
    %v180 = vpop.permute.xlu0 %179
    %181 = vrot.lane.b32.xlu0 %v153, 127
    %v182 = vpop.permute.xlu0 %181
    %183 = vrot.lane.b32.xlu0 %v161, 127
    %v184 = vpop.permute.xlu0 %183
    %185 = vrot.lane.b32.xlu0 %v169, 127
    %v186 = vpop.permute.xlu0 %185
    %187 = vrot.lane.b32.xlu0 %v146, 127
    %v188 = vpop.permute.xlu0 %187
    %189 = vrot.lane.b32.xlu0 %v154, 127
    %v190 = vpop.permute.xlu0 %189
    %191 = vrot.lane.b32.xlu0 %v162, 127
    %v192 = vpop.permute.xlu0 %191
    %193 = vrot.lane.b32.xlu0 %v170, 127
    %v194 = vpop.permute.xlu0 %193
    %v195 = vlaneseq
    %v196 = vand.u32 %v195, 127
    %vm197 = vcmp.lt.s32.totalorder %v196, 127
    %v198 = vsel %vm197, %v180, %v188
    %v199 = vsel %vm197, %v182, %v190
    %v200 = vsel %vm197, %v184, %v192
    %v201 = vsel %vm197, %v186, %v194
    %v202 = vsel %vm197, %v188, %v180
    %v203 = vsel %vm197, %v190, %v182
    %v204 = vsel %vm197, %v192, %v184
    %v205 = vsel %vm197, %v194, %v186
    %s206 = sld [smem:[#allocation2 + $0x1]]
    %v207 = vstv %s206
    %v208 = vmul.f32 %v207, %v198
    %v209 = vmul.f32 %v207, %v202
    %v212 = vcombine.low %v208, %v209
    %v214 = vunpack.c.l.s4 1983009808
    %v215 = vunpack.c.0.s8 %v214
    %v216 = vlaneseq
    %v217 = vshrl.u32 %v216, 7
    %v218 = vsub.s32 %v215, %v217
    %v219 = vrot.slane %v212, %v218
    %v221 = vadd.f32 %v86, %v219
    %s222 = sld [smem:[#allocation2 + $0xa]]
    %v223 = vstv %s222
    %v224 = vmul.f32 %v223, %v199
    %v225 = vmul.f32 %v223, %v203
    %v228 = vcombine.low %v224, %v225
    %v230 = vunpack.c.l.s4 1983009808
    %v231 = vunpack.c.0.s8 %v230
    %v232 = vlaneseq
    %v233 = vshrl.u32 %v232, 7
    %v234 = vsub.s32 %v231, %v233
    %v235 = vrot.slane %v228, %v234
    %v237 = vadd.f32 %v221, %v235
    %s238 = sld [smem:[#allocation2 + $0x13]]
    %v239 = vstv %s238
    %v240 = vmul.f32 %v239, %v200
    %v241 = vmul.f32 %v239, %v204
    %v244 = vcombine.low %v240, %v241
    %v246 = vunpack.c.l.s4 1983009808
    %v247 = vunpack.c.0.s8 %v246
    %v248 = vlaneseq
    %v249 = vshrl.u32 %v248, 7
    %v250 = vsub.s32 %v247, %v249
    %v251 = vrot.slane %v244, %v250
    %v253 = vadd.f32 %v237, %v251
    %s254 = sld [smem:[#allocation2 + $0x1c]]
    %v255 = vstv %s254
    %v256 = vmul.f32 %v255, %v201
    %v257 = vmul.f32 %v255, %v205
    %v260 = vcombine.low %v256, %v257
    %v262 = vunpack.c.l.s4 1983009808
    %v263 = vunpack.c.0.s8 %v262
    %v264 = vlaneseq
    %v265 = vshrl.u32 %v264, 7
    %v266 = vsub.s32 %v263, %v265
    %v267 = vrot.slane %v260, %v266
    %v269 = vadd.f32 %v253, %v267
    %s270 = sld [smem:[#allocation2 + $0x25]]
    %v271 = vstv %s270
    %v272 = vmul.f32 %v271, %v198
    %v273 = vmul.f32 %v271, %v202
    %v276 = vcombine.low %v272, %v273
    %v278 = vunpack.c.l.s4 1983009808
    %v279 = vunpack.c.0.s8 %v278
    %v280 = vlaneseq
    %v281 = vshrl.u32 %v280, 7
    %v282 = vsub.s32 %v279, %v281
    %v283 = vrot.slane %v276, %v282
    %v285 = vadd.f32 %v102, %v283
    %s286 = sld [smem:[#allocation2 + $0x2e]]
    %v287 = vstv %s286
    %v288 = vmul.f32 %v287, %v199
    %v289 = vmul.f32 %v287, %v203
    %v292 = vcombine.low %v288, %v289
    %v294 = vunpack.c.l.s4 1983009808
    %v295 = vunpack.c.0.s8 %v294
    %v296 = vlaneseq
    %v297 = vshrl.u32 %v296, 7
    %v298 = vsub.s32 %v295, %v297
    %v299 = vrot.slane %v292, %v298
    %v301 = vadd.f32 %v285, %v299
    %s302 = sld [smem:[#allocation2 + $0x37]]
    %v303 = vstv %s302
    %v304 = vmul.f32 %v303, %v200
    %v305 = vmul.f32 %v303, %v204
    %v308 = vcombine.low %v304, %v305
    %v310 = vunpack.c.l.s4 1983009808
    %v311 = vunpack.c.0.s8 %v310
    %v312 = vlaneseq
    %v313 = vshrl.u32 %v312, 7
    %v314 = vsub.s32 %v311, %v313
    %v315 = vrot.slane %v308, %v314
    %v317 = vadd.f32 %v301, %v315
    %s318 = sld [smem:[#allocation2 + $0x40]]
    %v319 = vstv %s318
    %v320 = vmul.f32 %v319, %v201
    %v321 = vmul.f32 %v319, %v205
    %v324 = vcombine.low %v320, %v321
    %v326 = vunpack.c.l.s4 1983009808
    %v327 = vunpack.c.0.s8 %v326
    %v328 = vlaneseq
    %v329 = vshrl.u32 %v328, 7
    %v330 = vsub.s32 %v327, %v329
    %v331 = vrot.slane %v324, %v330
    %v333 = vadd.f32 %v317, %v331
    %s334 = sld [smem:[#allocation2 + $0x49]]
    %v335 = vstv %s334
    %v336 = vmul.f32 %v335, %v198
    %v337 = vmul.f32 %v335, %v202
    %v340 = vcombine.low %v336, %v337
    %v342 = vunpack.c.l.s4 1983009808
    %v343 = vunpack.c.0.s8 %v342
    %v344 = vlaneseq
    %v345 = vshrl.u32 %v344, 7
    %v346 = vsub.s32 %v343, %v345
    %v347 = vrot.slane %v340, %v346
    %v349 = vadd.f32 %v118, %v347
    %s350 = sld [smem:[#allocation2 + $0x52]]
    %v351 = vstv %s350
    %v352 = vmul.f32 %v351, %v199
    %v353 = vmul.f32 %v351, %v203
    %v356 = vcombine.low %v352, %v353
    %v358 = vunpack.c.l.s4 1983009808
    %v359 = vunpack.c.0.s8 %v358
    %v360 = vlaneseq
    %v361 = vshrl.u32 %v360, 7
    %v362 = vsub.s32 %v359, %v361
    %v363 = vrot.slane %v356, %v362
    %v365 = vadd.f32 %v349, %v363
    %s366 = sld [smem:[#allocation2 + $0x5b]]
    %v367 = vstv %s366
    %v368 = vmul.f32 %v367, %v200
    %v369 = vmul.f32 %v367, %v204
    %v372 = vcombine.low %v368, %v369
    %v374 = vunpack.c.l.s4 1983009808
    %v375 = vunpack.c.0.s8 %v374
    %v376 = vlaneseq
    %v377 = vshrl.u32 %v376, 7
    %v378 = vsub.s32 %v375, %v377
    %v379 = vrot.slane %v372, %v378
    %v381 = vadd.f32 %v365, %v379
    %s382 = sld [smem:[#allocation2 + $0x64]]
    %v383 = vstv %s382
    %v384 = vmul.f32 %v383, %v201
    %v385 = vmul.f32 %v383, %v205
    %v388 = vcombine.low %v384, %v385
    %v390 = vunpack.c.l.s4 1983009808
    %v391 = vunpack.c.0.s8 %v390
    %v392 = vlaneseq
    %v393 = vshrl.u32 %v392, 7
    %v394 = vsub.s32 %v391, %v393
    %v395 = vrot.slane %v388, %v394
    %v397 = vadd.f32 %v381, %v395
    %s398 = sld [smem:[#allocation2 + $0x6d]]
    %v399 = vstv %s398
    %v400 = vmul.f32 %v399, %v198
    %v401 = vmul.f32 %v399, %v202
    %v404 = vcombine.low %v400, %v401
    %v406 = vunpack.c.l.s4 1983009808
    %v407 = vunpack.c.0.s8 %v406
    %v408 = vlaneseq
    %v409 = vshrl.u32 %v408, 7
    %v410 = vsub.s32 %v407, %v409
    %v411 = vrot.slane %v404, %v410
    %v413 = vadd.f32 %v134, %v411
    %s414 = sld [smem:[#allocation2 + $0x76]]
    %v415 = vstv %s414
    %v416 = vmul.f32 %v415, %v199
    %v417 = vmul.f32 %v415, %v203
    %v420 = vcombine.low %v416, %v417
    %v422 = vunpack.c.l.s4 1983009808
    %v423 = vunpack.c.0.s8 %v422
    %v424 = vlaneseq
    %v425 = vshrl.u32 %v424, 7
    %v426 = vsub.s32 %v423, %v425
    %v427 = vrot.slane %v420, %v426
    %v429 = vadd.f32 %v413, %v427
    %s430 = sld [smem:[#allocation2 + $0x7f]]
    %v431 = vstv %s430
    %v432 = vmul.f32 %v431, %v200
    %v433 = vmul.f32 %v431, %v204
    %v436 = vcombine.low %v432, %v433
    %v438 = vunpack.c.l.s4 1983009808
    %v439 = vunpack.c.0.s8 %v438
    %v440 = vlaneseq
    %v441 = vshrl.u32 %v440, 7
    %v442 = vsub.s32 %v439, %v441
    %v443 = vrot.slane %v436, %v442
    %v445 = vadd.f32 %v429, %v443
    %s446 = sld [smem:[#allocation2 + $0x88]]
    %v447 = vstv %s446
    %v448 = vmul.f32 %v447, %v201
    %v449 = vmul.f32 %v447, %v205
    %v452 = vcombine.low %v448, %v449
    %v454 = vunpack.c.l.s4 1983009808
    %v455 = vunpack.c.0.s8 %v454
    %v456 = vlaneseq
    %v457 = vshrl.u32 %v456, 7
    %v458 = vsub.s32 %v455, %v457
    %v459 = vrot.slane %v452, %v458
    %v461 = vadd.f32 %v445, %v459
    %462 = vrot.lane.b32.xlu0 %v145, 126
    %v463 = vpop.permute.xlu0 %462
    %464 = vrot.lane.b32.xlu0 %v153, 126
    %v465 = vpop.permute.xlu0 %464
    %466 = vrot.lane.b32.xlu0 %v161, 126
    %v467 = vpop.permute.xlu0 %466
    %468 = vrot.lane.b32.xlu0 %v169, 126
    %v469 = vpop.permute.xlu0 %468
    %470 = vrot.lane.b32.xlu0 %v146, 126
    %v471 = vpop.permute.xlu0 %470
    %472 = vrot.lane.b32.xlu0 %v154, 126
    %v473 = vpop.permute.xlu0 %472
    %474 = vrot.lane.b32.xlu0 %v162, 126
    %v475 = vpop.permute.xlu0 %474
    %476 = vrot.lane.b32.xlu0 %v170, 126
    %v477 = vpop.permute.xlu0 %476
    %vm478 = vcmp.lt.s32.totalorder %v196, 126
    %v479 = vsel %vm478, %v463, %v471
    %v480 = vsel %vm478, %v465, %v473
    %v481 = vsel %vm478, %v467, %v475
    %v482 = vsel %vm478, %v469, %v477
    %v483 = vsel %vm478, %v471, %v463
    %v484 = vsel %vm478, %v473, %v465
    %v485 = vsel %vm478, %v475, %v467
    %v486 = vsel %vm478, %v477, %v469
    %s487 = sld [smem:[#allocation2 + $0x2]]
    %v488 = vstv %s487
    %v489 = vmul.f32 %v488, %v479
    %v490 = vmul.f32 %v488, %v483
    %v493 = vcombine.low %v489, %v490
    %v495 = vunpack.c.l.s4 1983009808
    %v496 = vunpack.c.0.s8 %v495
    %v497 = vlaneseq
    %v498 = vshrl.u32 %v497, 7
    %v499 = vsub.s32 %v496, %v498
    %v500 = vrot.slane %v493, %v499
    %v502 = vadd.f32 %v269, %v500
    %s503 = sld [smem:[#allocation2 + $0xb]]
    %v504 = vstv %s503
    %v505 = vmul.f32 %v504, %v480
    %v506 = vmul.f32 %v504, %v484
    %v509 = vcombine.low %v505, %v506
    %v511 = vunpack.c.l.s4 1983009808
    %v512 = vunpack.c.0.s8 %v511
    %v513 = vlaneseq
    %v514 = vshrl.u32 %v513, 7
    %v515 = vsub.s32 %v512, %v514
    %v516 = vrot.slane %v509, %v515
    %v518 = vadd.f32 %v502, %v516
    %s519 = sld [smem:[#allocation2 + $0x14]]
    %v520 = vstv %s519
    %v521 = vmul.f32 %v520, %v481
    %v522 = vmul.f32 %v520, %v485
    %v525 = vcombine.low %v521, %v522
    %v527 = vunpack.c.l.s4 1983009808
    %v528 = vunpack.c.0.s8 %v527
    %v529 = vlaneseq
    %v530 = vshrl.u32 %v529, 7
    %v531 = vsub.s32 %v528, %v530
    %v532 = vrot.slane %v525, %v531
    %v534 = vadd.f32 %v518, %v532
    %s535 = sld [smem:[#allocation2 + $0x1d]]
    %v536 = vstv %s535
    %v537 = vmul.f32 %v536, %v482
    %v538 = vmul.f32 %v536, %v486
    %v541 = vcombine.low %v537, %v538
    %v543 = vunpack.c.l.s4 1983009808
    %v544 = vunpack.c.0.s8 %v543
    %v545 = vlaneseq
    %v546 = vshrl.u32 %v545, 7
    %v547 = vsub.s32 %v544, %v546
    %v548 = vrot.slane %v541, %v547
    %v550 = vadd.f32 %v534, %v548
    %s551 = sld [smem:[#allocation2 + $0x26]]
    %v552 = vstv %s551
    %v553 = vmul.f32 %v552, %v479
    %v554 = vmul.f32 %v552, %v483
    %v557 = vcombine.low %v553, %v554
    %v559 = vunpack.c.l.s4 1983009808
    %v560 = vunpack.c.0.s8 %v559
    %v561 = vlaneseq
    %v562 = vshrl.u32 %v561, 7
    %v563 = vsub.s32 %v560, %v562
    %v564 = vrot.slane %v557, %v563
    %v566 = vadd.f32 %v333, %v564
    %s567 = sld [smem:[#allocation2 + $0x2f]]
    %v568 = vstv %s567
    %v569 = vmul.f32 %v568, %v480
    %v570 = vmul.f32 %v568, %v484
    %v573 = vcombine.low %v569, %v570
    %v575 = vunpack.c.l.s4 1983009808
    %v576 = vunpack.c.0.s8 %v575
    %v577 = vlaneseq
    %v578 = vshrl.u32 %v577, 7
    %v579 = vsub.s32 %v576, %v578
    %v580 = vrot.slane %v573, %v579
    %v582 = vadd.f32 %v566, %v580
    %s583 = sld [smem:[#allocation2 + $0x38]]
    %v584 = vstv %s583
    %v585 = vmul.f32 %v584, %v481
    %v586 = vmul.f32 %v584, %v485
    %v589 = vcombine.low %v585, %v586
    %v591 = vunpack.c.l.s4 1983009808
    %v592 = vunpack.c.0.s8 %v591
    %v593 = vlaneseq
    %v594 = vshrl.u32 %v593, 7
    %v595 = vsub.s32 %v592, %v594
    %v596 = vrot.slane %v589, %v595
    %v598 = vadd.f32 %v582, %v596
    %s599 = sld [smem:[#allocation2 + $0x41]]
    %v600 = vstv %s599
    %v601 = vmul.f32 %v600, %v482
    %v602 = vmul.f32 %v600, %v486
    %v605 = vcombine.low %v601, %v602
    %v607 = vunpack.c.l.s4 1983009808
    %v608 = vunpack.c.0.s8 %v607
    %v609 = vlaneseq
    %v610 = vshrl.u32 %v609, 7
    %v611 = vsub.s32 %v608, %v610
    %v612 = vrot.slane %v605, %v611
    %v614 = vadd.f32 %v598, %v612
    %s615 = sld [smem:[#allocation2 + $0x4a]]
    %v616 = vstv %s615
    %v617 = vmul.f32 %v616, %v479
    %v618 = vmul.f32 %v616, %v483
    %v621 = vcombine.low %v617, %v618
    %v623 = vunpack.c.l.s4 1983009808
    %v624 = vunpack.c.0.s8 %v623
    %v625 = vlaneseq
    %v626 = vshrl.u32 %v625, 7
    %v627 = vsub.s32 %v624, %v626
    %v628 = vrot.slane %v621, %v627
    %v630 = vadd.f32 %v397, %v628
    %s631 = sld [smem:[#allocation2 + $0x53]]
    %v632 = vstv %s631
    %v633 = vmul.f32 %v632, %v480
    %v634 = vmul.f32 %v632, %v484
    %v637 = vcombine.low %v633, %v634
    %v639 = vunpack.c.l.s4 1983009808
    %v640 = vunpack.c.0.s8 %v639
    %v641 = vlaneseq
    %v642 = vshrl.u32 %v641, 7
    %v643 = vsub.s32 %v640, %v642
    %v644 = vrot.slane %v637, %v643
    %v646 = vadd.f32 %v630, %v644
    %s647 = sld [smem:[#allocation2 + $0x5c]]
    %v648 = vstv %s647
    %v649 = vmul.f32 %v648, %v481
    %v650 = vmul.f32 %v648, %v485
    %v653 = vcombine.low %v649, %v650
    %v655 = vunpack.c.l.s4 1983009808
    %v656 = vunpack.c.0.s8 %v655
    %v657 = vlaneseq
    %v658 = vshrl.u32 %v657, 7
    %v659 = vsub.s32 %v656, %v658
    %v660 = vrot.slane %v653, %v659
    %v662 = vadd.f32 %v646, %v660
    %s663 = sld [smem:[#allocation2 + $0x65]]
    %v664 = vstv %s663
    %v665 = vmul.f32 %v664, %v482
    %v666 = vmul.f32 %v664, %v486
    %v669 = vcombine.low %v665, %v666
    %v671 = vunpack.c.l.s4 1983009808
    %v672 = vunpack.c.0.s8 %v671
    %v673 = vlaneseq
    %v674 = vshrl.u32 %v673, 7
    %v675 = vsub.s32 %v672, %v674
    %v676 = vrot.slane %v669, %v675
    %v678 = vadd.f32 %v662, %v676
    %s679 = sld [smem:[#allocation2 + $0x6e]]
    %v680 = vstv %s679
    %v681 = vmul.f32 %v680, %v479
    %v682 = vmul.f32 %v680, %v483
    %v685 = vcombine.low %v681, %v682
    %v687 = vunpack.c.l.s4 1983009808
    %v688 = vunpack.c.0.s8 %v687
    %v689 = vlaneseq
    %v690 = vshrl.u32 %v689, 7
    %v691 = vsub.s32 %v688, %v690
    %v692 = vrot.slane %v685, %v691
    %v694 = vadd.f32 %v461, %v692
    %s695 = sld [smem:[#allocation2 + $0x77]]
    %v696 = vstv %s695
    %v697 = vmul.f32 %v696, %v480
    %v698 = vmul.f32 %v696, %v484
    %v701 = vcombine.low %v697, %v698
    %v703 = vunpack.c.l.s4 1983009808
    %v704 = vunpack.c.0.s8 %v703
    %v705 = vlaneseq
    %v706 = vshrl.u32 %v705, 7
    %v707 = vsub.s32 %v704, %v706
    %v708 = vrot.slane %v701, %v707
    %v710 = vadd.f32 %v694, %v708
    %s711 = sld [smem:[#allocation2 + $0x80]]
    %v712 = vstv %s711
    %v713 = vmul.f32 %v712, %v481
    %v714 = vmul.f32 %v712, %v485
    %v717 = vcombine.low %v713, %v714
    %v719 = vunpack.c.l.s4 1983009808
    %v720 = vunpack.c.0.s8 %v719
    %v721 = vlaneseq
    %v722 = vshrl.u32 %v721, 7
    %v723 = vsub.s32 %v720, %v722
    %v724 = vrot.slane %v717, %v723
    %v726 = vadd.f32 %v710, %v724
    %s727 = sld [smem:[#allocation2 + $0x89]]
    %v728 = vstv %s727
    %v729 = vmul.f32 %v728, %v482
    %v730 = vmul.f32 %v728, %v486
    %v733 = vcombine.low %v729, %v730
    %v735 = vunpack.c.l.s4 1983009808
    %v736 = vunpack.c.0.s8 %v735
    %v737 = vlaneseq
    %v738 = vshrl.u32 %v737, 7
    %v739 = vsub.s32 %v736, %v738
    %v740 = vrot.slane %v733, %v739
    %v742 = vadd.f32 %v726, %v740
    %743 = vrot.lane.b32.xlu0 %v145, 112
    %v744 = vpop.permute.xlu0 %743
    %745 = vrot.lane.b32.xlu0 %v153, 112
    %v746 = vpop.permute.xlu0 %745
    %747 = vrot.lane.b32.xlu0 %v161, 112
    %v748 = vpop.permute.xlu0 %747
    %749 = vrot.lane.b32.xlu0 %v169, 112
    %v750 = vpop.permute.xlu0 %749
    %751 = vrot.lane.b32.xlu0 %v146, 112
    %v752 = vpop.permute.xlu0 %751
    %753 = vrot.lane.b32.xlu0 %v154, 112
    %v754 = vpop.permute.xlu0 %753
    %755 = vrot.lane.b32.xlu0 %v162, 112
    %v756 = vpop.permute.xlu0 %755
    %757 = vrot.lane.b32.xlu0 %v170, 112
    %v758 = vpop.permute.xlu0 %757
    %vm759 = vcmp.lt.s32.totalorder %v196, 112
    %v760 = vsel %vm759, %v744, %v752
    %v761 = vsel %vm759, %v746, %v754
    %v762 = vsel %vm759, %v748, %v756
    %v763 = vsel %vm759, %v750, %v758
    %v764 = vsel %vm759, %v752, %v744
    %v765 = vsel %vm759, %v754, %v746
    %v766 = vsel %vm759, %v756, %v748
    %v767 = vsel %vm759, %v758, %v750
    %s768 = sld [smem:[#allocation2 + $0x3]]
    %v769 = vstv %s768
    %v770 = vmul.f32 %v769, %v760
    %v771 = vmul.f32 %v769, %v764
    %v774 = vcombine.low %v770, %v771
    %v776 = vunpack.c.l.s4 1983009808
    %v777 = vunpack.c.0.s8 %v776
    %v778 = vlaneseq
    %v779 = vshrl.u32 %v778, 7
    %v780 = vsub.s32 %v777, %v779
    %v781 = vrot.slane %v774, %v780
    %v783 = vadd.f32 %v550, %v781
    %s784 = sld [smem:[#allocation2 + $0xc]]
    %v785 = vstv %s784
    %v786 = vmul.f32 %v785, %v761
    %v787 = vmul.f32 %v785, %v765
    %v790 = vcombine.low %v786, %v787
    %v792 = vunpack.c.l.s4 1983009808
    %v793 = vunpack.c.0.s8 %v792
    %v794 = vlaneseq
    %v795 = vshrl.u32 %v794, 7
    %v796 = vsub.s32 %v793, %v795
    %v797 = vrot.slane %v790, %v796
    %v799 = vadd.f32 %v783, %v797
    %s800 = sld [smem:[#allocation2 + $0x15]]
    %v801 = vstv %s800
    %v802 = vmul.f32 %v801, %v762
    %v803 = vmul.f32 %v801, %v766
    %v806 = vcombine.low %v802, %v803
    %v808 = vunpack.c.l.s4 1983009808
    %v809 = vunpack.c.0.s8 %v808
    %v810 = vlaneseq
    %v811 = vshrl.u32 %v810, 7
    %v812 = vsub.s32 %v809, %v811
    %v813 = vrot.slane %v806, %v812
    %v815 = vadd.f32 %v799, %v813
    %s816 = sld [smem:[#allocation2 + $0x1e]]
    %v817 = vstv %s816
    %v818 = vmul.f32 %v817, %v763
    %v819 = vmul.f32 %v817, %v767
    %v822 = vcombine.low %v818, %v819
    %v824 = vunpack.c.l.s4 1983009808
    %v825 = vunpack.c.0.s8 %v824
    %v826 = vlaneseq
    %v827 = vshrl.u32 %v826, 7
    %v828 = vsub.s32 %v825, %v827
    %v829 = vrot.slane %v822, %v828
    %v831 = vadd.f32 %v815, %v829
    %s832 = sld [smem:[#allocation2 + $0x27]]
    %v833 = vstv %s832
    %v834 = vmul.f32 %v833, %v760
    %v835 = vmul.f32 %v833, %v764
    %v838 = vcombine.low %v834, %v835
    %v840 = vunpack.c.l.s4 1983009808
    %v841 = vunpack.c.0.s8 %v840
    %v842 = vlaneseq
    %v843 = vshrl.u32 %v842, 7
    %v844 = vsub.s32 %v841, %v843
    %v845 = vrot.slane %v838, %v844
    %v847 = vadd.f32 %v614, %v845
    %s848 = sld [smem:[#allocation2 + $0x30]]
    %v849 = vstv %s848
    %v850 = vmul.f32 %v849, %v761
    %v851 = vmul.f32 %v849, %v765
    %v854 = vcombine.low %v850, %v851
    %v856 = vunpack.c.l.s4 1983009808
    %v857 = vunpack.c.0.s8 %v856
    %v858 = vlaneseq
    %v859 = vshrl.u32 %v858, 7
    %v860 = vsub.s32 %v857, %v859
    %v861 = vrot.slane %v854, %v860
    %v863 = vadd.f32 %v847, %v861
    %s864 = sld [smem:[#allocation2 + $0x39]]
    %v865 = vstv %s864
    %v866 = vmul.f32 %v865, %v762
    %v867 = vmul.f32 %v865, %v766
    %v870 = vcombine.low %v866, %v867
    %v872 = vunpack.c.l.s4 1983009808
    %v873 = vunpack.c.0.s8 %v872
    %v874 = vlaneseq
    %v875 = vshrl.u32 %v874, 7
    %v876 = vsub.s32 %v873, %v875
    %v877 = vrot.slane %v870, %v876
    %v879 = vadd.f32 %v863, %v877
    %s880 = sld [smem:[#allocation2 + $0x42]]
    %v881 = vstv %s880
    %v882 = vmul.f32 %v881, %v763
    %v883 = vmul.f32 %v881, %v767
    %v886 = vcombine.low %v882, %v883
    %v888 = vunpack.c.l.s4 1983009808
    %v889 = vunpack.c.0.s8 %v888
    %v890 = vlaneseq
    %v891 = vshrl.u32 %v890, 7
    %v892 = vsub.s32 %v889, %v891
    %v893 = vrot.slane %v886, %v892
    %v895 = vadd.f32 %v879, %v893
    %s896 = sld [smem:[#allocation2 + $0x4b]]
    %v897 = vstv %s896
    %v898 = vmul.f32 %v897, %v760
    %v899 = vmul.f32 %v897, %v764
    %v902 = vcombine.low %v898, %v899
    %v904 = vunpack.c.l.s4 1983009808
    %v905 = vunpack.c.0.s8 %v904
    %v906 = vlaneseq
    %v907 = vshrl.u32 %v906, 7
    %v908 = vsub.s32 %v905, %v907
    %v909 = vrot.slane %v902, %v908
    %v911 = vadd.f32 %v678, %v909
    %s912 = sld [smem:[#allocation2 + $0x54]]
    %v913 = vstv %s912
    %v914 = vmul.f32 %v913, %v761
    %v915 = vmul.f32 %v913, %v765
    %v918 = vcombine.low %v914, %v915
    %v920 = vunpack.c.l.s4 1983009808
    %v921 = vunpack.c.0.s8 %v920
    %v922 = vlaneseq
    %v923 = vshrl.u32 %v922, 7
    %v924 = vsub.s32 %v921, %v923
    %v925 = vrot.slane %v918, %v924
    %v927 = vadd.f32 %v911, %v925
    %s928 = sld [smem:[#allocation2 + $0x5d]]
    %v929 = vstv %s928
    %v930 = vmul.f32 %v929, %v762
    %v931 = vmul.f32 %v929, %v766
    %v934 = vcombine.low %v930, %v931
    %v936 = vunpack.c.l.s4 1983009808
    %v937 = vunpack.c.0.s8 %v936
    %v938 = vlaneseq
    %v939 = vshrl.u32 %v938, 7
    %v940 = vsub.s32 %v937, %v939
    %v941 = vrot.slane %v934, %v940
    %v943 = vadd.f32 %v927, %v941
    %s944 = sld [smem:[#allocation2 + $0x66]]
    %v945 = vstv %s944
    %v946 = vmul.f32 %v945, %v763
    %v947 = vmul.f32 %v945, %v767
    %v950 = vcombine.low %v946, %v947
    %v952 = vunpack.c.l.s4 1983009808
    %v953 = vunpack.c.0.s8 %v952
    %v954 = vlaneseq
    %v955 = vshrl.u32 %v954, 7
    %v956 = vsub.s32 %v953, %v955
    %v957 = vrot.slane %v950, %v956
    %v959 = vadd.f32 %v943, %v957
    %s960 = sld [smem:[#allocation2 + $0x6f]]
    %v961 = vstv %s960
    %v962 = vmul.f32 %v961, %v760
    %v963 = vmul.f32 %v961, %v764
    %v966 = vcombine.low %v962, %v963
    %v968 = vunpack.c.l.s4 1983009808
    %v969 = vunpack.c.0.s8 %v968
    %v970 = vlaneseq
    %v971 = vshrl.u32 %v970, 7
    %v972 = vsub.s32 %v969, %v971
    %v973 = vrot.slane %v966, %v972
    %v975 = vadd.f32 %v742, %v973
    %s976 = sld [smem:[#allocation2 + $0x78]]
    %v977 = vstv %s976
    %v978 = vmul.f32 %v977, %v761
    %v979 = vmul.f32 %v977, %v765
    %v982 = vcombine.low %v978, %v979
    %v984 = vunpack.c.l.s4 1983009808
    %v985 = vunpack.c.0.s8 %v984
    %v986 = vlaneseq
    %v987 = vshrl.u32 %v986, 7
    %v988 = vsub.s32 %v985, %v987
    %v989 = vrot.slane %v982, %v988
    %v991 = vadd.f32 %v975, %v989
    %s992 = sld [smem:[#allocation2 + $0x81]]
    %v993 = vstv %s992
    %v994 = vmul.f32 %v993, %v762
    %v995 = vmul.f32 %v993, %v766
    %v998 = vcombine.low %v994, %v995
    %v1000 = vunpack.c.l.s4 1983009808
    %v1001 = vunpack.c.0.s8 %v1000
    %v1002 = vlaneseq
    %v1003 = vshrl.u32 %v1002, 7
    %v1004 = vsub.s32 %v1001, %v1003
    %v1005 = vrot.slane %v998, %v1004
    %v1007 = vadd.f32 %v991, %v1005
    %s1008 = sld [smem:[#allocation2 + $0x8a]]
    %v1009 = vstv %s1008
    %v1010 = vmul.f32 %v1009, %v763
    %v1011 = vmul.f32 %v1009, %v767
    %v1014 = vcombine.low %v1010, %v1011
    %v1016 = vunpack.c.l.s4 1983009808
    %v1017 = vunpack.c.0.s8 %v1016
    %v1018 = vlaneseq
    %v1019 = vshrl.u32 %v1018, 7
    %v1020 = vsub.s32 %v1017, %v1019
    %v1021 = vrot.slane %v1014, %v1020
    %v1023 = vadd.f32 %v1007, %v1021
    %1024 = vrot.lane.b32.xlu0 %v145, 111
    %v1025 = vpop.permute.xlu0 %1024
    %1026 = vrot.lane.b32.xlu0 %v153, 111
    %v1027 = vpop.permute.xlu0 %1026
    %1028 = vrot.lane.b32.xlu0 %v161, 111
    %v1029 = vpop.permute.xlu0 %1028
    %1030 = vrot.lane.b32.xlu0 %v169, 111
    %v1031 = vpop.permute.xlu0 %1030
    %1032 = vrot.lane.b32.xlu0 %v146, 111
    %v1033 = vpop.permute.xlu0 %1032
    %1034 = vrot.lane.b32.xlu0 %v154, 111
    %v1035 = vpop.permute.xlu0 %1034
    %1036 = vrot.lane.b32.xlu0 %v162, 111
    %v1037 = vpop.permute.xlu0 %1036
    %1038 = vrot.lane.b32.xlu0 %v170, 111
    %v1039 = vpop.permute.xlu0 %1038
    %vm1040 = vcmp.lt.s32.totalorder %v196, 111
    %v1041 = vsel %vm1040, %v1025, %v1033
    %v1042 = vsel %vm1040, %v1027, %v1035
    %v1043 = vsel %vm1040, %v1029, %v1037
    %v1044 = vsel %vm1040, %v1031, %v1039
    %v1045 = vsel %vm1040, %v1033, %v1025
    %v1046 = vsel %vm1040, %v1035, %v1027
    %v1047 = vsel %vm1040, %v1037, %v1029
    %v1048 = vsel %vm1040, %v1039, %v1031
    %s1049 = sld [smem:[#allocation2 + $0x4]]
    %v1050 = vstv %s1049
    %v1051 = vmul.f32 %v1050, %v1041
    %v1052 = vmul.f32 %v1050, %v1045
    %v1055 = vcombine.low %v1051, %v1052
    %v1057 = vunpack.c.l.s4 1983009808
    %v1058 = vunpack.c.0.s8 %v1057
    %v1059 = vlaneseq
    %v1060 = vshrl.u32 %v1059, 7
    %v1061 = vsub.s32 %v1058, %v1060
    %v1062 = vrot.slane %v1055, %v1061
    %v1064 = vadd.f32 %v831, %v1062
    %s1065 = sld [smem:[#allocation2 + $0xd]]
    %v1066 = vstv %s1065
    %v1067 = vmul.f32 %v1066, %v1042
    %v1068 = vmul.f32 %v1066, %v1046
    %v1071 = vcombine.low %v1067, %v1068
    %v1073 = vunpack.c.l.s4 1983009808
    %v1074 = vunpack.c.0.s8 %v1073
    %v1075 = vlaneseq
    %v1076 = vshrl.u32 %v1075, 7
    %v1077 = vsub.s32 %v1074, %v1076
    %v1078 = vrot.slane %v1071, %v1077
    %v1080 = vadd.f32 %v1064, %v1078
    %s1081 = sld [smem:[#allocation2 + $0x16]]
    %v1082 = vstv %s1081
    %v1083 = vmul.f32 %v1082, %v1043
    %v1084 = vmul.f32 %v1082, %v1047
    %v1087 = vcombine.low %v1083, %v1084
    %v1089 = vunpack.c.l.s4 1983009808
    %v1090 = vunpack.c.0.s8 %v1089
    %v1091 = vlaneseq
    %v1092 = vshrl.u32 %v1091, 7
    %v1093 = vsub.s32 %v1090, %v1092
    %v1094 = vrot.slane %v1087, %v1093
    %v1096 = vadd.f32 %v1080, %v1094
    %s1097 = sld [smem:[#allocation2 + $0x1f]]
    %v1098 = vstv %s1097
    %v1099 = vmul.f32 %v1098, %v1044
    %v1100 = vmul.f32 %v1098, %v1048
    %v1103 = vcombine.low %v1099, %v1100
    %v1105 = vunpack.c.l.s4 1983009808
    %v1106 = vunpack.c.0.s8 %v1105
    %v1107 = vlaneseq
    %v1108 = vshrl.u32 %v1107, 7
    %v1109 = vsub.s32 %v1106, %v1108
    %v1110 = vrot.slane %v1103, %v1109
    %v1112 = vadd.f32 %v1096, %v1110
    %s1113 = sld [smem:[#allocation2 + $0x28]]
    %v1114 = vstv %s1113
    %v1115 = vmul.f32 %v1114, %v1041
    %v1116 = vmul.f32 %v1114, %v1045
    %v1119 = vcombine.low %v1115, %v1116
    %v1121 = vunpack.c.l.s4 1983009808
    %v1122 = vunpack.c.0.s8 %v1121
    %v1123 = vlaneseq
    %v1124 = vshrl.u32 %v1123, 7
    %v1125 = vsub.s32 %v1122, %v1124
    %v1126 = vrot.slane %v1119, %v1125
    %v1128 = vadd.f32 %v895, %v1126
    %s1129 = sld [smem:[#allocation2 + $0x31]]
    %v1130 = vstv %s1129
    %v1131 = vmul.f32 %v1130, %v1042
    %v1132 = vmul.f32 %v1130, %v1046
    %v1135 = vcombine.low %v1131, %v1132
    %v1137 = vunpack.c.l.s4 1983009808
    %v1138 = vunpack.c.0.s8 %v1137
    %v1139 = vlaneseq
    %v1140 = vshrl.u32 %v1139, 7
    %v1141 = vsub.s32 %v1138, %v1140
    %v1142 = vrot.slane %v1135, %v1141
    %v1144 = vadd.f32 %v1128, %v1142
    %s1145 = sld [smem:[#allocation2 + $0x3a]]
    %v1146 = vstv %s1145
    %v1147 = vmul.f32 %v1146, %v1043
    %v1148 = vmul.f32 %v1146, %v1047
    %v1151 = vcombine.low %v1147, %v1148
    %v1153 = vunpack.c.l.s4 1983009808
    %v1154 = vunpack.c.0.s8 %v1153
    %v1155 = vlaneseq
    %v1156 = vshrl.u32 %v1155, 7
    %v1157 = vsub.s32 %v1154, %v1156
    %v1158 = vrot.slane %v1151, %v1157
    %v1160 = vadd.f32 %v1144, %v1158
    %s1161 = sld [smem:[#allocation2 + $0x43]]
    %v1162 = vstv %s1161
    %v1163 = vmul.f32 %v1162, %v1044
    %v1164 = vmul.f32 %v1162, %v1048
    %v1167 = vcombine.low %v1163, %v1164
    %v1169 = vunpack.c.l.s4 1983009808
    %v1170 = vunpack.c.0.s8 %v1169
    %v1171 = vlaneseq
    %v1172 = vshrl.u32 %v1171, 7
    %v1173 = vsub.s32 %v1170, %v1172
    %v1174 = vrot.slane %v1167, %v1173
    %v1176 = vadd.f32 %v1160, %v1174
    %s1177 = sld [smem:[#allocation2 + $0x4c]]
    %v1178 = vstv %s1177
    %v1179 = vmul.f32 %v1178, %v1041
    %v1180 = vmul.f32 %v1178, %v1045
    %v1183 = vcombine.low %v1179, %v1180
    %v1185 = vunpack.c.l.s4 1983009808
    %v1186 = vunpack.c.0.s8 %v1185
    %v1187 = vlaneseq
    %v1188 = vshrl.u32 %v1187, 7
    %v1189 = vsub.s32 %v1186, %v1188
    %v1190 = vrot.slane %v1183, %v1189
    %v1192 = vadd.f32 %v959, %v1190
    %s1193 = sld [smem:[#allocation2 + $0x55]]
    %v1194 = vstv %s1193
    %v1195 = vmul.f32 %v1194, %v1042
    %v1196 = vmul.f32 %v1194, %v1046
    %v1199 = vcombine.low %v1195, %v1196
    %v1201 = vunpack.c.l.s4 1983009808
    %v1202 = vunpack.c.0.s8 %v1201
    %v1203 = vlaneseq
    %v1204 = vshrl.u32 %v1203, 7
    %v1205 = vsub.s32 %v1202, %v1204
    %v1206 = vrot.slane %v1199, %v1205
    %v1208 = vadd.f32 %v1192, %v1206
    %s1209 = sld [smem:[#allocation2 + $0x5e]]
    %v1210 = vstv %s1209
    %v1211 = vmul.f32 %v1210, %v1043
    %v1212 = vmul.f32 %v1210, %v1047
    %v1215 = vcombine.low %v1211, %v1212
    %v1217 = vunpack.c.l.s4 1983009808
    %v1218 = vunpack.c.0.s8 %v1217
    %v1219 = vlaneseq
    %v1220 = vshrl.u32 %v1219, 7
    %v1221 = vsub.s32 %v1218, %v1220
    %v1222 = vrot.slane %v1215, %v1221
    %v1224 = vadd.f32 %v1208, %v1222
    %s1225 = sld [smem:[#allocation2 + $0x67]]
    %v1226 = vstv %s1225
    %v1227 = vmul.f32 %v1226, %v1044
    %v1228 = vmul.f32 %v1226, %v1048
    %v1231 = vcombine.low %v1227, %v1228
    %v1233 = vunpack.c.l.s4 1983009808
    %v1234 = vunpack.c.0.s8 %v1233
    %v1235 = vlaneseq
    %v1236 = vshrl.u32 %v1235, 7
    %v1237 = vsub.s32 %v1234, %v1236
    %v1238 = vrot.slane %v1231, %v1237
    %v1240 = vadd.f32 %v1224, %v1238
    %s1241 = sld [smem:[#allocation2 + $0x70]]
    %v1242 = vstv %s1241
    %v1243 = vmul.f32 %v1242, %v1041
    %v1244 = vmul.f32 %v1242, %v1045
    %v1247 = vcombine.low %v1243, %v1244
    %v1249 = vunpack.c.l.s4 1983009808
    %v1250 = vunpack.c.0.s8 %v1249
    %v1251 = vlaneseq
    %v1252 = vshrl.u32 %v1251, 7
    %v1253 = vsub.s32 %v1250, %v1252
    %v1254 = vrot.slane %v1247, %v1253
    %v1256 = vadd.f32 %v1023, %v1254
    %s1257 = sld [smem:[#allocation2 + $0x79]]
    %v1258 = vstv %s1257
    %v1259 = vmul.f32 %v1258, %v1042
    %v1260 = vmul.f32 %v1258, %v1046
    %v1263 = vcombine.low %v1259, %v1260
    %v1265 = vunpack.c.l.s4 1983009808
    %v1266 = vunpack.c.0.s8 %v1265
    %v1267 = vlaneseq
    %v1268 = vshrl.u32 %v1267, 7
    %v1269 = vsub.s32 %v1266, %v1268
    %v1270 = vrot.slane %v1263, %v1269
    %v1272 = vadd.f32 %v1256, %v1270
    %s1273 = sld [smem:[#allocation2 + $0x82]]
    %v1274 = vstv %s1273
    %v1275 = vmul.f32 %v1274, %v1043
    %v1276 = vmul.f32 %v1274, %v1047
    %v1279 = vcombine.low %v1275, %v1276
    %v1281 = vunpack.c.l.s4 1983009808
    %v1282 = vunpack.c.0.s8 %v1281
    %v1283 = vlaneseq
    %v1284 = vshrl.u32 %v1283, 7
    %v1285 = vsub.s32 %v1282, %v1284
    %v1286 = vrot.slane %v1279, %v1285
    %v1288 = vadd.f32 %v1272, %v1286
    %s1289 = sld [smem:[#allocation2 + $0x8b]]
    %v1290 = vstv %s1289
    %v1291 = vmul.f32 %v1290, %v1044
    %v1292 = vmul.f32 %v1290, %v1048
    %v1295 = vcombine.low %v1291, %v1292
    %v1297 = vunpack.c.l.s4 1983009808
    %v1298 = vunpack.c.0.s8 %v1297
    %v1299 = vlaneseq
    %v1300 = vshrl.u32 %v1299, 7
    %v1301 = vsub.s32 %v1298, %v1300
    %v1302 = vrot.slane %v1295, %v1301
    %v1304 = vadd.f32 %v1288, %v1302
    %1305 = vrot.lane.b32.xlu0 %v145, 110
    %v1306 = vpop.permute.xlu0 %1305
    %1307 = vrot.lane.b32.xlu0 %v153, 110
    %v1308 = vpop.permute.xlu0 %1307
    %1309 = vrot.lane.b32.xlu0 %v161, 110
    %v1310 = vpop.permute.xlu0 %1309
    %1311 = vrot.lane.b32.xlu0 %v169, 110
    %v1312 = vpop.permute.xlu0 %1311
    %1313 = vrot.lane.b32.xlu0 %v146, 110
    %v1314 = vpop.permute.xlu0 %1313
    %1315 = vrot.lane.b32.xlu0 %v154, 110
    %v1316 = vpop.permute.xlu0 %1315
    %1317 = vrot.lane.b32.xlu0 %v162, 110
    %v1318 = vpop.permute.xlu0 %1317
    %1319 = vrot.lane.b32.xlu0 %v170, 110
    %v1320 = vpop.permute.xlu0 %1319
    %vm1321 = vcmp.lt.s32.totalorder %v196, 110
    %v1322 = vsel %vm1321, %v1306, %v1314
    %v1323 = vsel %vm1321, %v1308, %v1316
    %v1324 = vsel %vm1321, %v1310, %v1318
    %v1325 = vsel %vm1321, %v1312, %v1320
    %v1326 = vsel %vm1321, %v1314, %v1306
    %v1327 = vsel %vm1321, %v1316, %v1308
    %v1328 = vsel %vm1321, %v1318, %v1310
    %v1329 = vsel %vm1321, %v1320, %v1312
    %s1330 = sld [smem:[#allocation2 + $0x5]]
    %v1331 = vstv %s1330
    %v1332 = vmul.f32 %v1331, %v1322
    %v1333 = vmul.f32 %v1331, %v1326
    %v1336 = vcombine.low %v1332, %v1333
    %v1338 = vunpack.c.l.s4 1983009808
    %v1339 = vunpack.c.0.s8 %v1338
    %v1340 = vlaneseq
    %v1341 = vshrl.u32 %v1340, 7
    %v1342 = vsub.s32 %v1339, %v1341
    %v1343 = vrot.slane %v1336, %v1342
    %v1345 = vadd.f32 %v1112, %v1343
    %s1346 = sld [smem:[#allocation2 + $0xe]]
    %v1347 = vstv %s1346
    %v1348 = vmul.f32 %v1347, %v1323
    %v1349 = vmul.f32 %v1347, %v1327
    %v1352 = vcombine.low %v1348, %v1349
    %v1354 = vunpack.c.l.s4 1983009808
    %v1355 = vunpack.c.0.s8 %v1354
    %v1356 = vlaneseq
    %v1357 = vshrl.u32 %v1356, 7
    %v1358 = vsub.s32 %v1355, %v1357
    %v1359 = vrot.slane %v1352, %v1358
    %v1361 = vadd.f32 %v1345, %v1359
    %s1362 = sld [smem:[#allocation2 + $0x17]]
    %v1363 = vstv %s1362
    %v1364 = vmul.f32 %v1363, %v1324
    %v1365 = vmul.f32 %v1363, %v1328
    %v1368 = vcombine.low %v1364, %v1365
    %v1370 = vunpack.c.l.s4 1983009808
    %v1371 = vunpack.c.0.s8 %v1370
    %v1372 = vlaneseq
    %v1373 = vshrl.u32 %v1372, 7
    %v1374 = vsub.s32 %v1371, %v1373
    %v1375 = vrot.slane %v1368, %v1374
    %v1377 = vadd.f32 %v1361, %v1375
    %s1378 = sld [smem:[#allocation2 + $0x20]]
    %v1379 = vstv %s1378
    %v1380 = vmul.f32 %v1379, %v1325
    %v1381 = vmul.f32 %v1379, %v1329
    %v1384 = vcombine.low %v1380, %v1381
    %v1386 = vunpack.c.l.s4 1983009808
    %v1387 = vunpack.c.0.s8 %v1386
    %v1388 = vlaneseq
    %v1389 = vshrl.u32 %v1388, 7
    %v1390 = vsub.s32 %v1387, %v1389
    %v1391 = vrot.slane %v1384, %v1390
    %v1393 = vadd.f32 %v1377, %v1391
    %s1394 = sld [smem:[#allocation2 + $0x29]]
    %v1395 = vstv %s1394
    %v1396 = vmul.f32 %v1395, %v1322
    %v1397 = vmul.f32 %v1395, %v1326
    %v1400 = vcombine.low %v1396, %v1397
    %v1402 = vunpack.c.l.s4 1983009808
    %v1403 = vunpack.c.0.s8 %v1402
    %v1404 = vlaneseq
    %v1405 = vshrl.u32 %v1404, 7
    %v1406 = vsub.s32 %v1403, %v1405
    %v1407 = vrot.slane %v1400, %v1406
    %v1409 = vadd.f32 %v1176, %v1407
    %s1410 = sld [smem:[#allocation2 + $0x32]]
    %v1411 = vstv %s1410
    %v1412 = vmul.f32 %v1411, %v1323
    %v1413 = vmul.f32 %v1411, %v1327
    %v1416 = vcombine.low %v1412, %v1413
    %v1418 = vunpack.c.l.s4 1983009808
    %v1419 = vunpack.c.0.s8 %v1418
    %v1420 = vlaneseq
    %v1421 = vshrl.u32 %v1420, 7
    %v1422 = vsub.s32 %v1419, %v1421
    %v1423 = vrot.slane %v1416, %v1422
    %v1425 = vadd.f32 %v1409, %v1423
    %s1426 = sld [smem:[#allocation2 + $0x3b]]
    %v1427 = vstv %s1426
    %v1428 = vmul.f32 %v1427, %v1324
    %v1429 = vmul.f32 %v1427, %v1328
    %v1432 = vcombine.low %v1428, %v1429
    %v1434 = vunpack.c.l.s4 1983009808
    %v1435 = vunpack.c.0.s8 %v1434
    %v1436 = vlaneseq
    %v1437 = vshrl.u32 %v1436, 7
    %v1438 = vsub.s32 %v1435, %v1437
    %v1439 = vrot.slane %v1432, %v1438
    %v1441 = vadd.f32 %v1425, %v1439
    %s1442 = sld [smem:[#allocation2 + $0x44]]
    %v1443 = vstv %s1442
    %v1444 = vmul.f32 %v1443, %v1325
    %v1445 = vmul.f32 %v1443, %v1329
    %v1448 = vcombine.low %v1444, %v1445
    %v1450 = vunpack.c.l.s4 1983009808
    %v1451 = vunpack.c.0.s8 %v1450
    %v1452 = vlaneseq
    %v1453 = vshrl.u32 %v1452, 7
    %v1454 = vsub.s32 %v1451, %v1453
    %v1455 = vrot.slane %v1448, %v1454
    %v1457 = vadd.f32 %v1441, %v1455
    %s1458 = sld [smem:[#allocation2 + $0x4d]]
    %v1459 = vstv %s1458
    %v1460 = vmul.f32 %v1459, %v1322
    %v1461 = vmul.f32 %v1459, %v1326
    %v1464 = vcombine.low %v1460, %v1461
    %v1466 = vunpack.c.l.s4 1983009808
    %v1467 = vunpack.c.0.s8 %v1466
    %v1468 = vlaneseq
    %v1469 = vshrl.u32 %v1468, 7
    %v1470 = vsub.s32 %v1467, %v1469
    %v1471 = vrot.slane %v1464, %v1470
    %v1473 = vadd.f32 %v1240, %v1471
    %s1474 = sld [smem:[#allocation2 + $0x56]]
    %v1475 = vstv %s1474
    %v1476 = vmul.f32 %v1475, %v1323
    %v1477 = vmul.f32 %v1475, %v1327
    %v1480 = vcombine.low %v1476, %v1477
    %v1482 = vunpack.c.l.s4 1983009808
    %v1483 = vunpack.c.0.s8 %v1482
    %v1484 = vlaneseq
    %v1485 = vshrl.u32 %v1484, 7
    %v1486 = vsub.s32 %v1483, %v1485
    %v1487 = vrot.slane %v1480, %v1486
    %v1489 = vadd.f32 %v1473, %v1487
    %s1490 = sld [smem:[#allocation2 + $0x5f]]
    %v1491 = vstv %s1490
    %v1492 = vmul.f32 %v1491, %v1324
    %v1493 = vmul.f32 %v1491, %v1328
    %v1496 = vcombine.low %v1492, %v1493
    %v1498 = vunpack.c.l.s4 1983009808
    %v1499 = vunpack.c.0.s8 %v1498
    %v1500 = vlaneseq
    %v1501 = vshrl.u32 %v1500, 7
    %v1502 = vsub.s32 %v1499, %v1501
    %v1503 = vrot.slane %v1496, %v1502
    %v1505 = vadd.f32 %v1489, %v1503
    %s1506 = sld [smem:[#allocation2 + $0x68]]
    %v1507 = vstv %s1506
    %v1508 = vmul.f32 %v1507, %v1325
    %v1509 = vmul.f32 %v1507, %v1329
    %v1512 = vcombine.low %v1508, %v1509
    %v1514 = vunpack.c.l.s4 1983009808
    %v1515 = vunpack.c.0.s8 %v1514
    %v1516 = vlaneseq
    %v1517 = vshrl.u32 %v1516, 7
    %v1518 = vsub.s32 %v1515, %v1517
    %v1519 = vrot.slane %v1512, %v1518
    %v1521 = vadd.f32 %v1505, %v1519
    %s1522 = sld [smem:[#allocation2 + $0x71]]
    %v1523 = vstv %s1522
    %v1524 = vmul.f32 %v1523, %v1322
    %v1525 = vmul.f32 %v1523, %v1326
    %v1528 = vcombine.low %v1524, %v1525
    %v1530 = vunpack.c.l.s4 1983009808
    %v1531 = vunpack.c.0.s8 %v1530
    %v1532 = vlaneseq
    %v1533 = vshrl.u32 %v1532, 7
    %v1534 = vsub.s32 %v1531, %v1533
    %v1535 = vrot.slane %v1528, %v1534
    %v1537 = vadd.f32 %v1304, %v1535
    %s1538 = sld [smem:[#allocation2 + $0x7a]]
    %v1539 = vstv %s1538
    %v1540 = vmul.f32 %v1539, %v1323
    %v1541 = vmul.f32 %v1539, %v1327
    %v1544 = vcombine.low %v1540, %v1541
    %v1546 = vunpack.c.l.s4 1983009808
    %v1547 = vunpack.c.0.s8 %v1546
    %v1548 = vlaneseq
    %v1549 = vshrl.u32 %v1548, 7
    %v1550 = vsub.s32 %v1547, %v1549
    %v1551 = vrot.slane %v1544, %v1550
    %v1553 = vadd.f32 %v1537, %v1551
    %s1554 = sld [smem:[#allocation2 + $0x83]]
    %v1555 = vstv %s1554
    %v1556 = vmul.f32 %v1555, %v1324
    %v1557 = vmul.f32 %v1555, %v1328
    %v1560 = vcombine.low %v1556, %v1557
    %v1562 = vunpack.c.l.s4 1983009808
    %v1563 = vunpack.c.0.s8 %v1562
    %v1564 = vlaneseq
    %v1565 = vshrl.u32 %v1564, 7
    %v1566 = vsub.s32 %v1563, %v1565
    %v1567 = vrot.slane %v1560, %v1566
    %v1569 = vadd.f32 %v1553, %v1567
    %s1570 = sld [smem:[#allocation2 + $0x8c]]
    %v1571 = vstv %s1570
    %v1572 = vmul.f32 %v1571, %v1325
    %v1573 = vmul.f32 %v1571, %v1329
    %v1576 = vcombine.low %v1572, %v1573
    %v1578 = vunpack.c.l.s4 1983009808
    %v1579 = vunpack.c.0.s8 %v1578
    %v1580 = vlaneseq
    %v1581 = vshrl.u32 %v1580, 7
    %v1582 = vsub.s32 %v1579, %v1581
    %v1583 = vrot.slane %v1576, %v1582
    %v1585 = vadd.f32 %v1569, %v1583
    %1586 = vrot.lane.b32.xlu0 %v145, 96
    %v1587 = vpop.permute.xlu0 %1586
    %1588 = vrot.lane.b32.xlu0 %v153, 96
    %v1589 = vpop.permute.xlu0 %1588
    %1590 = vrot.lane.b32.xlu0 %v161, 96
    %v1591 = vpop.permute.xlu0 %1590
    %1592 = vrot.lane.b32.xlu0 %v169, 96
    %v1593 = vpop.permute.xlu0 %1592
    %1594 = vrot.lane.b32.xlu0 %v146, 96
    %v1595 = vpop.permute.xlu0 %1594
    %1596 = vrot.lane.b32.xlu0 %v154, 96
    %v1597 = vpop.permute.xlu0 %1596
    %1598 = vrot.lane.b32.xlu0 %v162, 96
    %v1599 = vpop.permute.xlu0 %1598
    %1600 = vrot.lane.b32.xlu0 %v170, 96
    %v1601 = vpop.permute.xlu0 %1600
    %vm1602 = vcmp.lt.s32.totalorder %v196, 96
    %v1603 = vsel %vm1602, %v1587, %v1595
    %v1604 = vsel %vm1602, %v1589, %v1597
    %v1605 = vsel %vm1602, %v1591, %v1599
    %v1606 = vsel %vm1602, %v1593, %v1601
    %v1607 = vsel %vm1602, %v1595, %v1587
    %v1608 = vsel %vm1602, %v1597, %v1589
    %v1609 = vsel %vm1602, %v1599, %v1591
    %v1610 = vsel %vm1602, %v1601, %v1593
    %s1611 = sld [smem:[#allocation2 + $0x6]]
    %v1612 = vstv %s1611
    %v1613 = vmul.f32 %v1612, %v1603
    %v1614 = vmul.f32 %v1612, %v1607
    %v1617 = vcombine.low %v1613, %v1614
    %v1619 = vunpack.c.l.s4 1983009808
    %v1620 = vunpack.c.0.s8 %v1619
    %v1621 = vlaneseq
    %v1622 = vshrl.u32 %v1621, 7
    %v1623 = vsub.s32 %v1620, %v1622
    %v1624 = vrot.slane %v1617, %v1623
    %v1626 = vadd.f32 %v1393, %v1624
    %s1627 = sld [smem:[#allocation2 + $0xf]]
    %v1628 = vstv %s1627
    %v1629 = vmul.f32 %v1628, %v1604
    %v1630 = vmul.f32 %v1628, %v1608
    %v1633 = vcombine.low %v1629, %v1630
    %v1635 = vunpack.c.l.s4 1983009808
    %v1636 = vunpack.c.0.s8 %v1635
    %v1637 = vlaneseq
    %v1638 = vshrl.u32 %v1637, 7
    %v1639 = vsub.s32 %v1636, %v1638
    %v1640 = vrot.slane %v1633, %v1639
    %v1642 = vadd.f32 %v1626, %v1640
    %s1643 = sld [smem:[#allocation2 + $0x18]]
    %v1644 = vstv %s1643
    %v1645 = vmul.f32 %v1644, %v1605
    %v1646 = vmul.f32 %v1644, %v1609
    %v1649 = vcombine.low %v1645, %v1646
    %v1651 = vunpack.c.l.s4 1983009808
    %v1652 = vunpack.c.0.s8 %v1651
    %v1653 = vlaneseq
    %v1654 = vshrl.u32 %v1653, 7
    %v1655 = vsub.s32 %v1652, %v1654
    %v1656 = vrot.slane %v1649, %v1655
    %v1658 = vadd.f32 %v1642, %v1656
    %s1659 = sld [smem:[#allocation2 + $0x21]]
    %v1660 = vstv %s1659
    %v1661 = vmul.f32 %v1660, %v1606
    %v1662 = vmul.f32 %v1660, %v1610
    %v1665 = vcombine.low %v1661, %v1662
    %v1667 = vunpack.c.l.s4 1983009808
    %v1668 = vunpack.c.0.s8 %v1667
    %v1669 = vlaneseq
    %v1670 = vshrl.u32 %v1669, 7
    %v1671 = vsub.s32 %v1668, %v1670
    %v1672 = vrot.slane %v1665, %v1671
    %v1674 = vadd.f32 %v1658, %v1672
    %s1675 = sld [smem:[#allocation2 + $0x2a]]
    %v1676 = vstv %s1675
    %v1677 = vmul.f32 %v1676, %v1603
    %v1678 = vmul.f32 %v1676, %v1607
    %v1681 = vcombine.low %v1677, %v1678
    %v1683 = vunpack.c.l.s4 1983009808
    %v1684 = vunpack.c.0.s8 %v1683
    %v1685 = vlaneseq
    %v1686 = vshrl.u32 %v1685, 7
    %v1687 = vsub.s32 %v1684, %v1686
    %v1688 = vrot.slane %v1681, %v1687
    %v1690 = vadd.f32 %v1457, %v1688
    %s1691 = sld [smem:[#allocation2 + $0x33]]
    %v1692 = vstv %s1691
    %v1693 = vmul.f32 %v1692, %v1604
    %v1694 = vmul.f32 %v1692, %v1608
    %v1697 = vcombine.low %v1693, %v1694
    %v1699 = vunpack.c.l.s4 1983009808
    %v1700 = vunpack.c.0.s8 %v1699
    %v1701 = vlaneseq
    %v1702 = vshrl.u32 %v1701, 7
    %v1703 = vsub.s32 %v1700, %v1702
    %v1704 = vrot.slane %v1697, %v1703
    %v1706 = vadd.f32 %v1690, %v1704
    %s1707 = sld [smem:[#allocation2 + $0x3c]]
    %v1708 = vstv %s1707
    %v1709 = vmul.f32 %v1708, %v1605
    %v1710 = vmul.f32 %v1708, %v1609
    %v1713 = vcombine.low %v1709, %v1710
    %v1715 = vunpack.c.l.s4 1983009808
    %v1716 = vunpack.c.0.s8 %v1715
    %v1717 = vlaneseq
    %v1718 = vshrl.u32 %v1717, 7
    %v1719 = vsub.s32 %v1716, %v1718
    %v1720 = vrot.slane %v1713, %v1719
    %v1722 = vadd.f32 %v1706, %v1720
    %s1723 = sld [smem:[#allocation2 + $0x45]]
    %v1724 = vstv %s1723
    %v1725 = vmul.f32 %v1724, %v1606
    %v1726 = vmul.f32 %v1724, %v1610
    %v1729 = vcombine.low %v1725, %v1726
    %v1731 = vunpack.c.l.s4 1983009808
    %v1732 = vunpack.c.0.s8 %v1731
    %v1733 = vlaneseq
    %v1734 = vshrl.u32 %v1733, 7
    %v1735 = vsub.s32 %v1732, %v1734
    %v1736 = vrot.slane %v1729, %v1735
    %v1738 = vadd.f32 %v1722, %v1736
    %s1739 = sld [smem:[#allocation2 + $0x4e]]
    %v1740 = vstv %s1739
    %v1741 = vmul.f32 %v1740, %v1603
    %v1742 = vmul.f32 %v1740, %v1607
    %v1745 = vcombine.low %v1741, %v1742
    %v1747 = vunpack.c.l.s4 1983009808
    %v1748 = vunpack.c.0.s8 %v1747
    %v1749 = vlaneseq
    %v1750 = vshrl.u32 %v1749, 7
    %v1751 = vsub.s32 %v1748, %v1750
    %v1752 = vrot.slane %v1745, %v1751
    %v1754 = vadd.f32 %v1521, %v1752
    %s1755 = sld [smem:[#allocation2 + $0x57]]
    %v1756 = vstv %s1755
    %v1757 = vmul.f32 %v1756, %v1604
    %v1758 = vmul.f32 %v1756, %v1608
    %v1761 = vcombine.low %v1757, %v1758
    %v1763 = vunpack.c.l.s4 1983009808
    %v1764 = vunpack.c.0.s8 %v1763
    %v1765 = vlaneseq
    %v1766 = vshrl.u32 %v1765, 7
    %v1767 = vsub.s32 %v1764, %v1766
    %v1768 = vrot.slane %v1761, %v1767
    %v1770 = vadd.f32 %v1754, %v1768
    %s1771 = sld [smem:[#allocation2 + $0x60]]
    %v1772 = vstv %s1771
    %v1773 = vmul.f32 %v1772, %v1605
    %v1774 = vmul.f32 %v1772, %v1609
    %v1777 = vcombine.low %v1773, %v1774
    %v1779 = vunpack.c.l.s4 1983009808
    %v1780 = vunpack.c.0.s8 %v1779
    %v1781 = vlaneseq
    %v1782 = vshrl.u32 %v1781, 7
    %v1783 = vsub.s32 %v1780, %v1782
    %v1784 = vrot.slane %v1777, %v1783
    %v1786 = vadd.f32 %v1770, %v1784
    %s1787 = sld [smem:[#allocation2 + $0x69]]
    %v1788 = vstv %s1787
    %v1789 = vmul.f32 %v1788, %v1606
    %v1790 = vmul.f32 %v1788, %v1610
    %v1793 = vcombine.low %v1789, %v1790
    %v1795 = vunpack.c.l.s4 1983009808
    %v1796 = vunpack.c.0.s8 %v1795
    %v1797 = vlaneseq
    %v1798 = vshrl.u32 %v1797, 7
    %v1799 = vsub.s32 %v1796, %v1798
    %v1800 = vrot.slane %v1793, %v1799
    %v1802 = vadd.f32 %v1786, %v1800
    %s1803 = sld [smem:[#allocation2 + $0x72]]
    %v1804 = vstv %s1803
    %v1805 = vmul.f32 %v1804, %v1603
    %v1806 = vmul.f32 %v1804, %v1607
    %v1809 = vcombine.low %v1805, %v1806
    %v1811 = vunpack.c.l.s4 1983009808
    %v1812 = vunpack.c.0.s8 %v1811
    %v1813 = vlaneseq
    %v1814 = vshrl.u32 %v1813, 7
    %v1815 = vsub.s32 %v1812, %v1814
    %v1816 = vrot.slane %v1809, %v1815
    %v1818 = vadd.f32 %v1585, %v1816
    %s1819 = sld [smem:[#allocation2 + $0x7b]]
    %v1820 = vstv %s1819
    %v1821 = vmul.f32 %v1820, %v1604
    %v1822 = vmul.f32 %v1820, %v1608
    %v1825 = vcombine.low %v1821, %v1822
    %v1827 = vunpack.c.l.s4 1983009808
    %v1828 = vunpack.c.0.s8 %v1827
    %v1829 = vlaneseq
    %v1830 = vshrl.u32 %v1829, 7
    %v1831 = vsub.s32 %v1828, %v1830
    %v1832 = vrot.slane %v1825, %v1831
    %v1834 = vadd.f32 %v1818, %v1832
    %s1835 = sld [smem:[#allocation2 + $0x84]]
    %v1836 = vstv %s1835
    %v1837 = vmul.f32 %v1836, %v1605
    %v1838 = vmul.f32 %v1836, %v1609
    %v1841 = vcombine.low %v1837, %v1838
    %v1843 = vunpack.c.l.s4 1983009808
    %v1844 = vunpack.c.0.s8 %v1843
    %v1845 = vlaneseq
    %v1846 = vshrl.u32 %v1845, 7
    %v1847 = vsub.s32 %v1844, %v1846
    %v1848 = vrot.slane %v1841, %v1847
    %v1850 = vadd.f32 %v1834, %v1848
    %s1851 = sld [smem:[#allocation2 + $0x8d]]
    %v1852 = vstv %s1851
    %v1853 = vmul.f32 %v1852, %v1606
    %v1854 = vmul.f32 %v1852, %v1610
    %v1857 = vcombine.low %v1853, %v1854
    %v1859 = vunpack.c.l.s4 1983009808
    %v1860 = vunpack.c.0.s8 %v1859
    %v1861 = vlaneseq
    %v1862 = vshrl.u32 %v1861, 7
    %v1863 = vsub.s32 %v1860, %v1862
    %v1864 = vrot.slane %v1857, %v1863
    %v1866 = vadd.f32 %v1850, %v1864
    %1867 = vrot.lane.b32.xlu0 %v145, 95
    %v1868 = vpop.permute.xlu0 %1867
    %1869 = vrot.lane.b32.xlu0 %v153, 95
    %v1870 = vpop.permute.xlu0 %1869
    %1871 = vrot.lane.b32.xlu0 %v161, 95
    %v1872 = vpop.permute.xlu0 %1871
    %1873 = vrot.lane.b32.xlu0 %v169, 95
    %v1874 = vpop.permute.xlu0 %1873
    %1875 = vrot.lane.b32.xlu0 %v146, 95
    %v1876 = vpop.permute.xlu0 %1875
    %1877 = vrot.lane.b32.xlu0 %v154, 95
    %v1878 = vpop.permute.xlu0 %1877
    %1879 = vrot.lane.b32.xlu0 %v162, 95
    %v1880 = vpop.permute.xlu0 %1879
    %1881 = vrot.lane.b32.xlu0 %v170, 95
    %v1882 = vpop.permute.xlu0 %1881
    %vm1883 = vcmp.lt.s32.totalorder %v196, 95
    %v1884 = vsel %vm1883, %v1868, %v1876
    %v1885 = vsel %vm1883, %v1870, %v1878
    %v1886 = vsel %vm1883, %v1872, %v1880
    %v1887 = vsel %vm1883, %v1874, %v1882
    %v1888 = vsel %vm1883, %v1876, %v1868
    %v1889 = vsel %vm1883, %v1878, %v1870
    %v1890 = vsel %vm1883, %v1880, %v1872
    %v1891 = vsel %vm1883, %v1882, %v1874
    %s1892 = sld [smem:[#allocation2 + $0x7]]
    %v1893 = vstv %s1892
    %v1894 = vmul.f32 %v1893, %v1884
    %v1895 = vmul.f32 %v1893, %v1888
    %v1898 = vcombine.low %v1894, %v1895
    %v1900 = vunpack.c.l.s4 1983009808
    %v1901 = vunpack.c.0.s8 %v1900
    %v1902 = vlaneseq
    %v1903 = vshrl.u32 %v1902, 7
    %v1904 = vsub.s32 %v1901, %v1903
    %v1905 = vrot.slane %v1898, %v1904
    %v1907 = vadd.f32 %v1674, %v1905
    %s1908 = sld [smem:[#allocation2 + $0x10]]
    %v1909 = vstv %s1908
    %v1910 = vmul.f32 %v1909, %v1885
    %v1911 = vmul.f32 %v1909, %v1889
    %v1914 = vcombine.low %v1910, %v1911
    %v1916 = vunpack.c.l.s4 1983009808
    %v1917 = vunpack.c.0.s8 %v1916
    %v1918 = vlaneseq
    %v1919 = vshrl.u32 %v1918, 7
    %v1920 = vsub.s32 %v1917, %v1919
    %v1921 = vrot.slane %v1914, %v1920
    %v1923 = vadd.f32 %v1907, %v1921
    %s1924 = sld [smem:[#allocation2 + $0x19]]
    %v1925 = vstv %s1924
    %v1926 = vmul.f32 %v1925, %v1886
    %v1927 = vmul.f32 %v1925, %v1890
    %v1930 = vcombine.low %v1926, %v1927
    %v1932 = vunpack.c.l.s4 1983009808
    %v1933 = vunpack.c.0.s8 %v1932
    %v1934 = vlaneseq
    %v1935 = vshrl.u32 %v1934, 7
    %v1936 = vsub.s32 %v1933, %v1935
    %v1937 = vrot.slane %v1930, %v1936
    %v1939 = vadd.f32 %v1923, %v1937
    %s1940 = sld [smem:[#allocation2 + $0x22]]
    %v1941 = vstv %s1940
    %v1942 = vmul.f32 %v1941, %v1887
    %v1943 = vmul.f32 %v1941, %v1891
    %v1946 = vcombine.low %v1942, %v1943
    %v1948 = vunpack.c.l.s4 1983009808
    %v1949 = vunpack.c.0.s8 %v1948
    %v1950 = vlaneseq
    %v1951 = vshrl.u32 %v1950, 7
    %v1952 = vsub.s32 %v1949, %v1951
    %v1953 = vrot.slane %v1946, %v1952
    %v1955 = vadd.f32 %v1939, %v1953
    %s1956 = sld [smem:[#allocation2 + $0x2b]]
    %v1957 = vstv %s1956
    %v1958 = vmul.f32 %v1957, %v1884
    %v1959 = vmul.f32 %v1957, %v1888
    %v1962 = vcombine.low %v1958, %v1959
    %v1964 = vunpack.c.l.s4 1983009808
    %v1965 = vunpack.c.0.s8 %v1964
    %v1966 = vlaneseq
    %v1967 = vshrl.u32 %v1966, 7
    %v1968 = vsub.s32 %v1965, %v1967
    %v1969 = vrot.slane %v1962, %v1968
    %v1971 = vadd.f32 %v1738, %v1969
    %s1972 = sld [smem:[#allocation2 + $0x34]]
    %v1973 = vstv %s1972
    %v1974 = vmul.f32 %v1973, %v1885
    %v1975 = vmul.f32 %v1973, %v1889
    %v1978 = vcombine.low %v1974, %v1975
    %v1980 = vunpack.c.l.s4 1983009808
    %v1981 = vunpack.c.0.s8 %v1980
    %v1982 = vlaneseq
    %v1983 = vshrl.u32 %v1982, 7
    %v1984 = vsub.s32 %v1981, %v1983
    %v1985 = vrot.slane %v1978, %v1984
    %v1987 = vadd.f32 %v1971, %v1985
    %s1988 = sld [smem:[#allocation2 + $0x3d]]
    %v1989 = vstv %s1988
    %v1990 = vmul.f32 %v1989, %v1886
    %v1991 = vmul.f32 %v1989, %v1890
    %v1994 = vcombine.low %v1990, %v1991
    %v1996 = vunpack.c.l.s4 1983009808
    %v1997 = vunpack.c.0.s8 %v1996
    %v1998 = vlaneseq
    %v1999 = vshrl.u32 %v1998, 7
    %v2000 = vsub.s32 %v1997, %v1999
    %v2001 = vrot.slane %v1994, %v2000
    %v2003 = vadd.f32 %v1987, %v2001
    %s2004 = sld [smem:[#allocation2 + $0x46]]
    %v2005 = vstv %s2004
    %v2006 = vmul.f32 %v2005, %v1887
    %v2007 = vmul.f32 %v2005, %v1891
    %v2010 = vcombine.low %v2006, %v2007
    %v2012 = vunpack.c.l.s4 1983009808
    %v2013 = vunpack.c.0.s8 %v2012
    %v2014 = vlaneseq
    %v2015 = vshrl.u32 %v2014, 7
    %v2016 = vsub.s32 %v2013, %v2015
    %v2017 = vrot.slane %v2010, %v2016
    %v2019 = vadd.f32 %v2003, %v2017
    %s2020 = sld [smem:[#allocation2 + $0x4f]]
    %v2021 = vstv %s2020
    %v2022 = vmul.f32 %v2021, %v1884
    %v2023 = vmul.f32 %v2021, %v1888
    %v2026 = vcombine.low %v2022, %v2023
    %v2028 = vunpack.c.l.s4 1983009808
    %v2029 = vunpack.c.0.s8 %v2028
    %v2030 = vlaneseq
    %v2031 = vshrl.u32 %v2030, 7
    %v2032 = vsub.s32 %v2029, %v2031
    %v2033 = vrot.slane %v2026, %v2032
    %v2035 = vadd.f32 %v1802, %v2033
    %s2036 = sld [smem:[#allocation2 + $0x58]]
    %v2037 = vstv %s2036
    %v2038 = vmul.f32 %v2037, %v1885
    %v2039 = vmul.f32 %v2037, %v1889
    %v2042 = vcombine.low %v2038, %v2039
    %v2044 = vunpack.c.l.s4 1983009808
    %v2045 = vunpack.c.0.s8 %v2044
    %v2046 = vlaneseq
    %v2047 = vshrl.u32 %v2046, 7
    %v2048 = vsub.s32 %v2045, %v2047
    %v2049 = vrot.slane %v2042, %v2048
    %v2051 = vadd.f32 %v2035, %v2049
    %s2052 = sld [smem:[#allocation2 + $0x61]]
    %v2053 = vstv %s2052
    %v2054 = vmul.f32 %v2053, %v1886
    %v2055 = vmul.f32 %v2053, %v1890
    %v2058 = vcombine.low %v2054, %v2055
    %v2060 = vunpack.c.l.s4 1983009808
    %v2061 = vunpack.c.0.s8 %v2060
    %v2062 = vlaneseq
    %v2063 = vshrl.u32 %v2062, 7
    %v2064 = vsub.s32 %v2061, %v2063
    %v2065 = vrot.slane %v2058, %v2064
    %v2067 = vadd.f32 %v2051, %v2065
    %s2068 = sld [smem:[#allocation2 + $0x6a]]
    %v2069 = vstv %s2068
    %v2070 = vmul.f32 %v2069, %v1887
    %v2071 = vmul.f32 %v2069, %v1891
    %v2074 = vcombine.low %v2070, %v2071
    %v2076 = vunpack.c.l.s4 1983009808
    %v2077 = vunpack.c.0.s8 %v2076
    %v2078 = vlaneseq
    %v2079 = vshrl.u32 %v2078, 7
    %v2080 = vsub.s32 %v2077, %v2079
    %v2081 = vrot.slane %v2074, %v2080
    %v2083 = vadd.f32 %v2067, %v2081
    %s2084 = sld [smem:[#allocation2 + $0x73]]
    %v2085 = vstv %s2084
    %v2086 = vmul.f32 %v2085, %v1884
    %v2087 = vmul.f32 %v2085, %v1888
    %v2090 = vcombine.low %v2086, %v2087
    %v2092 = vunpack.c.l.s4 1983009808
    %v2093 = vunpack.c.0.s8 %v2092
    %v2094 = vlaneseq
    %v2095 = vshrl.u32 %v2094, 7
    %v2096 = vsub.s32 %v2093, %v2095
    %v2097 = vrot.slane %v2090, %v2096
    %v2099 = vadd.f32 %v1866, %v2097
    %s2100 = sld [smem:[#allocation2 + $0x7c]]
    %v2101 = vstv %s2100
    %v2102 = vmul.f32 %v2101, %v1885
    %v2103 = vmul.f32 %v2101, %v1889
    %v2106 = vcombine.low %v2102, %v2103
    %v2108 = vunpack.c.l.s4 1983009808
    %v2109 = vunpack.c.0.s8 %v2108
    %v2110 = vlaneseq
    %v2111 = vshrl.u32 %v2110, 7
    %v2112 = vsub.s32 %v2109, %v2111
    %v2113 = vrot.slane %v2106, %v2112
    %v2115 = vadd.f32 %v2099, %v2113
    %s2116 = sld [smem:[#allocation2 + $0x85]]
    %v2117 = vstv %s2116
    %v2118 = vmul.f32 %v2117, %v1886
    %v2119 = vmul.f32 %v2117, %v1890
    %v2122 = vcombine.low %v2118, %v2119
    %v2124 = vunpack.c.l.s4 1983009808
    %v2125 = vunpack.c.0.s8 %v2124
    %v2126 = vlaneseq
    %v2127 = vshrl.u32 %v2126, 7
    %v2128 = vsub.s32 %v2125, %v2127
    %v2129 = vrot.slane %v2122, %v2128
    %v2131 = vadd.f32 %v2115, %v2129
    %s2132 = sld [smem:[#allocation2 + $0x8e]]
    %v2133 = vstv %s2132
    %v2134 = vmul.f32 %v2133, %v1887
    %v2135 = vmul.f32 %v2133, %v1891
    %v2138 = vcombine.low %v2134, %v2135
    %v2140 = vunpack.c.l.s4 1983009808
    %v2141 = vunpack.c.0.s8 %v2140
    %v2142 = vlaneseq
    %v2143 = vshrl.u32 %v2142, 7
    %v2144 = vsub.s32 %v2141, %v2143
    %v2145 = vrot.slane %v2138, %v2144
    %v2147 = vadd.f32 %v2131, %v2145
    %2148 = vrot.lane.b32.xlu0 %v145, 94
    %v2149 = vpop.permute.xlu0 %2148
    %2150 = vrot.lane.b32.xlu0 %v153, 94
    %v2151 = vpop.permute.xlu0 %2150
    %2152 = vrot.lane.b32.xlu0 %v161, 94
    %v2153 = vpop.permute.xlu0 %2152
    %2154 = vrot.lane.b32.xlu0 %v169, 94
    %v2155 = vpop.permute.xlu0 %2154
    %2156 = vrot.lane.b32.xlu0 %v146, 94
    %v2157 = vpop.permute.xlu0 %2156
    %2158 = vrot.lane.b32.xlu0 %v154, 94
    %v2159 = vpop.permute.xlu0 %2158
    %2160 = vrot.lane.b32.xlu0 %v162, 94
    %v2161 = vpop.permute.xlu0 %2160
    %2162 = vrot.lane.b32.xlu0 %v170, 94
    %v2163 = vpop.permute.xlu0 %2162
    %vm2164 = vcmp.lt.s32.totalorder %v196, 94
    %v2165 = vsel %vm2164, %v2149, %v2157
    %v2166 = vsel %vm2164, %v2151, %v2159
    %v2167 = vsel %vm2164, %v2153, %v2161
    %v2168 = vsel %vm2164, %v2155, %v2163
    %v2169 = vsel %vm2164, %v2157, %v2149
    %v2170 = vsel %vm2164, %v2159, %v2151
    %v2171 = vsel %vm2164, %v2161, %v2153
    %v2172 = vsel %vm2164, %v2163, %v2155
    %s2173 = sld [smem:[#allocation2 + $0x8]]
    %v2174 = vstv %s2173
    %v2175 = vmul.f32 %v2174, %v2165
    %v2176 = vmul.f32 %v2174, %v2169
    %v2179 = vcombine.low %v2175, %v2176
    %v2181 = vunpack.c.l.s4 1983009808
    %v2182 = vunpack.c.0.s8 %v2181
    %v2183 = vlaneseq
    %v2184 = vshrl.u32 %v2183, 7
    %v2185 = vsub.s32 %v2182, %v2184
    %v2186 = vrot.slane %v2179, %v2185
    %v2188 = vadd.f32 %v1955, %v2186
    %s2189 = sld [smem:[#allocation2 + $0x11]]
    %v2190 = vstv %s2189
    %v2191 = vmul.f32 %v2190, %v2166
    %v2192 = vmul.f32 %v2190, %v2170
    %v2195 = vcombine.low %v2191, %v2192
    %v2197 = vunpack.c.l.s4 1983009808
    %v2198 = vunpack.c.0.s8 %v2197
    %v2199 = vlaneseq
    %v2200 = vshrl.u32 %v2199, 7
    %v2201 = vsub.s32 %v2198, %v2200
    %v2202 = vrot.slane %v2195, %v2201
    %v2204 = vadd.f32 %v2188, %v2202
    %s2205 = sld [smem:[#allocation2 + $0x1a]]
    %v2206 = vstv %s2205
    %v2207 = vmul.f32 %v2206, %v2167
    %v2208 = vmul.f32 %v2206, %v2171
    %v2211 = vcombine.low %v2207, %v2208
    %v2213 = vunpack.c.l.s4 1983009808
    %v2214 = vunpack.c.0.s8 %v2213
    %v2215 = vlaneseq
    %v2216 = vshrl.u32 %v2215, 7
    %v2217 = vsub.s32 %v2214, %v2216
    %v2218 = vrot.slane %v2211, %v2217
    %v2220 = vadd.f32 %v2204, %v2218
    %s2221 = sld [smem:[#allocation2 + $0x23]]
    %v2222 = vstv %s2221
    %v2223 = vmul.f32 %v2222, %v2168
    %v2224 = vmul.f32 %v2222, %v2172
    %v2227 = vcombine.low %v2223, %v2224
    %v2229 = vunpack.c.l.s4 1983009808
    %v2230 = vunpack.c.0.s8 %v2229
    %v2231 = vlaneseq
    %v2232 = vshrl.u32 %v2231, 7
    %v2233 = vsub.s32 %v2230, %v2232
    %v2234 = vrot.slane %v2227, %v2233
    %v2236 = vadd.f32 %v2220, %v2234
    %s2237 = sld [smem:[#allocation2 + $0x2c]]
    %v2238 = vstv %s2237
    %v2239 = vmul.f32 %v2238, %v2165
    %v2240 = vmul.f32 %v2238, %v2169
    %v2243 = vcombine.low %v2239, %v2240
    %v2245 = vunpack.c.l.s4 1983009808
    %v2246 = vunpack.c.0.s8 %v2245
    %v2247 = vlaneseq
    %v2248 = vshrl.u32 %v2247, 7
    %v2249 = vsub.s32 %v2246, %v2248
    %v2250 = vrot.slane %v2243, %v2249
    %v2252 = vadd.f32 %v2019, %v2250
    %s2253 = sld [smem:[#allocation2 + $0x35]]
    %v2254 = vstv %s2253
    %v2255 = vmul.f32 %v2254, %v2166
    %v2256 = vmul.f32 %v2254, %v2170
    %v2259 = vcombine.low %v2255, %v2256
    %v2261 = vunpack.c.l.s4 1983009808
    %v2262 = vunpack.c.0.s8 %v2261
    %v2263 = vlaneseq
    %v2264 = vshrl.u32 %v2263, 7
    %v2265 = vsub.s32 %v2262, %v2264
    %v2266 = vrot.slane %v2259, %v2265
    %v2268 = vadd.f32 %v2252, %v2266
    %s2269 = sld [smem:[#allocation2 + $0x3e]]
    %v2270 = vstv %s2269
    %v2271 = vmul.f32 %v2270, %v2167
    %v2272 = vmul.f32 %v2270, %v2171
    %v2275 = vcombine.low %v2271, %v2272
    %v2277 = vunpack.c.l.s4 1983009808
    %v2278 = vunpack.c.0.s8 %v2277
    %v2279 = vlaneseq
    %v2280 = vshrl.u32 %v2279, 7
    %v2281 = vsub.s32 %v2278, %v2280
    %v2282 = vrot.slane %v2275, %v2281
    %v2284 = vadd.f32 %v2268, %v2282
    %s2285 = sld [smem:[#allocation2 + $0x47]]
    %v2286 = vstv %s2285
    %v2287 = vmul.f32 %v2286, %v2168
    %v2288 = vmul.f32 %v2286, %v2172
    %v2291 = vcombine.low %v2287, %v2288
    %v2293 = vunpack.c.l.s4 1983009808
    %v2294 = vunpack.c.0.s8 %v2293
    %v2295 = vlaneseq
    %v2296 = vshrl.u32 %v2295, 7
    %v2297 = vsub.s32 %v2294, %v2296
    %v2298 = vrot.slane %v2291, %v2297
    %v2300 = vadd.f32 %v2284, %v2298
    %s2301 = sld [smem:[#allocation2 + $0x50]]
    %v2302 = vstv %s2301
    %v2303 = vmul.f32 %v2302, %v2165
    %v2304 = vmul.f32 %v2302, %v2169
    %v2307 = vcombine.low %v2303, %v2304
    %v2309 = vunpack.c.l.s4 1983009808
    %v2310 = vunpack.c.0.s8 %v2309
    %v2311 = vlaneseq
    %v2312 = vshrl.u32 %v2311, 7
    %v2313 = vsub.s32 %v2310, %v2312
    %v2314 = vrot.slane %v2307, %v2313
    %v2316 = vadd.f32 %v2083, %v2314
    %s2317 = sld [smem:[#allocation2 + $0x59]]
    %v2318 = vstv %s2317
    %v2319 = vmul.f32 %v2318, %v2166
    %v2320 = vmul.f32 %v2318, %v2170
    %v2323 = vcombine.low %v2319, %v2320
    %v2325 = vunpack.c.l.s4 1983009808
    %v2326 = vunpack.c.0.s8 %v2325
    %v2327 = vlaneseq
    %v2328 = vshrl.u32 %v2327, 7
    %v2329 = vsub.s32 %v2326, %v2328
    %v2330 = vrot.slane %v2323, %v2329
    %v2332 = vadd.f32 %v2316, %v2330
    %s2333 = sld [smem:[#allocation2 + $0x62]]
    %v2334 = vstv %s2333
    %v2335 = vmul.f32 %v2334, %v2167
    %v2336 = vmul.f32 %v2334, %v2171
    %v2339 = vcombine.low %v2335, %v2336
    %v2341 = vunpack.c.l.s4 1983009808
    %v2342 = vunpack.c.0.s8 %v2341
    %v2343 = vlaneseq
    %v2344 = vshrl.u32 %v2343, 7
    %v2345 = vsub.s32 %v2342, %v2344
    %v2346 = vrot.slane %v2339, %v2345
    %v2348 = vadd.f32 %v2332, %v2346
    %s2349 = sld [smem:[#allocation2 + $0x6b]]
    %v2350 = vstv %s2349
    %v2351 = vmul.f32 %v2350, %v2168
    %v2352 = vmul.f32 %v2350, %v2172
    %v2355 = vcombine.low %v2351, %v2352
    %v2357 = vunpack.c.l.s4 1983009808
    %v2358 = vunpack.c.0.s8 %v2357
    %v2359 = vlaneseq
    %v2360 = vshrl.u32 %v2359, 7
    %v2361 = vsub.s32 %v2358, %v2360
    %v2362 = vrot.slane %v2355, %v2361
    %v2364 = vadd.f32 %v2348, %v2362
    %s2365 = sld [smem:[#allocation2 + $0x74]]
    %v2366 = vstv %s2365
    %v2367 = vmul.f32 %v2366, %v2165
    %v2368 = vmul.f32 %v2366, %v2169
    %v2371 = vcombine.low %v2367, %v2368
    %v2373 = vunpack.c.l.s4 1983009808
    %v2374 = vunpack.c.0.s8 %v2373
    %v2375 = vlaneseq
    %v2376 = vshrl.u32 %v2375, 7
    %v2377 = vsub.s32 %v2374, %v2376
    %v2378 = vrot.slane %v2371, %v2377
    %v2380 = vadd.f32 %v2147, %v2378
    %s2381 = sld [smem:[#allocation2 + $0x7d]]
    %v2382 = vstv %s2381
    %v2383 = vmul.f32 %v2382, %v2166
    %v2384 = vmul.f32 %v2382, %v2170
    %v2387 = vcombine.low %v2383, %v2384
    %v2389 = vunpack.c.l.s4 1983009808
    %v2390 = vunpack.c.0.s8 %v2389
    %v2391 = vlaneseq
    %v2392 = vshrl.u32 %v2391, 7
    %v2393 = vsub.s32 %v2390, %v2392
    %v2394 = vrot.slane %v2387, %v2393
    %v2396 = vadd.f32 %v2380, %v2394
    %s2397 = sld [smem:[#allocation2 + $0x86]]
    %v2398 = vstv %s2397
    %v2399 = vmul.f32 %v2398, %v2167
    %v2400 = vmul.f32 %v2398, %v2171
    %v2403 = vcombine.low %v2399, %v2400
    %v2405 = vunpack.c.l.s4 1983009808
    %v2406 = vunpack.c.0.s8 %v2405
    %v2407 = vlaneseq
    %v2408 = vshrl.u32 %v2407, 7
    %v2409 = vsub.s32 %v2406, %v2408
    %v2410 = vrot.slane %v2403, %v2409
    %v2412 = vadd.f32 %v2396, %v2410
    %s2413 = sld [smem:[#allocation2 + $0x8f]]
    %v2414 = vstv %s2413
    %v2415 = vmul.f32 %v2414, %v2168
    %v2416 = vmul.f32 %v2414, %v2172
    %v2419 = vcombine.low %v2415, %v2416
    %v2421 = vunpack.c.l.s4 1983009808
    %v2422 = vunpack.c.0.s8 %v2421
    %v2423 = vlaneseq
    %v2424 = vshrl.u32 %v2423, 7
    %v2425 = vsub.s32 %v2422, %v2424
    %v2426 = vrot.slane %v2419, %v2425
    %v2428 = vadd.f32 %v2412, %v2426
    %s2429 = sld [smem:[#allocation7]]
    %v2430 = vstv %s2429
    %v2431 = vadd.f32 %v2236, %v2430
    %v2432 = vtanh.pop %v2431
    %s2433 = sld [smem:[#allocation8]]
    %v2434 = vstv %s2433
    %v2435 = vmul.f32 %v2432, %v2434
    %v2438 = vunpack.c.l.s4 1983009808
    %v2439 = vunpack.c.0.s8 %v2438
    %v2440 = vlaneseq
    %v2441 = vshrl.u32 %v2440, 7
    %v2442 = vsub.s32 %v2439, %v2441
    %v2443 = vrot.slane %v2435, %v2442
    %v2444 = vcombine.high %v2443, %v2443
    %v2447 = vadd.f32 %v1041, %v2443
    %v2448 = vadd.f32 %v1045, %v2444
    %v2451 = vcombine.low %v2447, %v2448
    %v2453 = vunpack.c.l.s4 1983009808
    %v2454 = vunpack.c.0.s8 %v2453
    %v2455 = vlaneseq
    %v2456 = vshrl.u32 %v2455, 7
    %v2457 = vsub.s32 %v2454, %v2456
    %v2458 = vrot.slane %v2451, %v2457
    %2460 = vst [vmem:[#allocation11] sm:$0xf] %v2458
    %s2461 = sld [smem:[#allocation7 + $0x1]]
    %v2462 = vstv %s2461
    %v2463 = vadd.f32 %v2300, %v2462
    %v2464 = vtanh.pop %v2463
    %s2465 = sld [smem:[#allocation8 + $0x1]]
    %v2466 = vstv %s2465
    %v2467 = vmul.f32 %v2464, %v2466
    %v2470 = vunpack.c.l.s4 1983009808
    %v2471 = vunpack.c.0.s8 %v2470
    %v2472 = vlaneseq
    %v2473 = vshrl.u32 %v2472, 7
    %v2474 = vsub.s32 %v2471, %v2473
    %v2475 = vrot.slane %v2467, %v2474
    %v2476 = vcombine.high %v2475, %v2475
    %v2479 = vadd.f32 %v1042, %v2475
    %v2480 = vadd.f32 %v1046, %v2476
    %v2483 = vcombine.low %v2479, %v2480
    %v2485 = vunpack.c.l.s4 1983009808
    %v2486 = vunpack.c.0.s8 %v2485
    %v2487 = vlaneseq
    %v2488 = vshrl.u32 %v2487, 7
    %v2489 = vsub.s32 %v2486, %v2488
    %v2490 = vrot.slane %v2483, %v2489
    %s2492 = scalar_lea.vmem [#allocation11], 4
    %2493 = vst [vmem:[%s2492] sm:$0xf] %v2490
    %s2494 = sld [smem:[#allocation7 + $0x2]]
    %v2495 = vstv %s2494
    %v2496 = vadd.f32 %v2364, %v2495
    %v2497 = vtanh.pop %v2496
    %s2498 = sld [smem:[#allocation8 + $0x2]]
    %v2499 = vstv %s2498
    %v2500 = vmul.f32 %v2497, %v2499
    %v2503 = vunpack.c.l.s4 1983009808
    %v2504 = vunpack.c.0.s8 %v2503
    %v2505 = vlaneseq
    %v2506 = vshrl.u32 %v2505, 7
    %v2507 = vsub.s32 %v2504, %v2506
    %v2508 = vrot.slane %v2500, %v2507
    %v2509 = vcombine.high %v2508, %v2508
    %v2512 = vadd.f32 %v1043, %v2508
    %v2513 = vadd.f32 %v1047, %v2509
    %v2516 = vcombine.low %v2512, %v2513
    %v2518 = vunpack.c.l.s4 1983009808
    %v2519 = vunpack.c.0.s8 %v2518
    %v2520 = vlaneseq
    %v2521 = vshrl.u32 %v2520, 7
    %v2522 = vsub.s32 %v2519, %v2521
    %v2523 = vrot.slane %v2516, %v2522
    %s2525 = scalar_lea.vmem [#allocation11], 8
    %2526 = vst [vmem:[%s2525] sm:$0xf] %v2523
    %s2527 = sld [smem:[#allocation7 + $0x3]]
    %v2528 = vstv %s2527
    %v2529 = vadd.f32 %v2428, %v2528
    %v2530 = vtanh.pop %v2529
    %s2531 = sld [smem:[#allocation8 + $0x3]]
    %v2532 = vstv %s2531
    %v2533 = vmul.f32 %v2530, %v2532
    %v2536 = vunpack.c.l.s4 1983009808
    %v2537 = vunpack.c.0.s8 %v2536
    %v2538 = vlaneseq
    %v2539 = vshrl.u32 %v2538, 7
    %v2540 = vsub.s32 %v2537, %v2539
    %v2541 = vrot.slane %v2533, %v2540
    %v2542 = vcombine.high %v2541, %v2541
    %v2545 = vadd.f32 %v1044, %v2541
    %v2546 = vadd.f32 %v1048, %v2542
    %v2549 = vcombine.low %v2545, %v2546
    %v2551 = vunpack.c.l.s4 1983009808
    %v2552 = vunpack.c.0.s8 %v2551
    %v2553 = vlaneseq
    %v2554 = vshrl.u32 %v2553, 7
    %v2555 = vsub.s32 %v2552, %v2554
    %v2556 = vrot.slane %v2549, %v2555
    %s2558 = scalar_lea.vmem [#allocation11], 12
    %2559 = vst [vmem:[%s2558] sm:$0xf] %v2556
    // Predicated region
    $region34: #{tpu_custom_call.1} parent=1 // pred_check
      _
    $region35: #{tpu_custom_call.1} parent=1 // pred_check_branch
      %2561 = sbr.rel (0) target = $region37
    $region36: #{tpu_custom_call.1} parent=1 // pred_region
      %s2563 = ssub.s32 256, 256
      %2564 = vsyncadd [#allocation4], %s2563
      %s2565 = sshll.u32 [#allocation11], 4
      %s2566 = int_to_ptr.vmem [resolvable:$true] %s2565
      %2571 = dma.vmem_to_hbm [thread:$0]  %s2566, 256, %s4, [#allocation4], 64, 64, 4
    $region37: #{tpu_custom_call.1} parent=1 // pred_fallthru
      _
    // Predicated region
    $region38: #{tpu_custom_call.1} parent=1 // pred_check
      _
    $region39: #{tpu_custom_call.1} parent=1 // pred_check_branch
      %2573 = sbr.rel (0) target = $region41
    $region40: #{tpu_custom_call.1} parent=1 // pred_region
      %2574 = dma.done [#allocation4], 256
    $region41: #{tpu_custom_call.1} parent=1 // pred_fallthru
      _
    %2575 = vsyncpa [#allocation3], 1
    %2576 = vsyncpa [#allocation4], 1
    %2577 = vsyncpa [#allocation5], 1
    %2578 = vsyncpa [#allocation6], 1
    %2579 = vsyncpa [#allocation9], 1

</llo_original>
